<compile_context>
chip_gen: v5e
topology: v5e:2x2
jax: 0.10.0
libtpu: 0.0.40
codegen_flags: <defaults>
</compile_context>

<pallas_src>
import functools
import math

import jax
import jax.numpy as jnp
from jax.experimental import pallas as pl
from jax.experimental.pallas import tpu as pltpu


# ------------------------------ configuration ------------------------------

CFG = dict(
    img=32, patch=8, in_ch=3,
    hidden=128, heads=2, head_dim=64, mlp=256, layers=2,
    num_classes=1,
    seq_pad=24,            # real seq = (img/patch)^2 + 1 = 17, padded to 24
)

LN_EPS = 1e-6
GEM_EPS = 1e-6
NEG_INF = -1e30


def _layernorm(x, g, b, eps=LN_EPS):
    mu = jnp.mean(x, axis=-1, keepdims=True)
    var = jnp.mean(jnp.square(x - mu), axis=-1, keepdims=True)
    return (x - mu) * jax.lax.rsqrt(var + eps) * g + b


# ------------------------------ Pallas kernels ------------------------------

def _embed_kernel(patch_ref, mean_ref, invstd_ref, w_ref, b_ref, cls_ref,
                  pos_ref, o_ref, *, batch, n_patch, seq_real, seq_pad, hidden):
    x = patch_ref[...]                                 # (B*nP, C*p*p) f32
    # normalize_image: global min/max over the whole batch tensor (patches are a
    # permutation of the pixels, so min/max match the torch reference exactly).
    mn = jnp.min(x)
    mx = jnp.max(x)
    inv_rng = 1.0 / jnp.maximum(mx - mn, 1e-12)        # guard constant images
    x = (x - mn) * inv_rng
    # AutoImageProcessor-style per-channel mean / (precomputed) 1/std
    x = (x - mean_ref[...]) * invstd_ref[...]
    # patch embedding: conv(stride=patch) == matmul on flattened patches (bf16 MXU)
    tok = jnp.dot(x.astype(jnp.bfloat16), w_ref[...],
                  preferred_element_type=jnp.float32) + b_ref[...]
    tok = tok.reshape(batch, n_patch, hidden)
    pos = pos_ref[...]                                 # (S_pad, hidden)
    cls = cls_ref[...]                                 # (1, hidden)
    o_ref[:, 1:1 + n_patch, :] = tok + pos[None, 1:1 + n_patch, :]
    o_ref[:, 0:1, :] = jnp.broadcast_to((cls + pos[0:1, :])[None],
                                        (batch, 1, hidden))
    # zero the padded sequence rows
    o_ref[:, seq_real:, :] = jnp.zeros((batch, seq_pad - seq_real, hidden),
                                       jnp.float32)


def _encoder_kernel(h_ref,
                    ln1_g_ref, ln1_b_ref, qkv_w_ref, qkv_b_ref,
                    proj_w_ref, proj_b_ref, ln2_g_ref, ln2_b_ref,
                    fc1_w_ref, fc1_b_ref, fc2_w_ref, fc2_b_ref,
                    lnf_g_ref, lnf_b_ref,
                    o_ref, *, layers, heads, head_dim, hidden, seq_real, seq_pad):
    h = h_ref[0]                                       # (S_pad, hidden) f32
    scale = 1.0 / math.sqrt(head_dim)
    # key-padding mask: columns >= seq_real are padding
    col = jax.lax.broadcasted_iota(jnp.int32, (seq_pad, seq_pad), 1)
    kmask = col < seq_real

    for l in range(layers):                            # static, fully unrolled
        # ---------------- self-attention block ----------------
        x1 = _layernorm(h, ln1_g_ref[l], ln1_b_ref[l])
        qkv = jnp.dot(x1.astype(jnp.bfloat16), qkv_w_ref[l],
                      preferred_element_type=jnp.float32) + qkv_b_ref[l]
        q = qkv[:, 0 * hidden:1 * hidden]
        k = qkv[:, 1 * hidden:2 * hidden]
        v = qkv[:, 2 * hidden:3 * hidden]
        pw = proj_w_ref[l]                             # (hidden, hidden) bf16
        attn = jnp.zeros((seq_pad, hidden), jnp.float32)
        for hh in range(heads):
            lo, hi = hh * head_dim, (hh + 1) * head_dim
            qh = q[:, lo:hi].astype(jnp.bfloat16)
            kh = k[:, lo:hi].astype(jnp.bfloat16)
            vh = v[:, lo:hi].astype(jnp.bfloat16)
            # contract last dims (no explicit k.T / XLU transpose)
            s = jnp.einsum('qd,kd->qk', qh, kh,
                           preferred_element_type=jnp.float32) * scale
            s = jnp.where(kmask, s, NEG_INF)
            m = jnp.max(s, axis=-1, keepdims=True)
            p = jnp.exp(s - m)
            p = p * pl.reciprocal(jnp.sum(p, axis=-1, keepdims=True), approx=True)
            oh = jnp.dot(p.astype(jnp.bfloat16), vh,
                         preferred_element_type=jnp.float32)        # (S_pad, hd)
            # fold the head-concat into the output projection (slice proj rows)
            attn = attn + jnp.dot(oh.astype(jnp.bfloat16), pw[lo:hi, :],
                                  preferred_element_type=jnp.float32)
        h = h + attn + proj_b_ref[l]                   # residual (in VMEM)

        # --------------------- MLP block -----------------------
        x2 = _layernorm(h, ln2_g_ref[l], ln2_b_ref[l])
        m1 = jnp.dot(x2.astype(jnp.bfloat16), fc1_w_ref[l],
                     preferred_element_type=jnp.float32) + fc1_b_ref[l]
        # TODO(synk): torch nn.GELU default is exact erf; tanh approximation used.
        m1 = jax.nn.gelu(m1, approximate=True)
        m2 = jnp.dot(m1.astype(jnp.bfloat16), fc2_w_ref[l],
                     preferred_element_type=jnp.float32) + fc2_b_ref[l]
        h = h + m2                                     # residual (in VMEM)

    hf = _layernorm(h, lnf_g_ref[0], lnf_b_ref[0])
    # features.mean(dim=1) over the real (unpadded) sequence
    feat = jnp.sum(hf[0:seq_real, :], axis=0, keepdims=True) * (1.0 / seq_real)
    o_ref[0] = feat                                    # (1, hidden)


def _head_kernel(f_ref, p_ref, w_ref, b_ref, o_ref, *, eps):
    feat = jnp.mean(f_ref[...], axis=1)                # (B, 1, H) -> (B, H)
    p = p_ref[0, 0]
    # GeM over the unsqueezed size-1 trailing dim: avg_pool1d(window=1) is
    # identity, so gem(x) = (clamp(x, eps)^p)^(1/p); pow via exp/log (EUP).
    x = jnp.maximum(feat, eps)
    x = jnp.exp(jnp.log(x) * p)
    x = jnp.exp(jnp.log(x) * (1.0 / p))
    # Dropout(0.5) is identity at inference.
    logits = jnp.dot(x, w_ref[...], preferred_element_type=jnp.float32) + b_ref[...]
    o_ref[...] = jax.nn.sigmoid(logits)


# ------------------------------ kernel wrappers ------------------------------

def embed(patches, mean_flat, invstd_flat, patch_w, patch_b, cls_tok, pos,
          *, cfg, batch):
    n_patch = (cfg["img"] // cfg["patch"]) ** 2
    seq_real = n_patch + 1
    return pl.pallas_call(
        functools.partial(_embed_kernel, batch=batch, n_patch=n_patch,
                          seq_real=seq_real, seq_pad=cfg["seq_pad"],
                          hidden=cfg["hidden"]),
        out_shape=jax.ShapeDtypeStruct((batch, cfg["seq_pad"], cfg["hidden"]),
                                       jnp.float32),
    )(patches, mean_flat, invstd_flat, patch_w, patch_b, cls_tok, pos)


def encode(hseq, lp, lnf_g, lnf_b, *, cfg):
    B, S_pad, H = hseq.shape
    L = cfg["layers"]
    mlp = cfg["mlp"]
    seq_real = (cfg["img"] // cfg["patch"]) ** 2 + 1

    def full(shape):
        return pl.BlockSpec(shape, lambda b: (0,) * len(shape))

    in_specs = [
        pl.BlockSpec((1, S_pad, H), lambda b: (b, 0, 0)),     # hidden states
        full((L, 1, H)), full((L, 1, H)),                     # ln1 g/b
        full((L, H, 3 * H)), full((L, 1, 3 * H)),             # qkv w/b
        full((L, H, H)), full((L, 1, H)),                     # proj w/b
        full((L, 1, H)), full((L, 1, H)),                     # ln2 g/b
        full((L, H, mlp)), full((L, 1, mlp)),                 # fc1 w/b
        full((L, mlp, H)), full((L, 1, H)),                   # fc2 w/b
        full((1, 1, H)), full((1, 1, H)),                     # final ln g/b
    ]
    return pl.pallas_call(
        functools.partial(_encoder_kernel, layers=L, heads=cfg["heads"],
                          head_dim=cfg["head_dim"], hidden=H,
                          seq_real=seq_real, seq_pad=S_pad),
        grid=(B,),
        in_specs=in_specs,
        out_specs=pl.BlockSpec((1, 1, H), lambda b: (b, 0, 0)),
        out_shape=jax.ShapeDtypeStruct((B, 1, H), jnp.float32),
        compiler_params=pltpu.CompilerParams(dimension_semantics=("parallel",)),
    )(hseq,
      lp["ln1_g"], lp["ln1_b"], lp["qkv_w"], lp["qkv_b"],
      lp["proj_w"], lp["proj_b"], lp["ln2_g"], lp["ln2_b"],
      lp["fc1_w"], lp["fc1_b"], lp["fc2_w"], lp["fc2_b"],
      lnf_g, lnf_b)


def head(pooled, gem_p, fc_w, fc_b, eps=GEM_EPS):
    B = pooled.shape[0]
    return pl.pallas_call(
        functools.partial(_head_kernel, eps=eps),
        out_shape=jax.ShapeDtypeStruct((B, fc_w.shape[1]), jnp.float32),
    )(pooled, gem_p, fc_w, fc_b)


# ------------------------------ model definition -----------------------------

def init_params(key, cfg):
    h = cfg["hidden"]
    p = cfg["patch"]
    c = cfg["in_ch"]
    L = cfg["layers"]
    mlp = cfg["mlp"]
    k = c * p * p
    S_pad = cfg["seq_pad"]

    def nrm(rng, shape, std=0.02, dtype=jnp.float32):
        return (std * jax.random.normal(rng, shape, dtype=jnp.float32)).astype(dtype)

    keys = iter(jax.random.split(key, 16))
    img_mean = jnp.array([0.485, 0.456, 0.406], jnp.float32)
    img_std = jnp.array([0.229, 0.224, 0.225], jnp.float32)
    params = {
        # per-channel constants broadcast over the flattened (c, ph, pw) layout
        "mean_flat": jnp.repeat(img_mean, p * p).reshape(1, k),
        "invstd_flat": (1.0 / jnp.repeat(img_std, p * p)).reshape(1, k),
        "patch_w": nrm(next(keys), (k, h), dtype=jnp.bfloat16),
        "patch_b": jnp.zeros((1, h), jnp.float32),
        "cls": nrm(next(keys), (1, h)),
        "pos": nrm(next(keys), (S_pad, h)),
        "lnf_g": jnp.ones((1, 1, h), jnp.float32),
        "lnf_b": jnp.zeros((1, 1, h), jnp.float32),
        # GeM p = 3.0  (torch.ones(1) * 3)
        "gem_p": jnp.full((1, 1), 3.0, jnp.float32),
        "fc_w": nrm(next(keys), (h, cfg["num_classes"])),
        "fc_b": jnp.zeros((1, cfg["num_classes"]), jnp.float32),
        "layers": {
            "ln1_g": jnp.ones((L, 1, h), jnp.float32),
            "ln1_b": jnp.zeros((L, 1, h), jnp.float32),
            "qkv_w": nrm(next(keys), (L, h, 3 * h), dtype=jnp.bfloat16),
            "qkv_b": jnp.zeros((L, 1, 3 * h), jnp.float32),
            "proj_w": nrm(next(keys), (L, h, h), dtype=jnp.bfloat16),
            "proj_b": jnp.zeros((L, 1, h), jnp.float32),
            "ln2_g": jnp.ones((L, 1, h), jnp.float32),
            "ln2_b": jnp.zeros((L, 1, h), jnp.float32),
            "fc1_w": nrm(next(keys), (L, h, mlp), dtype=jnp.bfloat16),
            "fc1_b": jnp.zeros((L, 1, mlp), jnp.float32),
            "fc2_w": nrm(next(keys), (L, mlp, h), dtype=jnp.bfloat16),
            "fc2_b": jnp.zeros((L, 1, h), jnp.float32),
        },
    }
    return params


def isic_dino_forward(params, x, cfg):
    B, C, H, W = x.shape
    p = cfg["patch"]
    nP = (H // p) * (W // p)

    # pure-layout patch extraction (a permutation of the pixels; all
    # normalization happens inside the embed kernel so global min/max match).
    # TODO(synk): processor image resizing to the backbone's native resolution is omitted.
    patches = x.reshape(B, C, H // p, p, W // p, p).transpose(0, 2, 4, 1, 3, 5)
    patches = patches.reshape(B * nP, C * p * p)

    hseq = embed(patches, params["mean_flat"], params["invstd_flat"],
                 params["patch_w"], params["patch_b"], params["cls"],
                 params["pos"], cfg=cfg, batch=B)            # (B, S_pad, hidden)

    pooled = encode(hseq, params["layers"], params["lnf_g"], params["lnf_b"],
                    cfg=cfg)                                 # (B, 1, hidden)

    out = head(pooled, params["gem_p"], params["fc_w"], params["fc_b"])  # (B, 1)
    return out[:, 0]                                         # output.squeeze(-1)


# ------------------------------------ main ------------------------------------

if __name__ == "__main__":
    key = jax.random.PRNGKey(0)
    k_param, k_x = jax.random.split(key)
    params = init_params(k_param, CFG)

    # small analogue of torch.randn(32, 3, 224, 224): batch=2, 3x32x32
    x = jax.random.normal(k_x, (2, CFG["in_ch"], CFG["img"], CFG["img"]),
                          dtype=jnp.float32)

    fwd = jax.jit(functools.partial(isic_dino_forward, cfg=CFG))
    out = jax.block_until_ready(fwd(params, x))
    assert out.shape == (2,), out.shape
    assert bool(jnp.all(jnp.isfinite(out))) and bool(jnp.all((out >= 0) & (out <= 1)))
    print("KERNEL_OK")
</pallas_src>

<mosaic_0001>
module attributes {stable_mosaic.version = 11 : i64} {
  func.func @_embed_kernel(%arg0: memref<32x192xf32, #tpu.memory_space<vmem>>, %arg1: memref<1x192xf32, #tpu.memory_space<vmem>>, %arg2: memref<1x192xf32, #tpu.memory_space<vmem>>, %arg3: memref<192x128xbf16, #tpu.memory_space<vmem>>, %arg4: memref<1x128xf32, #tpu.memory_space<vmem>>, %arg5: memref<1x128xf32, #tpu.memory_space<vmem>>, %arg6: memref<24x128xf32, #tpu.memory_space<vmem>>, %arg7: memref<2x24x128xf32, #tpu.memory_space<vmem>>) attributes {dimension_semantics = [], scalar_prefetch = 0 : i64, scratch_operands = 0 : i64, tpu.core_type = #tpu.core_type<tc>} {
    %c0 = arith.constant 0 : index
    %c0_0 = arith.constant 0 : index
    %0 = vector.load %arg0[%c0, %c0_0] : memref<32x192xf32, #tpu.memory_space<vmem>>, vector<32x192xf32>
    %1 = vector.shape_cast %0 : vector<32x192xf32> to vector<1x32x192xf32>
    %cst = arith.constant dense<0x7F800000> : vector<1xf32>
    %2 = vector.multi_reduction <minimumf>, %1, %cst [1, 2] : vector<1x32x192xf32> to vector<1xf32>
    %3 = vector.shape_cast %2 : vector<1xf32> to vector<1x1x1xf32>
    %4 = vector.extract %3[0, 0, 0] : f32 from vector<1x1x1xf32>
    %5 = vector.shape_cast %0 : vector<32x192xf32> to vector<1x32x192xf32>
    %cst_1 = arith.constant dense<0xFF800000> : vector<1xf32>
    %6 = vector.multi_reduction <maximumf>, %5, %cst_1 [1, 2] : vector<1x32x192xf32> to vector<1xf32>
    %7 = vector.shape_cast %6 : vector<1xf32> to vector<1x1x1xf32>
    %8 = vector.extract %7[0, 0, 0] : f32 from vector<1x1x1xf32>
    %9 = arith.subf %8, %4 : f32
    %cst_2 = arith.constant 9.99999996E-13 : f32
    %10 = arith.maximumf %9, %cst_2 : f32
    %cst_3 = arith.constant 1.000000e+00 : f32
    %11 = arith.divf %cst_3, %10 : f32
    %12 = vector.broadcast %4 : f32 to vector<32x192xf32>
    %13 = arith.subf %0, %12 : vector<32x192xf32>
    %14 = vector.broadcast %11 : f32 to vector<32x192xf32>
    %15 = arith.mulf %13, %14 : vector<32x192xf32>
    %c0_4 = arith.constant 0 : index
    %c0_5 = arith.constant 0 : index
    %16 = vector.load %arg1[%c0_4, %c0_5] : memref<1x192xf32, #tpu.memory_space<vmem>>, vector<1x192xf32>
    %17 = vector.broadcast %16 : vector<1x192xf32> to vector<32x192xf32>
    %18 = arith.subf %15, %17 : vector<32x192xf32>
    %c0_6 = arith.constant 0 : index
    %c0_7 = arith.constant 0 : index
    %19 = vector.load %arg2[%c0_6, %c0_7] : memref<1x192xf32, #tpu.memory_space<vmem>>, vector<1x192xf32>
    %20 = vector.broadcast %19 : vector<1x192xf32> to vector<32x192xf32>
    %21 = arith.mulf %18, %20 : vector<32x192xf32>
    %22 = arith.truncf %21 : vector<32x192xf32> to vector<32x192xbf16>
    %c0_8 = arith.constant 0 : index
    %c0_9 = arith.constant 0 : index
    %23 = vector.load %arg3[%c0_8, %c0_9] : memref<192x128xbf16, #tpu.memory_space<vmem>>, vector<192x128xbf16>
    %cst_10 = arith.constant dense<0.000000e+00> : vector<32x128xf32>
    %24 = tpu.matmul %22, %23, %cst_10 {dimension_numbers = #tpu.dot_dimension_numbers<[1], [0], [0], [1], [0, 0, 1, 1], [], []>} : vector<32x192xbf16>, vector<192x128xbf16>, vector<32x128xf32> -> vector<32x128xf32>
    %c0_11 = arith.constant 0 : index
    %c0_12 = arith.constant 0 : index
    %25 = vector.load %arg4[%c0_11, %c0_12] : memref<1x128xf32, #tpu.memory_space<vmem>>, vector<1x128xf32>
    %26 = vector.broadcast %25 : vector<1x128xf32> to vector<32x128xf32>
    %27 = arith.addf %24, %26 : vector<32x128xf32>
    %28 = vector.shape_cast %27 : vector<32x128xf32> to vector<2x16x128xf32>
    %c0_13 = arith.constant 0 : index
    %c0_14 = arith.constant 0 : index
    %29 = vector.load %arg6[%c0_13, %c0_14] : memref<24x128xf32, #tpu.memory_space<vmem>>, vector<24x128xf32>
    %c0_15 = arith.constant 0 : index
    %c0_16 = arith.constant 0 : index
    %30 = vector.load %arg5[%c0_15, %c0_16] : memref<1x128xf32, #tpu.memory_space<vmem>>, vector<1x128xf32>
    %31 = vector.extract_strided_slice %29 {offsets = [1, 0], sizes = [16, 128], strides = [1, 1]} : vector<24x128xf32> to vector<16x128xf32>
    %32 = vector.shape_cast %31 : vector<16x128xf32> to vector<1x16x128xf32>
    %33 = vector.broadcast %32 : vector<1x16x128xf32> to vector<2x16x128xf32>
    %34 = arith.addf %28, %33 : vector<2x16x128xf32>
    %c0_17 = arith.constant 0 : index
    %c1 = arith.constant 1 : index
    %c0_18 = arith.constant 0 : index
    %35 = vector.load %arg7[%c0_17, %c1, %c0_18] : memref<2x24x128xf32, #tpu.memory_space<vmem>>, vector<2x16x128xf32>
    tpu.vector_store %arg7[%c0_17, %c1, %c0_18], %34 {strides = array<i32>} : memref<2x24x128xf32, #tpu.memory_space<vmem>>, vector<2x16x128xf32>,
    %36 = vector.extract_strided_slice %29 {offsets = [0, 0], sizes = [1, 128], strides = [1, 1]} : vector<24x128xf32> to vector<1x128xf32>
    %37 = arith.addf %30, %36 : vector<1x128xf32>
    %38 = vector.shape_cast %37 : vector<1x128xf32> to vector<1x1x128xf32>
    %39 = vector.shape_cast %38 : vector<1x1x128xf32> to vector<1x1x128xf32>
    %40 = vector.broadcast %39 : vector<1x1x128xf32> to vector<2x1x128xf32>
    %c0_19 = arith.constant 0 : index
    %c0_20 = arith.constant 0 : index
    %c0_21 = arith.constant 0 : index
    %41 = vector.load %arg7[%c0_19, %c0_20, %c0_21] : memref<2x24x128xf32, #tpu.memory_space<vmem>>, vector<2x1x128xf32>
    tpu.vector_store %arg7[%c0_19, %c0_20, %c0_21], %40 {strides = array<i32>} : memref<2x24x128xf32, #tpu.memory_space<vmem>>, vector<2x1x128xf32>,
    %cst_22 = arith.constant 0.000000e+00 : f32
    %42 = vector.broadcast %cst_22 : f32 to vector<2x7x128xf32>
    %c0_23 = arith.constant 0 : index
    %c17 = arith.constant 17 : index
    %c0_24 = arith.constant 0 : index
    %43 = vector.load %arg7[%c0_23, %c17, %c0_24] : memref<2x24x128xf32, #tpu.memory_space<vmem>>, vector<2x7x128xf32>
    tpu.vector_store %arg7[%c0_23, %c17, %c0_24], %42 {strides = array<i32>} : memref<2x24x128xf32, #tpu.memory_space<vmem>>, vector<2x7x128xf32>,
    return
  }
}

module attributes {stable_mosaic.version = 11 : i64} {
  func.func @_encoder_kernel(%arg0: i32, %arg1: memref<1x24x128xf32, #tpu.memory_space<vmem>>, %arg2: memref<2x1x128xf32, #tpu.memory_space<vmem>>, %arg3: memref<2x1x128xf32, #tpu.memory_space<vmem>>, %arg4: memref<2x128x384xbf16, #tpu.memory_space<vmem>>, %arg5: memref<2x1x384xf32, #tpu.memory_space<vmem>>, %arg6: memref<2x128x128xbf16, #tpu.memory_space<vmem>>, %arg7: memref<2x1x128xf32, #tpu.memory_space<vmem>>, %arg8: memref<2x1x128xf32, #tpu.memory_space<vmem>>, %arg9: memref<2x1x128xf32, #tpu.memory_space<vmem>>, %arg10: memref<2x128x256xbf16, #tpu.memory_space<vmem>>, %arg11: memref<2x1x256xf32, #tpu.memory_space<vmem>>, %arg12: memref<2x256x128xbf16, #tpu.memory_space<vmem>>, %arg13: memref<2x1x128xf32, #tpu.memory_space<vmem>>, %arg14: memref<1x1x128xf32, #tpu.memory_space<vmem>>, %arg15: memref<1x1x128xf32, #tpu.memory_space<vmem>>, %arg16: memref<1x1x128xf32, #tpu.memory_space<vmem>>) attributes {dimension_semantics = [#tpu.dimension_semantics<parallel>], iteration_bounds = array<i64: 2>, scalar_prefetch = 0 : i64, scratch_operands = 0 : i64, tpu.core_type = #tpu.core_type<tc>, window_params = [{transform_indices = @transform_0, window_bounds = array<i64: 1, 24, 128>}, {pipeline_mode = #tpu.pipeline_mode<synchronous>, transform_indices = @transform_1, window_bounds = array<i64: 2, 1, 128>}, {pipeline_mode = #tpu.pipeline_mode<synchronous>, transform_indices = @transform_2, window_bounds = array<i64: 2, 1, 128>}, {pipeline_mode = #tpu.pipeline_mode<synchronous>, transform_indices = @transform_3, window_bounds = array<i64: 2, 128, 384>}, {pipeline_mode = #tpu.pipeline_mode<synchronous>, transform_indices = @transform_4, window_bounds = array<i64: 2, 1, 384>}, {pipeline_mode = #tpu.pipeline_mode<synchronous>, transform_indices = @transform_5, window_bounds = array<i64: 2, 128, 128>}, {pipeline_mode = #tpu.pipeline_mode<synchronous>, transform_indices = @transform_6, window_bounds = array<i64: 2, 1, 128>}, {pipeline_mode = #tpu.pipeline_mode<synchronous>, transform_indices = @transform_7, window_bounds = array<i64: 2, 1, 128>}, {pipeline_mode = #tpu.pipeline_mode<synchronous>, transform_indices = @transform_8, window_bounds = array<i64: 2, 1, 128>}, {pipeline_mode = #tpu.pipeline_mode<synchronous>, transform_indices = @transform_9, window_bounds = array<i64: 2, 128, 256>}, {pipeline_mode = #tpu.pipeline_mode<synchronous>, transform_indices = @transform_10, window_bounds = array<i64: 2, 1, 256>}, {pipeline_mode = #tpu.pipeline_mode<synchronous>, transform_indices = @transform_11, window_bounds = array<i64: 2, 256, 128>}, {pipeline_mode = #tpu.pipeline_mode<synchronous>, transform_indices = @transform_12, window_bounds = array<i64: 2, 1, 128>}, {pipeline_mode = #tpu.pipeline_mode<synchronous>, transform_indices = @transform_13, window_bounds = array<i64: 1, 1, 128>}, {pipeline_mode = #tpu.pipeline_mode<synchronous>, transform_indices = @transform_14, window_bounds = array<i64: 1, 1, 128>}, {transform_indices = @transform_15, window_bounds = array<i64: 1, 1, 128>}]} {
    %c0 = arith.constant 0 : index
    %c0_0 = arith.constant 0 : index
    %c0_1 = arith.constant 0 : index
    %0 = vector.load %arg1[%c0, %c0_0, %c0_1] : memref<1x24x128xf32, #tpu.memory_space<vmem>>, vector<1x24x128xf32>
    %1 = vector.shape_cast %0 : vector<1x24x128xf32> to vector<24x128xf32>
    %2 = tpu.iota {dimensions = array<i32: 1>} : vector<24x24xi32>
    %c17_i32 = arith.constant 17 : i32
    %3 = vector.broadcast %c17_i32 : i32 to vector<24x24xi32>
    %4 = arith.cmpi slt, %2, %3 : vector<24x24xi32>
    %c0_2 = arith.constant 0 : index
    %c0_3 = arith.constant 0 : index
    %c0_4 = arith.constant 0 : index
    %5 = vector.load %arg2[%c0_2, %c0_3, %c0_4] : memref<2x1x128xf32, #tpu.memory_space<vmem>>, vector<1x1x128xf32>
    %6 = vector.shape_cast %5 : vector<1x1x128xf32> to vector<1x128xf32>
    %c0_5 = arith.constant 0 : index
    %c0_6 = arith.constant 0 : index
    %c0_7 = arith.constant 0 : index
    %7 = vector.load %arg3[%c0_5, %c0_6, %c0_7] : memref<2x1x128xf32, #tpu.memory_space<vmem>>, vector<1x1x128xf32>
    %8 = vector.shape_cast %7 : vector<1x1x128xf32> to vector<1x128xf32>
    %cst = arith.constant dense<0.000000e+00> : vector<24xf32>
    %9 = vector.multi_reduction <add>, %1, %cst [1] : vector<24x128xf32> to vector<24xf32>
    %10 = vector.shape_cast %9 : vector<24xf32> to vector<24x1xf32>
    %cst_8 = arith.constant 1.280000e+02 : f32
    %11 = vector.broadcast %cst_8 : f32 to vector<24x1xf32>
    %12 = arith.divf %10, %11 : vector<24x1xf32>
    %13 = vector.broadcast %12 : vector<24x1xf32> to vector<24x128xf32>
    %14 = arith.subf %1, %13 : vector<24x128xf32>
    %15 = arith.mulf %14, %14 : vector<24x128xf32>
    %cst_9 = arith.constant dense<0.000000e+00> : vector<24xf32>
    %16 = vector.multi_reduction <add>, %15, %cst_9 [1] : vector<24x128xf32> to vector<24xf32>
    %17 = vector.shape_cast %16 : vector<24xf32> to vector<24x1xf32>
    %cst_10 = arith.constant 1.280000e+02 : f32
    %18 = vector.broadcast %cst_10 : f32 to vector<24x1xf32>
    %19 = arith.divf %17, %18 : vector<24x1xf32>
    %20 = vector.broadcast %12 : vector<24x1xf32> to vector<24x128xf32>
    %21 = arith.subf %1, %20 : vector<24x128xf32>
    %cst_11 = arith.constant 9.99999997E-7 : f32
    %22 = vector.broadcast %cst_11 : f32 to vector<24x1xf32>
    %23 = arith.addf %19, %22 : vector<24x1xf32>
    %24 = math.rsqrt %23 : vector<24x1xf32>
    %25 = vector.broadcast %24 : vector<24x1xf32> to vector<24x128xf32>
    %26 = arith.mulf %21, %25 : vector<24x128xf32>
    %27 = vector.broadcast %6 : vector<1x128xf32> to vector<24x128xf32>
    %28 = arith.mulf %26, %27 : vector<24x128xf32>
    %29 = vector.broadcast %8 : vector<1x128xf32> to vector<24x128xf32>
    %30 = arith.addf %28, %29 : vector<24x128xf32>
    %31 = arith.truncf %30 : vector<24x128xf32> to vector<24x128xbf16>
    %c0_12 = arith.constant 0 : index
    %c0_13 = arith.constant 0 : index
    %c0_14 = arith.constant 0 : index
    %32 = vector.load %arg4[%c0_12, %c0_13, %c0_14] : memref<2x128x384xbf16, #tpu.memory_space<vmem>>, vector<1x128x384xbf16>
    %33 = vector.shape_cast %32 : vector<1x128x384xbf16> to vector<128x384xbf16>
    %cst_15 = arith.constant dense<0.000000e+00> : vector<24x384xf32>
    %34 = tpu.matmul %31, %33, %cst_15 {dimension_numbers = #tpu.dot_dimension_numbers<[1], [0], [0], [1], [0, 0, 1, 1], [], []>} : vector<24x128xbf16>, vector<128x384xbf16>, vector<24x384xf32> -> vector<24x384xf32>
    %c0_16 = arith.constant 0 : index
    %c0_17 = arith.constant 0 : index
    %c0_18 = arith.constant 0 : index
    %35 = vector.load %arg5[%c0_16, %c0_17, %c0_18] : memref<2x1x384xf32, #tpu.memory_space<vmem>>, vector<1x1x384xf32>
    %36 = vector.shape_cast %35 : vector<1x1x384xf32> to vector<1x384xf32>
    %37 = vector.broadcast %36 : vector<1x384xf32> to vector<24x384xf32>
    %38 = arith.addf %34, %37 : vector<24x384xf32>
    %39 = vector.extract_strided_slice %38 {offsets = [0, 0], sizes = [24, 128], strides = [1, 1]} : vector<24x384xf32> to vector<24x128xf32>
    %40 = vector.extract_strided_slice %38 {offsets = [0, 128], sizes = [24, 128], strides = [1, 1]} : vector<24x384xf32> to vector<24x128xf32>
    %41 = vector.extract_strided_slice %38 {offsets = [0, 256], sizes = [24, 128], strides = [1, 1]} : vector<24x384xf32> to vector<24x128xf32>
    %c0_19 = arith.constant 0 : index
    %c0_20 = arith.constant 0 : index
    %c0_21 = arith.constant 0 : index
    %42 = vector.load %arg6[%c0_19, %c0_20, %c0_21] : memref<2x128x128xbf16, #tpu.memory_space<vmem>>, vector<1x128x128xbf16>
    %43 = vector.shape_cast %42 : vector<1x128x128xbf16> to vector<128x128xbf16>
    %cst_22 = arith.constant 0.000000e+00 : f32
    %44 = vector.broadcast %cst_22 : f32 to vector<24x128xf32>
    %45 = vector.extract_strided_slice %39 {offsets = [0, 0], sizes = [24, 64], strides = [1, 1]} : vector<24x128xf32> to vector<24x64xf32>
    %46 = arith.truncf %45 : vector<24x64xf32> to vector<24x64xbf16>
    %47 = vector.extract_strided_slice %40 {offsets = [0, 0], sizes = [24, 64], strides = [1, 1]} : vector<24x128xf32> to vector<24x64xf32>
    %48 = arith.truncf %47 : vector<24x64xf32> to vector<24x64xbf16>
    %49 = vector.extract_strided_slice %41 {offsets = [0, 0], sizes = [24, 64], strides = [1, 1]} : vector<24x128xf32> to vector<24x64xf32>
    %50 = arith.truncf %49 : vector<24x64xf32> to vector<24x64xbf16>
    "tpu.trace_start"() <{level = 10 : i32, message = "qd,kd->qk"}> : () -> ()
    %cst_23 = arith.constant dense<0.000000e+00> : vector<24x24xf32>
    %51 = tpu.matmul %46, %48, %cst_23 {dimension_numbers = #tpu.dot_dimension_numbers<[1], [1], [0], [0], [0, 0, 1, 0], [], []>} : vector<24x64xbf16>, vector<24x64xbf16>, vector<24x24xf32> -> vector<24x24xf32>
    "tpu.trace_stop"() : () -> ()
    %cst_24 = arith.constant 1.250000e-01 : f32
    %52 = vector.broadcast %cst_24 : f32 to vector<24x24xf32>
    %53 = arith.mulf %51, %52 : vector<24x24xf32>
    %cst_25 = arith.constant -1.000000e+30 : f32
    %54 = vector.broadcast %cst_25 : f32 to vector<24x24xf32>
    %55 = arith.select %4, %53, %54 : vector<24x24xi1>, vector<24x24xf32>
    %cst_26 = arith.constant dense<0xFF800000> : vector<24xf32>
    %56 = vector.multi_reduction <maximumf>, %55, %cst_26 [1] : vector<24x24xf32> to vector<24xf32>
    %57 = vector.shape_cast %56 : vector<24xf32> to vector<24x1xf32>
    %58 = vector.broadcast %57 : vector<24x1xf32> to vector<24x24xf32>
    %59 = arith.subf %55, %58 : vector<24x24xf32>
    %60 = math.exp %59 : vector<24x24xf32>
    %cst_27 = arith.constant dense<0.000000e+00> : vector<24xf32>
    %61 = vector.multi_reduction <add>, %60, %cst_27 [1] : vector<24x24xf32> to vector<24xf32>
    %62 = vector.shape_cast %61 : vector<24xf32> to vector<24x1xf32>
    %63 = tpu.reciprocal %62 {approx = true} : vector<24x1xf32> -> vector<24x1xf32>
    %64 = vector.broadcast %63 : vector<24x1xf32> to vector<24x24xf32>
    %65 = arith.mulf %60, %64 : vector<24x24xf32>
    %66 = arith.truncf %65 : vector<24x24xf32> to vector<24x24xbf16>
    %cst_28 = arith.constant dense<0.000000e+00> : vector<24x64xf32>
    %67 = tpu.matmul %66, %50, %cst_28 {dimension_numbers = #tpu.dot_dimension_numbers<[1], [0], [0], [1], [0, 0, 1, 1], [], []>} : vector<24x24xbf16>, vector<24x64xbf16>, vector<24x64xf32> -> vector<24x64xf32>
    %68 = arith.truncf %67 : vector<24x64xf32> to vector<24x64xbf16>
    %69 = vector.extract_strided_slice %43 {offsets = [0, 0], sizes = [64, 128], strides = [1, 1]} : vector<128x128xbf16> to vector<64x128xbf16>
    %cst_29 = arith.constant dense<0.000000e+00> : vector<24x128xf32>
    %70 = tpu.matmul %68, %69, %cst_29 {dimension_numbers = #tpu.dot_dimension_numbers<[1], [0], [0], [1], [0, 0, 1, 1], [], []>} : vector<24x64xbf16>, vector<64x128xbf16>, vector<24x128xf32> -> vector<24x128xf32>
    %71 = arith.addf %44, %70 : vector<24x128xf32>
    %72 = vector.extract_strided_slice %39 {offsets = [0, 64], sizes = [24, 64], strides = [1, 1]} : vector<24x128xf32> to vector<24x64xf32>
    %73 = arith.truncf %72 : vector<24x64xf32> to vector<24x64xbf16>
    %74 = vector.extract_strided_slice %40 {offsets = [0, 64], sizes = [24, 64], strides = [1, 1]} : vector<24x128xf32> to vector<24x64xf32>
    %75 = arith.truncf %74 : vector<24x64xf32> to vector<24x64xbf16>
    %76 = vector.extract_strided_slice %41 {offsets = [0, 64], sizes = [24, 64], strides = [1, 1]} : vector<24x128xf32> to vector<24x64xf32>
    %77 = arith.truncf %76 : vector<24x64xf32> to vector<24x64xbf16>
    "tpu.trace_start"() <{level = 10 : i32, message = "qd,kd->qk"}> : () -> ()
    %cst_30 = arith.constant dense<0.000000e+00> : vector<24x24xf32>
    %78 = tpu.matmul %73, %75, %cst_30 {dimension_numbers = #tpu.dot_dimension_numbers<[1], [1], [0], [0], [0, 0, 1, 0], [], []>} : vector<24x64xbf16>, vector<24x64xbf16>, vector<24x24xf32> -> vector<24x24xf32>
    "tpu.trace_stop"() : () -> ()
    %cst_31 = arith.constant 1.250000e-01 : f32
    %79 = vector.broadcast %cst_31 : f32 to vector<24x24xf32>
    %80 = arith.mulf %78, %79 : vector<24x24xf32>
    %cst_32 = arith.constant -1.000000e+30 : f32
    %81 = vector.broadcast %cst_32 : f32 to vector<24x24xf32>
    %82 = arith.select %4, %80, %81 : vector<24x24xi1>, vector<24x24xf32>
    %cst_33 = arith.constant dense<0xFF800000> : vector<24xf32>
    %83 = vector.multi_reduction <maximumf>, %82, %cst_33 [1] : vector<24x24xf32> to vector<24xf32>
    %84 = vector.shape_cast %83 : vector<24xf32> to vector<24x1xf32>
    %85 = vector.broadcast %84 : vector<24x1xf32> to vector<24x24xf32>
    %86 = arith.subf %82, %85 : vector<24x24xf32>
    %87 = math.exp %86 : vector<24x24xf32>
    %cst_34 = arith.constant dense<0.000000e+00> : vector<24xf32>
    %88 = vector.multi_reduction <add>, %87, %cst_34 [1] : vector<24x24xf32> to vector<24xf32>
    %89 = vector.shape_cast %88 : vector<24xf32> to vector<24x1xf32>
    %90 = tpu.reciprocal %89 {approx = true} : vector<24x1xf32> -> vector<24x1xf32>
    %91 = vector.broadcast %90 : vector<24x1xf32> to vector<24x24xf32>
    %92 = arith.mulf %87, %91 : vector<24x24xf32>
    %93 = arith.truncf %92 : vector<24x24xf32> to vector<24x24xbf16>
    %cst_35 = arith.constant dense<0.000000e+00> : vector<24x64xf32>
    %94 = tpu.matmul %93, %77, %cst_35 {dimension_numbers = #tpu.dot_dimension_numbers<[1], [0], [0], [1], [0, 0, 1, 1], [], []>} : vector<24x24xbf16>, vector<24x64xbf16>, vector<24x64xf32> -> vector<24x64xf32>
    %95 = arith.truncf %94 : vector<24x64xf32> to vector<24x64xbf16>
    %96 = vector.extract_strided_slice %43 {offsets = [64, 0], sizes = [64, 128], strides = [1, 1]} : vector<128x128xbf16> to vector<64x128xbf16>
    %cst_36 = arith.constant dense<0.000000e+00> : vector<24x128xf32>
    %97 = tpu.matmul %95, %96, %cst_36 {dimension_numbers = #tpu.dot_dimension_numbers<[1], [0], [0], [1], [0, 0, 1, 1], [], []>} : vector<24x64xbf16>, vector<64x128xbf16>, vector<24x128xf32> -> vector<24x128xf32>
    %98 = arith.addf %71, %97 : vector<24x128xf32>
    %99 = arith.addf %1, %98 : vector<24x128xf32>
    %c0_37 = arith.constant 0 : index
    %c0_38 = arith.constant 0 : index
    %c0_39 = arith.constant 0 : index
    %100 = vector.load %arg7[%c0_37, %c0_38, %c0_39] : memref<2x1x128xf32, #tpu.memory_space<vmem>>, vector<1x1x128xf32>
    %101 = vector.shape_cast %100 : vector<1x1x128xf32> to vector<1x128xf32>
    %102 = vector.broadcast %101 : vector<1x128xf32> to vector<24x128xf32>
    %103 = arith.addf %99, %102 : vector<24x128xf32>
    %c0_40 = arith.constant 0 : index
    %c0_41 = arith.constant 0 : index
    %c0_42 = arith.constant 0 : index
    %104 = vector.load %arg8[%c0_40, %c0_41, %c0_42] : memref<2x1x128xf32, #tpu.memory_space<vmem>>, vector<1x1x128xf32>
    %105 = vector.shape_cast %104 : vector<1x1x128xf32> to vector<1x128xf32>
    %c0_43 = arith.constant 0 : index
    %c0_44 = arith.constant 0 : index
    %c0_45 = arith.constant 0 : index
    %106 = vector.load %arg9[%c0_43, %c0_44, %c0_45] : memref<2x1x128xf32, #tpu.memory_space<vmem>>, vector<1x1x128xf32>
    %107 = vector.shape_cast %106 : vector<1x1x128xf32> to vector<1x128xf32>
    %cst_46 = arith.constant dense<0.000000e+00> : vector<24xf32>
    %108 = vector.multi_reduction <add>, %103, %cst_46 [1] : vector<24x128xf32> to vector<24xf32>
    %109 = vector.shape_cast %108 : vector<24xf32> to vector<24x1xf32>
    %cst_47 = arith.constant 1.280000e+02 : f32
    %110 = vector.broadcast %cst_47 : f32 to vector<24x1xf32>
    %111 = arith.divf %109, %110 : vector<24x1xf32>
    %112 = vector.broadcast %111 : vector<24x1xf32> to vector<24x128xf32>
    %113 = arith.subf %103, %112 : vector<24x128xf32>
    %114 = arith.mulf %113, %113 : vector<24x128xf32>
    %cst_48 = arith.constant dense<0.000000e+00> : vector<24xf32>
    %115 = vector.multi_reduction <add>, %114, %cst_48 [1] : vector<24x128xf32> to vector<24xf32>
    %116 = vector.shape_cast %115 : vector<24xf32> to vector<24x1xf32>
    %cst_49 = arith.constant 1.280000e+02 : f32
    %117 = vector.broadcast %cst_49 : f32 to vector<24x1xf32>
    %118 = arith.divf %116, %117 : vector<24x1xf32>
    %119 = vector.broadcast %111 : vector<24x1xf32> to vector<24x128xf32>
    %120 = arith.subf %103, %119 : vector<24x128xf32>
    %cst_50 = arith.constant 9.99999997E-7 : f32
    %121 = vector.broadcast %cst_50 : f32 to vector<24x1xf32>
    %122 = arith.addf %118, %121 : vector<24x1xf32>
    %123 = math.rsqrt %122 : vector<24x1xf32>
    %124 = vector.broadcast %123 : vector<24x1xf32> to vector<24x128xf32>
    %125 = arith.mulf %120, %124 : vector<24x128xf32>
    %126 = vector.broadcast %105 : vector<1x128xf32> to vector<24x128xf32>
    %127 = arith.mulf %125, %126 : vector<24x128xf32>
    %128 = vector.broadcast %107 : vector<1x128xf32> to vector<24x128xf32>
    %129 = arith.addf %127, %128 : vector<24x128xf32>
    %130 = arith.truncf %129 : vector<24x128xf32> to vector<24x128xbf16>
    %c0_51 = arith.constant 0 : index
    %c0_52 = arith.constant 0 : index
    %c0_53 = arith.constant 0 : index
    %131 = vector.load %arg10[%c0_51, %c0_52, %c0_53] : memref<2x128x256xbf16, #tpu.memory_space<vmem>>, vector<1x128x256xbf16>
    %132 = vector.shape_cast %131 : vector<1x128x256xbf16> to vector<128x256xbf16>
    %cst_54 = arith.constant dense<0.000000e+00> : vector<24x256xf32>
    %133 = tpu.matmul %130, %132, %cst_54 {dimension_numbers = #tpu.dot_dimension_numbers<[1], [0], [0], [1], [0, 0, 1, 1], [], []>} : vector<24x128xbf16>, vector<128x256xbf16>, vector<24x256xf32> -> vector<24x256xf32>
    %c0_55 = arith.constant 0 : index
    %c0_56 = arith.constant 0 : index
    %c0_57 = arith.constant 0 : index
    %134 = vector.load %arg11[%c0_55, %c0_56, %c0_57] : memref<2x1x256xf32, #tpu.memory_space<vmem>>, vector<1x1x256xf32>
    %135 = vector.shape_cast %134 : vector<1x1x256xf32> to vector<1x256xf32>
    %136 = vector.broadcast %135 : vector<1x256xf32> to vector<24x256xf32>
    %137 = arith.addf %133, %136 : vector<24x256xf32>
    %138 = arith.mulf %137, %137 : vector<24x256xf32>
    %139 = arith.mulf %137, %138 : vector<24x256xf32>
    %cst_58 = arith.constant 4.471500e-02 : f32
    %140 = vector.broadcast %cst_58 : f32 to vector<24x256xf32>
    %141 = arith.mulf %140, %139 : vector<24x256xf32>
    %142 = arith.addf %137, %141 : vector<24x256xf32>
    %cst_59 = arith.constant 0.797884583 : f32
    %143 = vector.broadcast %cst_59 : f32 to vector<24x256xf32>
    %144 = arith.mulf %143, %142 : vector<24x256xf32>
    %145 = math.tanh %144 : vector<24x256xf32>
    %cst_60 = arith.constant 1.000000e+00 : f32
    %146 = vector.broadcast %cst_60 : f32 to vector<24x256xf32>
    %147 = arith.addf %146, %145 : vector<24x256xf32>
    %cst_61 = arith.constant 5.000000e-01 : f32
    %148 = vector.broadcast %cst_61 : f32 to vector<24x256xf32>
    %149 = arith.mulf %148, %147 : vector<24x256xf32>
    %150 = arith.mulf %137, %149 : vector<24x256xf32>
    %151 = arith.truncf %150 : vector<24x256xf32> to vector<24x256xbf16>
    %c0_62 = arith.constant 0 : index
    %c0_63 = arith.constant 0 : index
    %c0_64 = arith.constant 0 : index
    %152 = vector.load %arg12[%c0_62, %c0_63, %c0_64] : memref<2x256x128xbf16, #tpu.memory_space<vmem>>, vector<1x256x128xbf16>
    %153 = vector.shape_cast %152 : vector<1x256x128xbf16> to vector<256x128xbf16>
    %cst_65 = arith.constant dense<0.000000e+00> : vector<24x128xf32>
    %154 = tpu.matmul %151, %153, %cst_65 {dimension_numbers = #tpu.dot_dimension_numbers<[1], [0], [0], [1], [0, 0, 1, 1], [], []>} : vector<24x256xbf16>, vector<256x128xbf16>, vector<24x128xf32> -> vector<24x128xf32>
    %c0_66 = arith.constant 0 : index
    %c0_67 = arith.constant 0 : index
    %c0_68 = arith.constant 0 : index
    %155 = vector.load %arg13[%c0_66, %c0_67, %c0_68] : memref<2x1x128xf32, #tpu.memory_space<vmem>>, vector<1x1x128xf32>
    %156 = vector.shape_cast %155 : vector<1x1x128xf32> to vector<1x128xf32>
    %157 = vector.broadcast %156 : vector<1x128xf32> to vector<24x128xf32>
    %158 = arith.addf %154, %157 : vector<24x128xf32>
    %159 = arith.addf %103, %158 : vector<24x128xf32>
    %c1 = arith.constant 1 : index
    %c0_69 = arith.constant 0 : index
    %c0_70 = arith.constant 0 : index
    %160 = vector.load %arg2[%c1, %c0_69, %c0_70] : memref<2x1x128xf32, #tpu.memory_space<vmem>>, vector<1x1x128xf32>
    %161 = vector.shape_cast %160 : vector<1x1x128xf32> to vector<1x128xf32>
    %c1_71 = arith.constant 1 : index
    %c0_72 = arith.constant 0 : index
    %c0_73 = arith.constant 0 : index
    %162 = vector.load %arg3[%c1_71, %c0_72, %c0_73] : memref<2x1x128xf32, #tpu.memory_space<vmem>>, vector<1x1x128xf32>
    %163 = vector.shape_cast %162 : vector<1x1x128xf32> to vector<1x128xf32>
    %cst_74 = arith.constant dense<0.000000e+00> : vector<24xf32>
    %164 = vector.multi_reduction <add>, %159, %cst_74 [1] : vector<24x128xf32> to vector<24xf32>
    %165 = vector.shape_cast %164 : vector<24xf32> to vector<24x1xf32>
    %cst_75 = arith.constant 1.280000e+02 : f32
    %166 = vector.broadcast %cst_75 : f32 to vector<24x1xf32>
    %167 = arith.divf %165, %166 : vector<24x1xf32>
    %168 = vector.broadcast %167 : vector<24x1xf32> to vector<24x128xf32>
    %169 = arith.subf %159, %168 : vector<24x128xf32>
    %170 = arith.mulf %169, %169 : vector<24x128xf32>
    %cst_76 = arith.constant dense<0.000000e+00> : vector<24xf32>
    %171 = vector.multi_reduction <add>, %170, %cst_76 [1] : vector<24x128xf32> to vector<24xf32>
    %172 = vector.shape_cast %171 : vector<24xf32> to vector<24x1xf32>
    %cst_77 = arith.constant 1.280000e+02 : f32
    %173 = vector.broadcast %cst_77 : f32 to vector<24x1xf32>
    %174 = arith.divf %172, %173 : vector<24x1xf32>
    %175 = vector.broadcast %167 : vector<24x1xf32> to vector<24x128xf32>
    %176 = arith.subf %159, %175 : vector<24x128xf32>
    %cst_78 = arith.constant 9.99999997E-7 : f32
    %177 = vector.broadcast %cst_78 : f32 to vector<24x1xf32>
    %178 = arith.addf %174, %177 : vector<24x1xf32>
    %179 = math.rsqrt %178 : vector<24x1xf32>
    %180 = vector.broadcast %179 : vector<24x1xf32> to vector<24x128xf32>
    %181 = arith.mulf %176, %180 : vector<24x128xf32>
    %182 = vector.broadcast %161 : vector<1x128xf32> to vector<24x128xf32>
    %183 = arith.mulf %181, %182 : vector<24x128xf32>
    %184 = vector.broadcast %163 : vector<1x128xf32> to vector<24x128xf32>
    %185 = arith.addf %183, %184 : vector<24x128xf32>
    %186 = arith.truncf %185 : vector<24x128xf32> to vector<24x128xbf16>
    %c1_79 = arith.constant 1 : index
    %c0_80 = arith.constant 0 : index
    %c0_81 = arith.constant 0 : index
    %187 = vector.load %arg4[%c1_79, %c0_80, %c0_81] : memref<2x128x384xbf16, #tpu.memory_space<vmem>>, vector<1x128x384xbf16>
    %188 = vector.shape_cast %187 : vector<1x128x384xbf16> to vector<128x384xbf16>
    %cst_82 = arith.constant dense<0.000000e+00> : vector<24x384xf32>
    %189 = tpu.matmul %186, %188, %cst_82 {dimension_numbers = #tpu.dot_dimension_numbers<[1], [0], [0], [1], [0, 0, 1, 1], [], []>} : vector<24x128xbf16>, vector<128x384xbf16>, vector<24x384xf32> -> vector<24x384xf32>
    %c1_83 = arith.constant 1 : index
    %c0_84 = arith.constant 0 : index
    %c0_85 = arith.constant 0 : index
    %190 = vector.load %arg5[%c1_83, %c0_84, %c0_85] : memref<2x1x384xf32, #tpu.memory_space<vmem>>, vector<1x1x384xf32>
    %191 = vector.shape_cast %190 : vector<1x1x384xf32> to vector<1x384xf32>
    %192 = vector.broadcast %191 : vector<1x384xf32> to vector<24x384xf32>
    %193 = arith.addf %189, %192 : vector<24x384xf32>
    %194 = vector.extract_strided_slice %193 {offsets = [0, 0], sizes = [24, 128], strides = [1, 1]} : vector<24x384xf32> to vector<24x128xf32>
    %195 = vector.extract_strided_slice %193 {offsets = [0, 128], sizes = [24, 128], strides = [1, 1]} : vector<24x384xf32> to vector<24x128xf32>
    %196 = vector.extract_strided_slice %193 {offsets = [0, 256], sizes = [24, 128], strides = [1, 1]} : vector<24x384xf32> to vector<24x128xf32>
    %c1_86 = arith.constant 1 : index
    %c0_87 = arith.constant 0 : index
    %c0_88 = arith.constant 0 : index
    %197 = vector.load %arg6[%c1_86, %c0_87, %c0_88] : memref<2x128x128xbf16, #tpu.memory_space<vmem>>, vector<1x128x128xbf16>
    %198 = vector.shape_cast %197 : vector<1x128x128xbf16> to vector<128x128xbf16>
    %cst_89 = arith.constant 0.000000e+00 : f32
    %199 = vector.broadcast %cst_89 : f32 to vector<24x128xf32>
    %200 = vector.extract_strided_slice %194 {offsets = [0, 0], sizes = [24, 64], strides = [1, 1]} : vector<24x128xf32> to vector<24x64xf32>
    %201 = arith.truncf %200 : vector<24x64xf32> to vector<24x64xbf16>
    %202 = vector.extract_strided_slice %195 {offsets = [0, 0], sizes = [24, 64], strides = [1, 1]} : vector<24x128xf32> to vector<24x64xf32>
    %203 = arith.truncf %202 : vector<24x64xf32> to vector<24x64xbf16>
    %204 = vector.extract_strided_slice %196 {offsets = [0, 0], sizes = [24, 64], strides = [1, 1]} : vector<24x128xf32> to vector<24x64xf32>
    %205 = arith.truncf %204 : vector<24x64xf32> to vector<24x64xbf16>
    "tpu.trace_start"() <{level = 10 : i32, message = "qd,kd->qk"}> : () -> ()
    %cst_90 = arith.constant dense<0.000000e+00> : vector<24x24xf32>
    %206 = tpu.matmul %201, %203, %cst_90 {dimension_numbers = #tpu.dot_dimension_numbers<[1], [1], [0], [0], [0, 0, 1, 0], [], []>} : vector<24x64xbf16>, vector<24x64xbf16>, vector<24x24xf32> -> vector<24x24xf32>
    "tpu.trace_stop"() : () -> ()
    %cst_91 = arith.constant 1.250000e-01 : f32
    %207 = vector.broadcast %cst_91 : f32 to vector<24x24xf32>
    %208 = arith.mulf %206, %207 : vector<24x24xf32>
    %cst_92 = arith.constant -1.000000e+30 : f32
    %209 = vector.broadcast %cst_92 : f32 to vector<24x24xf32>
    %210 = arith.select %4, %208, %209 : vector<24x24xi1>, vector<24x24xf32>
    %cst_93 = arith.constant dense<0xFF800000> : vector<24xf32>
    %211 = vector.multi_reduction <maximumf>, %210, %cst_93 [1] : vector<24x24xf32> to vector<24xf32>
    %212 = vector.shape_cast %211 : vector<24xf32> to vector<24x1xf32>
    %213 = vector.broadcast %212 : vector<24x1xf32> to vector<24x24xf32>
    %214 = arith.subf %210, %213 : vector<24x24xf32>
    %215 = math.exp %214 : vector<24x24xf32>
    %cst_94 = arith.constant dense<0.000000e+00> : vector<24xf32>
    %216 = vector.multi_reduction <add>, %215, %cst_94 [1] : vector<24x24xf32> to vector<24xf32>
    %217 = vector.shape_cast %216 : vector<24xf32> to vector<24x1xf32>
    %218 = tpu.reciprocal %217 {approx = true} : vector<24x1xf32> -> vector<24x1xf32>
    %219 = vector.broadcast %218 : vector<24x1xf32> to vector<24x24xf32>
    %220 = arith.mulf %215, %219 : vector<24x24xf32>
    %221 = arith.truncf %220 : vector<24x24xf32> to vector<24x24xbf16>
    %cst_95 = arith.constant dense<0.000000e+00> : vector<24x64xf32>
    %222 = tpu.matmul %221, %205, %cst_95 {dimension_numbers = #tpu.dot_dimension_numbers<[1], [0], [0], [1], [0, 0, 1, 1], [], []>} : vector<24x24xbf16>, vector<24x64xbf16>, vector<24x64xf32> -> vector<24x64xf32>
    %223 = arith.truncf %222 : vector<24x64xf32> to vector<24x64xbf16>
    %224 = vector.extract_strided_slice %198 {offsets = [0, 0], sizes = [64, 128], strides = [1, 1]} : vector<128x128xbf16> to vector<64x128xbf16>
    %cst_96 = arith.constant dense<0.000000e+00> : vector<24x128xf32>
    %225 = tpu.matmul %223, %224, %cst_96 {dimension_numbers = #tpu.dot_dimension_numbers<[1], [0], [0], [1], [0, 0, 1, 1], [], []>} : vector<24x64xbf16>, vector<64x128xbf16>, vector<24x128xf32> -> vector<24x128xf32>
    %226 = arith.addf %199, %225 : vector<24x128xf32>
    %227 = vector.extract_strided_slice %194 {offsets = [0, 64], sizes = [24, 64], strides = [1, 1]} : vector<24x128xf32> to vector<24x64xf32>
    %228 = arith.truncf %227 : vector<24x64xf32> to vector<24x64xbf16>
    %229 = vector.extract_strided_slice %195 {offsets = [0, 64], sizes = [24, 64], strides = [1, 1]} : vector<24x128xf32> to vector<24x64xf32>
    %230 = arith.truncf %229 : vector<24x64xf32> to vector<24x64xbf16>
    %231 = vector.extract_strided_slice %196 {offsets = [0, 64], sizes = [24, 64], strides = [1, 1]} : vector<24x128xf32> to vector<24x64xf32>
    %232 = arith.truncf %231 : vector<24x64xf32> to vector<24x64xbf16>
    "tpu.trace_start"() <{level = 10 : i32, message = "qd,kd->qk"}> : () -> ()
    %cst_97 = arith.constant dense<0.000000e+00> : vector<24x24xf32>
    %233 = tpu.matmul %228, %230, %cst_97 {dimension_numbers = #tpu.dot_dimension_numbers<[1], [1], [0], [0], [0, 0, 1, 0], [], []>} : vector<24x64xbf16>, vector<24x64xbf16>, vector<24x24xf32> -> vector<24x24xf32>
    "tpu.trace_stop"() : () -> ()
    %cst_98 = arith.constant 1.250000e-01 : f32
    %234 = vector.broadcast %cst_98 : f32 to vector<24x24xf32>
    %235 = arith.mulf %233, %234 : vector<24x24xf32>
    %cst_99 = arith.constant -1.000000e+30 : f32
    %236 = vector.broadcast %cst_99 : f32 to vector<24x24xf32>
    %237 = arith.select %4, %235, %236 : vector<24x24xi1>, vector<24x24xf32>
    %cst_100 = arith.constant dense<0xFF800000> : vector<24xf32>
    %238 = vector.multi_reduction <maximumf>, %237, %cst_100 [1] : vector<24x24xf32> to vector<24xf32>
    %239 = vector.shape_cast %238 : vector<24xf32> to vector<24x1xf32>
    %240 = vector.broadcast %239 : vector<24x1xf32> to vector<24x24xf32>
    %241 = arith.subf %237, %240 : vector<24x24xf32>
    %242 = math.exp %241 : vector<24x24xf32>
    %cst_101 = arith.constant dense<0.000000e+00> : vector<24xf32>
    %243 = vector.multi_reduction <add>, %242, %cst_101 [1] : vector<24x24xf32> to vector<24xf32>
    %244 = vector.shape_cast %243 : vector<24xf32> to vector<24x1xf32>
    %245 = tpu.reciprocal %244 {approx = true} : vector<24x1xf32> -> vector<24x1xf32>
    %246 = vector.broadcast %245 : vector<24x1xf32> to vector<24x24xf32>
    %247 = arith.mulf %242, %246 : vector<24x24xf32>
    %248 = arith.truncf %247 : vector<24x24xf32> to vector<24x24xbf16>
    %cst_102 = arith.constant dense<0.000000e+00> : vector<24x64xf32>
    %249 = tpu.matmul %248, %232, %cst_102 {dimension_numbers = #tpu.dot_dimension_numbers<[1], [0], [0], [1], [0, 0, 1, 1], [], []>} : vector<24x24xbf16>, vector<24x64xbf16>, vector<24x64xf32> -> vector<24x64xf32>
    %250 = arith.truncf %249 : vector<24x64xf32> to vector<24x64xbf16>
    %251 = vector.extract_strided_slice %198 {offsets = [64, 0], sizes = [64, 128], strides = [1, 1]} : vector<128x128xbf16> to vector<64x128xbf16>
    %cst_103 = arith.constant dense<0.000000e+00> : vector<24x128xf32>
    %252 = tpu.matmul %250, %251, %cst_103 {dimension_numbers = #tpu.dot_dimension_numbers<[1], [0], [0], [1], [0, 0, 1, 1], [], []>} : vector<24x64xbf16>, vector<64x128xbf16>, vector<24x128xf32> -> vector<24x128xf32>
    %253 = arith.addf %226, %252 : vector<24x128xf32>
    %254 = arith.addf %159, %253 : vector<24x128xf32>
    %c1_104 = arith.constant 1 : index
    %c0_105 = arith.constant 0 : index
    %c0_106 = arith.constant 0 : index
    %255 = vector.load %arg7[%c1_104, %c0_105, %c0_106] : memref<2x1x128xf32, #tpu.memory_space<vmem>>, vector<1x1x128xf32>
    %256 = vector.shape_cast %255 : vector<1x1x128xf32> to vector<1x128xf32>
    %257 = vector.broadcast %256 : vector<1x128xf32> to vector<24x128xf32>
    %258 = arith.addf %254, %257 : vector<24x128xf32>
    %c1_107 = arith.constant 1 : index
    %c0_108 = arith.constant 0 : index
    %c0_109 = arith.constant 0 : index
    %259 = vector.load %arg8[%c1_107, %c0_108, %c0_109] : memref<2x1x128xf32, #tpu.memory_space<vmem>>, vector<1x1x128xf32>
    %260 = vector.shape_cast %259 : vector<1x1x128xf32> to vector<1x128xf32>
    %c1_110 = arith.constant 1 : index
    %c0_111 = arith.constant 0 : index
    %c0_112 = arith.constant 0 : index
    %261 = vector.load %arg9[%c1_110, %c0_111, %c0_112] : memref<2x1x128xf32, #tpu.memory_space<vmem>>, vector<1x1x128xf32>
    %262 = vector.shape_cast %261 : vector<1x1x128xf32> to vector<1x128xf32>
    %cst_113 = arith.constant dense<0.000000e+00> : vector<24xf32>
    %263 = vector.multi_reduction <add>, %258, %cst_113 [1] : vector<24x128xf32> to vector<24xf32>
    %264 = vector.shape_cast %263 : vector<24xf32> to vector<24x1xf32>
    %cst_114 = arith.constant 1.280000e+02 : f32
    %265 = vector.broadcast %cst_114 : f32 to vector<24x1xf32>
    %266 = arith.divf %264, %265 : vector<24x1xf32>
    %267 = vector.broadcast %266 : vector<24x1xf32> to vector<24x128xf32>
    %268 = arith.subf %258, %267 : vector<24x128xf32>
    %269 = arith.mulf %268, %268 : vector<24x128xf32>
    %cst_115 = arith.constant dense<0.000000e+00> : vector<24xf32>
    %270 = vector.multi_reduction <add>, %269, %cst_115 [1] : vector<24x128xf32> to vector<24xf32>
    %271 = vector.shape_cast %270 : vector<24xf32> to vector<24x1xf32>
    %cst_116 = arith.constant 1.280000e+02 : f32
    %272 = vector.broadcast %cst_116 : f32 to vector<24x1xf32>
    %273 = arith.divf %271, %272 : vector<24x1xf32>
    %274 = vector.broadcast %266 : vector<24x1xf32> to vector<24x128xf32>
    %275 = arith.subf %258, %274 : vector<24x128xf32>
    %cst_117 = arith.constant 9.99999997E-7 : f32
    %276 = vector.broadcast %cst_117 : f32 to vector<24x1xf32>
    %277 = arith.addf %273, %276 : vector<24x1xf32>
    %278 = math.rsqrt %277 : vector<24x1xf32>
    %279 = vector.broadcast %278 : vector<24x1xf32> to vector<24x128xf32>
    %280 = arith.mulf %275, %279 : vector<24x128xf32>
    %281 = vector.broadcast %260 : vector<1x128xf32> to vector<24x128xf32>
    %282 = arith.mulf %280, %281 : vector<24x128xf32>
    %283 = vector.broadcast %262 : vector<1x128xf32> to vector<24x128xf32>
    %284 = arith.addf %282, %283 : vector<24x128xf32>
    %285 = arith.truncf %284 : vector<24x128xf32> to vector<24x128xbf16>
    %c1_118 = arith.constant 1 : index
    %c0_119 = arith.constant 0 : index
    %c0_120 = arith.constant 0 : index
    %286 = vector.load %arg10[%c1_118, %c0_119, %c0_120] : memref<2x128x256xbf16, #tpu.memory_space<vmem>>, vector<1x128x256xbf16>
    %287 = vector.shape_cast %286 : vector<1x128x256xbf16> to vector<128x256xbf16>
    %cst_121 = arith.constant dense<0.000000e+00> : vector<24x256xf32>
    %288 = tpu.matmul %285, %287, %cst_121 {dimension_numbers = #tpu.dot_dimension_numbers<[1], [0], [0], [1], [0, 0, 1, 1], [], []>} : vector<24x128xbf16>, vector<128x256xbf16>, vector<24x256xf32> -> vector<24x256xf32>
    %c1_122 = arith.constant 1 : index
    %c0_123 = arith.constant 0 : index
    %c0_124 = arith.constant 0 : index
    %289 = vector.load %arg11[%c1_122, %c0_123, %c0_124] : memref<2x1x256xf32, #tpu.memory_space<vmem>>, vector<1x1x256xf32>
    %290 = vector.shape_cast %289 : vector<1x1x256xf32> to vector<1x256xf32>
    %291 = vector.broadcast %290 : vector<1x256xf32> to vector<24x256xf32>
    %292 = arith.addf %288, %291 : vector<24x256xf32>
    %293 = arith.mulf %292, %292 : vector<24x256xf32>
    %294 = arith.mulf %292, %293 : vector<24x256xf32>
    %cst_125 = arith.constant 4.471500e-02 : f32
    %295 = vector.broadcast %cst_125 : f32 to vector<24x256xf32>
    %296 = arith.mulf %295, %294 : vector<24x256xf32>
    %297 = arith.addf %292, %296 : vector<24x256xf32>
    %cst_126 = arith.constant 0.797884583 : f32
    %298 = vector.broadcast %cst_126 : f32 to vector<24x256xf32>
    %299 = arith.mulf %298, %297 : vector<24x256xf32>
    %300 = math.tanh %299 : vector<24x256xf32>
    %cst_127 = arith.constant 1.000000e+00 : f32
    %301 = vector.broadcast %cst_127 : f32 to vector<24x256xf32>
    %302 = arith.addf %301, %300 : vector<24x256xf32>
    %cst_128 = arith.constant 5.000000e-01 : f32
    %303 = vector.broadcast %cst_128 : f32 to vector<24x256xf32>
    %304 = arith.mulf %303, %302 : vector<24x256xf32>
    %305 = arith.mulf %292, %304 : vector<24x256xf32>
    %306 = arith.truncf %305 : vector<24x256xf32> to vector<24x256xbf16>
    %c1_129 = arith.constant 1 : index
    %c0_130 = arith.constant 0 : index
    %c0_131 = arith.constant 0 : index
    %307 = vector.load %arg12[%c1_129, %c0_130, %c0_131] : memref<2x256x128xbf16, #tpu.memory_space<vmem>>, vector<1x256x128xbf16>
    %308 = vector.shape_cast %307 : vector<1x256x128xbf16> to vector<256x128xbf16>
    %cst_132 = arith.constant dense<0.000000e+00> : vector<24x128xf32>
    %309 = tpu.matmul %306, %308, %cst_132 {dimension_numbers = #tpu.dot_dimension_numbers<[1], [0], [0], [1], [0, 0, 1, 1], [], []>} : vector<24x256xbf16>, vector<256x128xbf16>, vector<24x128xf32> -> vector<24x128xf32>
    %c1_133 = arith.constant 1 : index
    %c0_134 = arith.constant 0 : index
    %c0_135 = arith.constant 0 : index
    %310 = vector.load %arg13[%c1_133, %c0_134, %c0_135] : memref<2x1x128xf32, #tpu.memory_space<vmem>>, vector<1x1x128xf32>
    %311 = vector.shape_cast %310 : vector<1x1x128xf32> to vector<1x128xf32>
    %312 = vector.broadcast %311 : vector<1x128xf32> to vector<24x128xf32>
    %313 = arith.addf %309, %312 : vector<24x128xf32>
    %314 = arith.addf %258, %313 : vector<24x128xf32>
    %c0_136 = arith.constant 0 : index
    %c0_137 = arith.constant 0 : index
    %c0_138 = arith.constant 0 : index
    %315 = vector.load %arg14[%c0_136, %c0_137, %c0_138] : memref<1x1x128xf32, #tpu.memory_space<vmem>>, vector<1x1x128xf32>
    %316 = vector.shape_cast %315 : vector<1x1x128xf32> to vector<1x128xf32>
    %c0_139 = arith.constant 0 : index
    %c0_140 = arith.constant 0 : index
    %c0_141 = arith.constant 0 : index
    %317 = vector.load %arg15[%c0_139, %c0_140, %c0_141] : memref<1x1x128xf32, #tpu.memory_space<vmem>>, vector<1x1x128xf32>
    %318 = vector.shape_cast %317 : vector<1x1x128xf32> to vector<1x128xf32>
    %cst_142 = arith.constant dense<0.000000e+00> : vector<24xf32>
    %319 = vector.multi_reduction <add>, %314, %cst_142 [1] : vector<24x128xf32> to vector<24xf32>
    %320 = vector.shape_cast %319 : vector<24xf32> to vector<24x1xf32>
    %cst_143 = arith.constant 1.280000e+02 : f32
    %321 = vector.broadcast %cst_143 : f32 to vector<24x1xf32>
    %322 = arith.divf %320, %321 : vector<24x1xf32>
    %323 = vector.broadcast %322 : vector<24x1xf32> to vector<24x128xf32>
    %324 = arith.subf %314, %323 : vector<24x128xf32>
    %325 = arith.mulf %324, %324 : vector<24x128xf32>
    %cst_144 = arith.constant dense<0.000000e+00> : vector<24xf32>
    %326 = vector.multi_reduction <add>, %325, %cst_144 [1] : vector<24x128xf32> to vector<24xf32>
    %327 = vector.shape_cast %326 : vector<24xf32> to vector<24x1xf32>
    %cst_145 = arith.constant 1.280000e+02 : f32
    %328 = vector.broadcast %cst_145 : f32 to vector<24x1xf32>
    %329 = arith.divf %327, %328 : vector<24x1xf32>
    %330 = vector.broadcast %322 : vector<24x1xf32> to vector<24x128xf32>
    %331 = arith.subf %314, %330 : vector<24x128xf32>
    %cst_146 = arith.constant 9.99999997E-7 : f32
    %332 = vector.broadcast %cst_146 : f32 to vector<24x1xf32>
    %333 = arith.addf %329, %332 : vector<24x1xf32>
    %334 = math.rsqrt %333 : vector<24x1xf32>
    %335 = vector.broadcast %334 : vector<24x1xf32> to vector<24x128xf32>
    %336 = arith.mulf %331, %335 : vector<24x128xf32>
    %337 = vector.broadcast %316 : vector<1x128xf32> to vector<24x128xf32>
    %338 = arith.mulf %336, %337 : vector<24x128xf32>
    %339 = vector.broadcast %318 : vector<1x128xf32> to vector<24x128xf32>
    %340 = arith.addf %338, %339 : vector<24x128xf32>
    %341 = vector.extract_strided_slice %340 {offsets = [0, 0], sizes = [17, 128], strides = [1, 1]} : vector<24x128xf32> to vector<17x128xf32>
    %cst_147 = arith.constant dense<0.000000e+00> : vector<128xf32>
    %342 = vector.multi_reduction <add>, %341, %cst_147 [0] : vector<17x128xf32> to vector<128xf32>
    %343 = vector.shape_cast %342 : vector<128xf32> to vector<1x128xf32>
    %cst_148 = arith.constant 0.0588235296 : f32
    %344 = vector.broadcast %cst_148 : f32 to vector<1x128xf32>
    %345 = arith.mulf %343, %344 : vector<1x128xf32>
    %c0_149 = arith.constant 0 : index
    %c0_150 = arith.constant 0 : index
    %c0_151 = arith.constant 0 : index
    %346 = vector.load %arg16[%c0_149, %c0_150, %c0_151] : memref<1x1x128xf32, #tpu.memory_space<vmem>>, vector<1x1x128xf32>
    %347 = vector.shape_cast %346 : vector<1x1x128xf32> to vector<1x128xf32>
    %348 = vector.shape_cast %345 : vector<1x128xf32> to vector<1x1x128xf32>
    tpu.vector_store %arg16[%c0_149, %c0_150, %c0_151], %348 {strides = array<i32>} : memref<1x1x128xf32, #tpu.memory_space<vmem>>, vector<1x1x128xf32>,
    return
  }
  func.func @transform_0(%arg0: i32) -> (i32, i32, i32) {
    %c0_i32 = arith.constant 0 : i32
    %c0_i32_0 = arith.constant 0 : i32
    %c0_i32_1 = arith.constant 0 : i32
    return %arg0, %c0_i32, %c0_i32_0 : i32, i32, i32
  }
  func.func @transform_1(%arg0: i32) -> (i32, i32, i32) {
    %c0_i32 = arith.constant 0 : i32
    %c0_i32_0 = arith.constant 0 : i32
    %c0_i32_1 = arith.constant 0 : i32
    %c0_i32_2 = arith.constant 0 : i32
    return %c0_i32, %c0_i32_0, %c0_i32_1 : i32, i32, i32
  }
  func.func @transform_2(%arg0: i32) -> (i32, i32, i32) {
    %c0_i32 = arith.constant 0 : i32
    %c0_i32_0 = arith.constant 0 : i32
    %c0_i32_1 = arith.constant 0 : i32
    %c0_i32_2 = arith.constant 0 : i32
    return %c0_i32, %c0_i32_0, %c0_i32_1 : i32, i32, i32
  }
  func.func @transform_3(%arg0: i32) -> (i32, i32, i32) {
    %c0_i32 = arith.constant 0 : i32
    %c0_i32_0 = arith.constant 0 : i32
    %c0_i32_1 = arith.constant 0 : i32
    %c0_i32_2 = arith.constant 0 : i32
    return %c0_i32, %c0_i32_0, %c0_i32_1 : i32, i32, i32
  }
  func.func @transform_4(%arg0: i32) -> (i32, i32, i32) {
    %c0_i32 = arith.constant 0 : i32
    %c0_i32_0 = arith.constant 0 : i32
    %c0_i32_1 = arith.constant 0 : i32
    %c0_i32_2 = arith.constant 0 : i32
    return %c0_i32, %c0_i32_0, %c0_i32_1 : i32, i32, i32
  }
  func.func @transform_5(%arg0: i32) -> (i32, i32, i32) {
    %c0_i32 = arith.constant 0 : i32
    %c0_i32_0 = arith.constant 0 : i32
    %c0_i32_1 = arith.constant 0 : i32
    %c0_i32_2 = arith.constant 0 : i32
    return %c0_i32, %c0_i32_0, %c0_i32_1 : i32, i32, i32
  }
  func.func @transform_6(%arg0: i32) -> (i32, i32, i32) {
    %c0_i32 = arith.constant 0 : i32
    %c0_i32_0 = arith.constant 0 : i32
    %c0_i32_1 = arith.constant 0 : i32
    %c0_i32_2 = arith.constant 0 : i32
    return %c0_i32, %c0_i32_0, %c0_i32_1 : i32, i32, i32
  }
  func.func @transform_7(%arg0: i32) -> (i32, i32, i32) {
    %c0_i32 = arith.constant 0 : i32
    %c0_i32_0 = arith.constant 0 : i32
    %c0_i32_1 = arith.constant 0 : i32
    %c0_i32_2 = arith.constant 0 : i32
    return %c0_i32, %c0_i32_0, %c0_i32_1 : i32, i32, i32
  }
  func.func @transform_8(%arg0: i32) -> (i32, i32, i32) {
    %c0_i32 = arith.constant 0 : i32
    %c0_i32_0 = arith.constant 0 : i32
    %c0_i32_1 = arith.constant 0 : i32
    %c0_i32_2 = arith.constant 0 : i32
    return %c0_i32, %c0_i32_0, %c0_i32_1 : i32, i32, i32
  }
  func.func @transform_9(%arg0: i32) -> (i32, i32, i32) {
    %c0_i32 = arith.constant 0 : i32
    %c0_i32_0 = arith.constant 0 : i32
    %c0_i32_1 = arith.constant 0 : i32
    %c0_i32_2 = arith.constant 0 : i32
    return %c0_i32, %c0_i32_0, %c0_i32_1 : i32, i32, i32
  }
  func.func @transform_10(%arg0: i32) -> (i32, i32, i32) {
    %c0_i32 = arith.constant 0 : i32
    %c0_i32_0 = arith.constant 0 : i32
    %c0_i32_1 = arith.constant 0 : i32
    %c0_i32_2 = arith.constant 0 : i32
    return %c0_i32, %c0_i32_0, %c0_i32_1 : i32, i32, i32
  }
  func.func @transform_11(%arg0: i32) -> (i32, i32, i32) {
    %c0_i32 = arith.constant 0 : i32
    %c0_i32_0 = arith.constant 0 : i32
    %c0_i32_1 = arith.constant 0 : i32
    %c0_i32_2 = arith.constant 0 : i32
    return %c0_i32, %c0_i32_0, %c0_i32_1 : i32, i32, i32
  }
  func.func @transform_12(%arg0: i32) -> (i32, i32, i32) {
    %c0_i32 = arith.constant 0 : i32
    %c0_i32_0 = arith.constant 0 : i32
    %c0_i32_1 = arith.constant 0 : i32
    %c0_i32_2 = arith.constant 0 : i32
    return %c0_i32, %c0_i32_0, %c0_i32_1 : i32, i32, i32
  }
  func.func @transform_13(%arg0: i32) -> (i32, i32, i32) {
    %c0_i32 = arith.constant 0 : i32
    %c0_i32_0 = arith.constant 0 : i32
    %c0_i32_1 = arith.constant 0 : i32
    %c0_i32_2 = arith.constant 0 : i32
    return %c0_i32, %c0_i32_0, %c0_i32_1 : i32, i32, i32
  }
  func.func @transform_14(%arg0: i32) -> (i32, i32, i32) {
    %c0_i32 = arith.constant 0 : i32
    %c0_i32_0 = arith.constant 0 : i32
    %c0_i32_1 = arith.constant 0 : i32
    %c0_i32_2 = arith.constant 0 : i32
    return %c0_i32, %c0_i32_0, %c0_i32_1 : i32, i32, i32
  }
  func.func @transform_15(%arg0: i32) -> (i32, i32, i32) {
    %c0_i32 = arith.constant 0 : i32
    %c0_i32_0 = arith.constant 0 : i32
    %c0_i32_1 = arith.constant 0 : i32
    return %arg0, %c0_i32, %c0_i32_0 : i32, i32, i32
  }
}

module attributes {stable_mosaic.version = 11 : i64} {
  func.func @_head_kernel(%arg0: memref<2x1x128xf32, #tpu.memory_space<vmem>>, %arg1: memref<1x1xf32, #tpu.memory_space<vmem>>, %arg2: memref<128x1xf32, #tpu.memory_space<vmem>>, %arg3: memref<1x1xf32, #tpu.memory_space<vmem>>, %arg4: memref<2x1xf32, #tpu.memory_space<vmem>>) attributes {dimension_semantics = [], scalar_prefetch = 0 : i64, scratch_operands = 0 : i64, tpu.core_type = #tpu.core_type<tc>} {
    %c0 = arith.constant 0 : index
    %c0_0 = arith.constant 0 : index
    %c0_1 = arith.constant 0 : index
    %0 = vector.load %arg0[%c0, %c0_0, %c0_1] : memref<2x1x128xf32, #tpu.memory_space<vmem>>, vector<2x1x128xf32>
    %cst = arith.constant dense<0.000000e+00> : vector<2x128xf32>
    %1 = vector.multi_reduction <add>, %0, %cst [1] : vector<2x1x128xf32> to vector<2x128xf32>
    %cst_2 = arith.constant 1.000000e+00 : f32
    %2 = vector.broadcast %cst_2 : f32 to vector<2x128xf32>
    %3 = arith.divf %1, %2 : vector<2x128xf32>
    %c0_3 = arith.constant 0 : index
    %c0_4 = arith.constant 0 : index
    %4 = vector.load %arg1[%c0_3, %c0_4] : memref<1x1xf32, #tpu.memory_space<vmem>>, vector<1x1xf32>
    %5 = vector.extract %4[0, 0] : f32 from vector<1x1xf32>
    %cst_5 = arith.constant 9.99999997E-7 : f32
    %6 = vector.broadcast %cst_5 : f32 to vector<2x128xf32>
    %7 = arith.maximumf %3, %6 : vector<2x128xf32>
    %8 = math.log %7 : vector<2x128xf32>
    %9 = vector.broadcast %5 : f32 to vector<2x128xf32>
    %10 = arith.mulf %8, %9 : vector<2x128xf32>
    %11 = math.exp %10 : vector<2x128xf32>
    %12 = math.log %11 : vector<2x128xf32>
    %cst_6 = arith.constant 1.000000e+00 : f32
    %13 = arith.divf %cst_6, %5 : f32
    %14 = vector.broadcast %13 : f32 to vector<2x128xf32>
    %15 = arith.mulf %12, %14 : vector<2x128xf32>
    %16 = math.exp %15 : vector<2x128xf32>
    %c0_7 = arith.constant 0 : index
    %c0_8 = arith.constant 0 : index
    %17 = vector.load %arg2[%c0_7, %c0_8] : memref<128x1xf32, #tpu.memory_space<vmem>>, vector<128x1xf32>
    %cst_9 = arith.constant dense<0.000000e+00> : vector<2x1xf32>
    %18 = tpu.matmul %16, %17, %cst_9 {dimension_numbers = #tpu.dot_dimension_numbers<[1], [0], [0], [1], [0, 0, 1, 1], [], []>} : vector<2x128xf32>, vector<128x1xf32>, vector<2x1xf32> -> vector<2x1xf32>
    %c0_10 = arith.constant 0 : index
    %c0_11 = arith.constant 0 : index
    %19 = vector.load %arg3[%c0_10, %c0_11] : memref<1x1xf32, #tpu.memory_space<vmem>>, vector<1x1xf32>
    %20 = vector.broadcast %19 : vector<1x1xf32> to vector<2x1xf32>
    %21 = arith.addf %18, %20 : vector<2x1xf32>
    %22 = arith.negf %21 : vector<2x1xf32>
    %23 = math.exp %22 : vector<2x1xf32>
    %cst_12 = arith.constant 1.000000e+00 : f32
    %24 = vector.broadcast %cst_12 : f32 to vector<2x1xf32>
    %25 = arith.addf %24, %23 : vector<2x1xf32>
    %26 = arith.divf %24, %25 : vector<2x1xf32>
    %c0_13 = arith.constant 0 : index
    %c0_14 = arith.constant 0 : index
    %27 = vector.load %arg4[%c0_13, %c0_14] : memref<2x1xf32, #tpu.memory_space<vmem>>, vector<2x1xf32>
    tpu.vector_store %arg4[%c0_13, %c0_14], %26 {strides = array<i32>} : memref<2x1xf32, #tpu.memory_space<vmem>>, vector<2x1xf32>,
    return
  }
}

</mosaic_0001>

<llo_original>
// kernel: isic_dino_forward.3
$region0: #{isic_dino_forward.3}
  #allocation0 [shape = 'u32[]', space=smem, size = 0x4, offset = 0x4, fixed_abs, tag = 'smem constant byte address 0x4 - core index']
  #allocation1 [shape = 'u32[72,128]{1,0:T(1,128)}', space=vmem, size = 0x9000, scoped, tag = 'internal scratch']
  %s0 = inlined_call_operand.vmem [shape: f32[32,192], index: 0, kind: input, shape index: {}]
  %s1 = inlined_call_operand.vmem [shape: f32[1,192], index: 1, kind: input, shape index: {}]
  %s2 = inlined_call_operand.vmem [shape: f32[1,192], index: 2, kind: input, shape index: {}]
  %s3 = inlined_call_operand.vmem [shape: bf16[192,128], index: 3, kind: input, shape index: {}]
  %s4 = inlined_call_operand.vmem [shape: f32[1,128], index: 4, kind: input, shape index: {}]
  %s5 = inlined_call_operand.vmem [shape: f32[1,128], index: 5, kind: input, shape index: {}]
  %s6 = inlined_call_operand.vmem [shape: f32[24,128], index: 6, kind: input, shape index: {}]
  %s7 = inlined_call_operand.vmem [shape: f32[2,24,128], index: 7, kind: output, shape index: {}]
  %s8 = sld [smem:[#allocation0]]
  $region38: #{isic_dino_forward.3} parent=0
    _
  %s10 = ssub.s32 1, %s8
  %s11 = scalar_select 0, %s10, %s8
  // Predicated region
  $region2: #{isic_dino_forward.3} parent=0 // pred_check
    _
  $region3: #{isic_dino_forward.3} parent=0 // pred_check_branch
    %13 = sbr.rel (0) target = $region5
  $region4: #{isic_dino_forward.3} parent=0 // pred_region
    _
  $region5: #{isic_dino_forward.3} parent=0 // pred_fallthru
    _
  // Predicated region
  $region6: #{isic_dino_forward.3} parent=0 // pred_check
    _
  $region7: #{isic_dino_forward.3} parent=0 // pred_check_branch
    %15 = sbr.rel (0) target = $region9
  $region8: #{isic_dino_forward.3} parent=0 // pred_region
    _
  $region9: #{isic_dino_forward.3} parent=0 // pred_fallthru
    _
  // Predicated region
  $region10: #{isic_dino_forward.3} parent=0 // pred_check
    _
  $region11: #{isic_dino_forward.3} parent=0 // pred_check_branch
    %17 = sbr.rel (0) target = $region13
  $region12: #{isic_dino_forward.3} parent=0 // pred_region
    _
  $region13: #{isic_dino_forward.3} parent=0 // pred_fallthru
    _
  // Predicated region
  $region14: #{isic_dino_forward.3} parent=0 // pred_check
    _
  $region15: #{isic_dino_forward.3} parent=0 // pred_check_branch
    %19 = sbr.rel (0) target = $region17
  $region16: #{isic_dino_forward.3} parent=0 // pred_region
    _
  $region17: #{isic_dino_forward.3} parent=0 // pred_fallthru
    _
  // Predicated region
  $region18: #{isic_dino_forward.3} parent=0 // pred_check
    _
  $region19: #{isic_dino_forward.3} parent=0 // pred_check_branch
    %21 = sbr.rel (0) target = $region21
  $region20: #{isic_dino_forward.3} parent=0 // pred_region
    _
  $region21: #{isic_dino_forward.3} parent=0 // pred_fallthru
    _
  // Predicated region
  $region22: #{isic_dino_forward.3} parent=0 // pred_check
    _
  $region23: #{isic_dino_forward.3} parent=0 // pred_check_branch
    %23 = sbr.rel (0) target = $region25
  $region24: #{isic_dino_forward.3} parent=0 // pred_region
    _
  $region25: #{isic_dino_forward.3} parent=0 // pred_fallthru
    _
  // Predicated region
  $region26: #{isic_dino_forward.3} parent=0 // pred_check
    _
  $region27: #{isic_dino_forward.3} parent=0 // pred_check_branch
    %25 = sbr.rel (0) target = $region29
  $region28: #{isic_dino_forward.3} parent=0 // pred_region
    _
  $region29: #{isic_dino_forward.3} parent=0 // pred_fallthru
    _
  %v27 = vld [vmem:[%s0] sm:$0xff]
  %v28 = vld [vmem:[%s0 + $0x8] sm:$0xff]
  %v29 = vld [vmem:[%s0 + $0x10] sm:$0xff]
  %v30 = vld [vmem:[%s0 + $0x18] sm:$0xff]
  %v31 = vld [vmem:[%s0 + $0x20] sm:$0xff]
  %v32 = vld [vmem:[%s0 + $0x28] sm:$0xff]
  %v33 = vld [vmem:[%s0 + $0x30] sm:$0xff]
  %v34 = vld [vmem:[%s0 + $0x38] sm:$0xff]
  %vm35 = vcmask 523264
  %v36 = vsel %vm35, %v28, inf
  %v37 = vsel %vm35, %v30, inf
  %v38 = vmin.f32 %v27, %v31
  %v39 = vsel %vm35, %v32, inf
  %v40 = vmin.f32 %v36, %v39
  %v41 = vmin.f32 %v29, %v33
  %v42 = vsel %vm35, %v34, inf
  %v43 = vmin.f32 %v37, %v42
  %v44 = vmin.f32 %v38, %v40
  %v45 = vmin.f32 %v41, %v43
  %v46 = vmin.f32 %v44, %v45
  %47 = vmin.xlane.f32.xlu0 %v46
  %v48 = vpop.xlane.xlu0 %47
  %v49 = vrot.slane %v48, 4
  %v50 = vmin.f32 %v48, %v49
  %v51 = vrot.slane %v50, 2
  %v52 = vmin.f32 %v50, %v51
  %v53 = vrot.slane %v52, 1
  %v54 = vmin.f32 %v52, %v53
  %s55 = vtos %v54
  %v56 = vsel %vm35, %v28, -inf
  %v57 = vsel %vm35, %v30, -inf
  %v58 = vmax.f32 %v27, %v31
  %v59 = vsel %vm35, %v32, -inf
  %v60 = vmax.f32 %v56, %v59
  %v61 = vmax.f32 %v29, %v33
  %v62 = vsel %vm35, %v34, -inf
  %v63 = vmax.f32 %v57, %v62
  %v64 = vmax.f32 %v58, %v60
  %v65 = vmax.f32 %v61, %v63
  %v66 = vmax.f32 %v64, %v65
  %67 = vmax.xlane.f32.xlu0 %v66
  %v68 = vpop.xlane.xlu0 %67
  %v69 = vrot.slane %v68, 4
  %v70 = vmax.f32 %v68, %v69
  %v71 = vrot.slane %v70, 2
  %v72 = vmax.f32 %v70, %v71
  %v73 = vrot.slane %v72, 1
  %v74 = vmax.f32 %v72, %v73
  %s75 = vtos %v74
  %s76 = ssub.f32 %s75, %s55
  %s77 = smax.f32 %s76, 1e-12
  %v78 = vstv %s77
  %v79 = vrcp.pop %v78
  %v80 = vmul.f32 %v78, %v79
  %v81 = vsub.f32 1.0, %v80
  %v82 = vmul.f32 %v79, %v81
  %v83 = vadd.f32 %v79, %v82
  %vm84 = vweird.f32 %v78
  %vm85 = vweird.f32 %v79
  %vm86 = vmor %vm84, %vm85
  %v87 = vsel %vm86, %v79, %v83
  %v88 = vand.u32 2147483647, %v78
  %vm89 = vcmp.eq.f32.partialorder %v88, 8.507059e+37
  %v90 = vand.u32 %v78, 2147483648
  %v91 = vor.u32 1.1754944e-38, %v90
  %v92 = vsel %vm89, %v91, %v87
  %s93 = vtos %v92
  %v94 = vstv %s55
  %v95 = vsub.f32 %v27, %v94
  %v96 = vsub.f32 %v28, %v94
  %v97 = vsub.f32 %v29, %v94
  %v98 = vsub.f32 %v30, %v94
  %v99 = vsub.f32 %v31, %v94
  %v100 = vsub.f32 %v32, %v94
  %v101 = vsub.f32 %v33, %v94
  %v102 = vsub.f32 %v34, %v94
  %v103 = vstv %s93
  %v104 = vmul.f32 %v95, %v103
  %v105 = vmul.f32 %v96, %v103
  %v106 = vmul.f32 %v97, %v103
  %v107 = vmul.f32 %v98, %v103
  %v108 = vmul.f32 %v99, %v103
  %v109 = vmul.f32 %v100, %v103
  %v110 = vmul.f32 %v101, %v103
  %v111 = vmul.f32 %v102, %v103
  %v112 = vld [vmem:[%s1] sm:$0x3]
  %v114 = vperm.slane %v112, 0
  %v115 = vperm.slane %v112, 1
  %v118 = vsub.f32 %v104, %v114
  %v119 = vsub.f32 %v105, %v115
  %v120 = vsub.f32 %v106, %v114
  %v121 = vsub.f32 %v107, %v115
  %v122 = vsub.f32 %v108, %v114
  %v123 = vsub.f32 %v109, %v115
  %v124 = vsub.f32 %v110, %v114
  %v125 = vsub.f32 %v111, %v115
  %v126 = vld [vmem:[%s2] sm:$0x3]
  %v128 = vperm.slane %v126, 0
  %v129 = vperm.slane %v126, 1
  %v132 = vmul.f32 %v118, %v128
  %v133 = vmul.f32 %v119, %v129
  %v134 = vmul.f32 %v120, %v128
  %v135 = vmul.f32 %v121, %v129
  %v136 = vmul.f32 %v122, %v128
  %v137 = vmul.f32 %v123, %v129
  %v138 = vmul.f32 %v124, %v128
  %v139 = vmul.f32 %v125, %v129
  %v140 = vpack.c.bf16 %v134, %v132
  %v141 = vpack.c.bf16 %v135, %v133
  %v142 = vpack.c.bf16 %v138, %v136
  %v143 = vpack.c.bf16 %v139, %v137
  %v144 = vld [vmem:[%s3] sm:$0xf]
  %v145 = vld [vmem:[%s3 + $0x4] sm:$0xf]
  %v146 = vld [vmem:[%s3 + $0x8] sm:$0xf]
  %v147 = vld [vmem:[%s3 + $0xc] sm:$0xf]
  %v148 = vld [vmem:[%s3 + $0x10] sm:$0xf]
  %v149 = vld [vmem:[%s3 + $0x14] sm:$0xf]
  %v150 = vld [vmem:[%s3 + $0x18] sm:$0xf]
  %v151 = vld [vmem:[%s3 + $0x1c] sm:$0xf]
  %v152 = vld [vmem:[%s3 + $0x20] sm:$0xf]
  %v153 = vld [vmem:[%s3 + $0x24] sm:$0xf]
  %v154 = vld [vmem:[%s3 + $0x28] sm:$0xf]
  %v155 = vld [vmem:[%s3 + $0x2c] sm:$0xf]
  %v156 = vld [vmem:[%s3 + $0x30] sm:$0xf]
  %v157 = vld [vmem:[%s3 + $0x34] sm:$0xf]
  %v158 = vld [vmem:[%s3 + $0x38] sm:$0xf]
  %v159 = vld [vmem:[%s3 + $0x3c] sm:$0xf]
  %v160 = vld [vmem:[%s3 + $0x40] sm:$0xf]
  %v161 = vld [vmem:[%s3 + $0x44] sm:$0xf]
  %v162 = vld [vmem:[%s3 + $0x48] sm:$0xf]
  %v163 = vld [vmem:[%s3 + $0x4c] sm:$0xf]
  %v164 = vld [vmem:[%s3 + $0x50] sm:$0xf]
  %v165 = vld [vmem:[%s3 + $0x54] sm:$0xf]
  %v166 = vld [vmem:[%s3 + $0x58] sm:$0xf]
  %v167 = vld [vmem:[%s3 + $0x5c] sm:$0xf]
  %v168 = vld [vmem:[%s4] sm:$0x1]
  %v170 = vperm.slane %v168, 0
  %v196 = vunpack.c.l.b16 %v144
  %v197 = vunpack.c.l.b16 %v145
  %v198 = vunpack.c.l.b16 %v146
  %v199 = vunpack.c.l.b16 %v147
  %v200 = vunpack.c.l.b16 %v148
  %v201 = vunpack.c.l.b16 %v149
  %v202 = vunpack.c.l.b16 %v150
  %v203 = vunpack.c.l.b16 %v151
  %v204 = vunpack.c.l.b16 %v152
  %v205 = vunpack.c.l.b16 %v153
  %v206 = vunpack.c.l.b16 %v154
  %v207 = vunpack.c.l.b16 %v155
  %v208 = vunpack.c.l.b16 %v156
  %v209 = vunpack.c.l.b16 %v157
  %v210 = vunpack.c.l.b16 %v158
  %v211 = vunpack.c.l.b16 %v159
  %v212 = vunpack.c.l.b16 %v160
  %v213 = vunpack.c.l.b16 %v161
  %v214 = vunpack.c.l.b16 %v162
  %v215 = vunpack.c.l.b16 %v163
  %v216 = vunpack.c.l.b16 %v164
  %v217 = vunpack.c.l.b16 %v165
  %v218 = vunpack.c.l.b16 %v166
  %v219 = vunpack.c.l.b16 %v167
  %v220 = vpack.c.b16 %v197, %v196
  %v221 = vpack.c.b16 %v199, %v198
  %v222 = vpack.c.b16 %v201, %v200
  %v223 = vpack.c.b16 %v203, %v202
  %v224 = vpack.c.b16 %v205, %v204
  %v225 = vpack.c.b16 %v207, %v206
  %v226 = vpack.c.b16 %v209, %v208
  %v227 = vpack.c.b16 %v211, %v210
  %v228 = vpack.c.b16 %v213, %v212
  %v229 = vpack.c.b16 %v215, %v214
  %v230 = vpack.c.b16 %v217, %v216
  %v231 = vpack.c.b16 %v219, %v218
  %v245 = vsel %vm35, %v141, 0
  %v248 = vsel %vm35, %v143, 0
  %250 = vmatpush.bf16.msra.mxu0 %v227
  %251 = vmatpush.bf16.msra.mxu0 %v226
  %252 = vmatpush.bf16.msra.mxu0 %v225
  %253 = vmatpush.bf16.msra.mxu0 %v224
  %254 = vmatpush.bf16.msra.mxu0 %v223
  %255 = vmatpush.bf16.msra.mxu0 %v222
  %256 = vmatpush.bf16.msra.mxu0 %v221
  %257 = vmatpush.bf16.msra.mxu0 %v220
  %258 = vmatmul.bf16.gmra.mxu0 %v140
  %v259 = vpop.f32.mrf.mxu0
  %v260 = vadd.f32 %v170, %v259
  %v261 = vpop.f32.mrf.mxu0
  %v262 = vadd.f32 %v170, %v261
  %263 = vmatmul.bf16.gmra.mxu0 %v142
  %v264 = vpop.f32.mrf.mxu0
  %v265 = vadd.f32 %v170, %v264
  %v266 = vpop.f32.mrf.mxu0
  %v267 = vadd.f32 %v170, %v266
  %268 = vdwg.mxu0
  %269 = vmatpush.bf16.msra.mxu0 0
  %270 = vmatpush.bf16.msra.mxu0 0
  %271 = vmatpush.bf16.msra.mxu0 0
  %272 = vmatpush.bf16.msra.mxu0 0
  %273 = vmatpush.bf16.msra.mxu0 %v231
  %274 = vmatpush.bf16.msra.mxu0 %v230
  %275 = vmatpush.bf16.msra.mxu0 %v229
  %276 = vmatpush.bf16.msra.mxu0 %v228
  %277 = vmatmul.bf16.gmra.mxu0 %v245
  %v278 = vpop.f32.mrf.mxu0
  %v279 = vadd.f32 %v260, %v278
  %v280 = vpop.f32.mrf.mxu0
  %v281 = vadd.f32 %v262, %v280
  %282 = vmatmul.bf16.gmra.mxu0 %v248
  %v283 = vpop.f32.mrf.mxu0
  %v284 = vadd.f32 %v265, %v283
  %v285 = vpop.f32.mrf.mxu0
  %v286 = vadd.f32 %v267, %v285
  %287 = vdwg.mxu0
  %v288 = vld [vmem:[%s6] sm:$0xff]
  %v289 = vld [vmem:[%s6 + $0x8] sm:$0xff]
  %v290 = vld [vmem:[%s6 + $0x10] sm:$0xff]
  %v291 = vld [vmem:[%s5] sm:$0x1]
  %vm295 = vcmask 1046528
  %v296 = vrot.slane %v288, 1
  %v297 = vrot.slane %v289, 1
  %v298 = vsel %vm295, %v296, %v297
  %v299 = vrot.slane %v290, 1
  %v300 = vsel %vm295, %v297, %v299
  %v303 = vadd.f32 %v279, %v298
  %v304 = vadd.f32 %v281, %v300
  %v305 = vadd.f32 %v284, %v298
  %v306 = vadd.f32 %v286, %v300
  %307 = vst [vmem:[%s7 + $0x1] sm:$0xff] %v303
  %308 = vst [vmem:[%s7 + $0x9] sm:$0xff] %v304
  %309 = vst [vmem:[%s7 + $0x19] sm:$0xff] %v305
  %310 = vst [vmem:[%s7 + $0x21] sm:$0xff] %v306
  %v311 = vadd.f32 %v291, %v288
  %312 = vst [vmem:[%s7] sm:$0x1] %v311
  %313 = vst [vmem:[%s7 + $0x18] sm:$0x1] %v311
  %314 = vst [vmem:[%s7 + $0x11] sm:$0x7f] 0.0
  %315 = vst [vmem:[%s7 + $0x29] sm:$0x7f] 0.0
  // Predicated region
  $region30: #{isic_dino_forward.3} parent=0 // pred_check
    _
  $region31: #{isic_dino_forward.3} parent=0 // pred_check_branch
    %317 = sbr.rel (0) target = $region33
  $region32: #{isic_dino_forward.3} parent=0 // pred_region
    _
  $region33: #{isic_dino_forward.3} parent=0 // pred_fallthru
    _
  // Predicated region
  $region34: #{isic_dino_forward.3} parent=0 // pred_check
    _
  $region35: #{isic_dino_forward.3} parent=0 // pred_check_branch
    %319 = sbr.rel (0) target = $region37
  $region36: #{isic_dino_forward.3} parent=0 // pred_region
    _
  $region37: #{isic_dino_forward.3} parent=0 // pred_fallthru
    _

// kernel: isic_dino_forward.5
$region0: #{isic_dino_forward.5}
  #allocation0 [shape = 'u32[]', space=smem, size = 0x4, offset = 0x4, fixed_abs, tag = 'smem constant byte address 0x4 - core index']
  #allocation1 [shape = 'u32[72,128]{1,0:T(1,128)}', space=vmem, size = 0x9000, scoped, tag = 'internal scratch']
  #allocation2 [shape = 'f32[1,1]{1,0:T(1,128)S(1)}', space=vmem, size = 0x200, scoped, tag = 'scoped memory for isic_dino_forward.5']
  #allocation3 [shape = 'f32[1,1]{1,0:T(1,128)S(1)}', space=vmem, size = 0x200, scoped, tag = 'scoped memory for isic_dino_forward.5']
  %s0 = inlined_call_operand.vmem [shape: f32[2,1,128], index: 0, kind: input, shape index: {}]
  %s1 = inlined_call_operand.<no memory space> [shape: f32[1,1], index: 1, kind: input, shape index: {}]
  %s2 = inlined_call_operand.vmem [shape: f32[128,1], index: 2, kind: input, shape index: {}]
  %s3 = inlined_call_operand.<no memory space> [shape: f32[1,1], index: 3, kind: input, shape index: {}]
  %s4 = inlined_call_operand.vmem [shape: f32[2,1], index: 4, kind: output, shape index: {}]
  %s5 = sld [smem:[#allocation0]]
  $region26: #{isic_dino_forward.5} parent=0
    _
  %s7 = ssub.s32 1, %s5
  %s8 = scalar_select 0, %s7, %s5
  %v9 = vstv %s1
  %10 = vst [vmem:[#allocation2] sm:$0x1] %v9
  %v11 = vstv %s3
  %12 = vst [vmem:[#allocation3] sm:$0x1] %v11
  // Predicated region
  $region2: #{isic_dino_forward.5} parent=0 // pred_check
    _
  $region3: #{isic_dino_forward.5} parent=0 // pred_check_branch
    %14 = sbr.rel (0) target = $region5
  $region4: #{isic_dino_forward.5} parent=0 // pred_region
    _
  $region5: #{isic_dino_forward.5} parent=0 // pred_fallthru
    _
  // Predicated region
  $region6: #{isic_dino_forward.5} parent=0 // pred_check
    _
  $region7: #{isic_dino_forward.5} parent=0 // pred_check_branch
    %16 = sbr.rel (0) target = $region9
  $region8: #{isic_dino_forward.5} parent=0 // pred_region
    _
  $region9: #{isic_dino_forward.5} parent=0 // pred_fallthru
    _
  // Predicated region
  $region10: #{isic_dino_forward.5} parent=0 // pred_check
    _
  $region11: #{isic_dino_forward.5} parent=0 // pred_check_branch
    %18 = sbr.rel (0) target = $region13
  $region12: #{isic_dino_forward.5} parent=0 // pred_region
    _
  $region13: #{isic_dino_forward.5} parent=0 // pred_fallthru
    _
  // Predicated region
  $region14: #{isic_dino_forward.5} parent=0 // pred_check
    _
  $region15: #{isic_dino_forward.5} parent=0 // pred_check_branch
    %20 = sbr.rel (0) target = $region17
  $region16: #{isic_dino_forward.5} parent=0 // pred_region
    _
  $region17: #{isic_dino_forward.5} parent=0 // pred_fallthru
    _
  %v21 = vld [vmem:[%s0] sm:$0x1]
  %v22 = vld [vmem:[%s0 + $0x1] sm:$0x1]
  %v23 = vadd.f32 %v21, 0.0
  %v24 = vadd.f32 %v22, 0.0
  %v25 = vld [vmem:[#allocation2] sm:$0x1]
  %s26 = vtos %v25
  %v27 = vmax.f32 %v23, 1e-06
  %v28 = vmax.f32 %v24, 1e-06
  %v29 = vlog2.pop %v27
  %v30 = vmul.f32 %v29, 0.6931472
  %v31 = vlog2.pop %v28
  %v32 = vmul.f32 %v31, 0.6931472
  %v33 = vstv %s26
  %v34 = vmul.f32 %v30, %v33
  %v35 = vmul.f32 %v32, %v33
  %v36 = vmul.f32 %v34, 1.442695
  %v37 = vpow.pop %v36
  %v38 = vmul.f32 %v35, 1.442695
  %v39 = vpow.pop %v38
  %v40 = vlog2.pop %v37
  %v41 = vmul.f32 %v40, 0.6931472
  %v42 = vlog2.pop %v39
  %v43 = vmul.f32 %v42, 0.6931472
  %v44 = vstv %s26
  %v45 = vrcp.pop %v44
  %v46 = vmul.f32 %v44, %v45
  %v47 = vsub.f32 1.0, %v46
  %v48 = vmul.f32 %v45, %v47
  %v49 = vadd.f32 %v45, %v48
  %vm50 = vweird.f32 %v44
  %vm51 = vweird.f32 %v45
  %vm52 = vmor %vm50, %vm51
  %v53 = vsel %vm52, %v45, %v49
  %v54 = vand.u32 2147483647, %v44
  %vm55 = vcmp.eq.f32.partialorder %v54, 8.507059e+37
  %v56 = vand.u32 %v44, 2147483648
  %v57 = vor.u32 1.1754944e-38, %v56
  %v58 = vsel %vm55, %v57, %v53
  %s59 = vtos %v58
  %v60 = vstv %s59
  %v61 = vmul.f32 %v41, %v60
  %v62 = vmul.f32 %v43, %v60
  %v63 = vmul.f32 %v61, 1.442695
  %v64 = vpow.pop %v63
  %v65 = vmul.f32 %v62, 1.442695
  %v66 = vpow.pop %v65
  %v67 = vld [vmem:[%s2] sm:$0xff]
  %v68 = vld [vmem:[%s2 + $0x8] sm:$0xff]
  %v69 = vld [vmem:[%s2 + $0x10] sm:$0xff]
  %v70 = vld [vmem:[%s2 + $0x18] sm:$0xff]
  %v71 = vld [vmem:[%s2 + $0x20] sm:$0xff]
  %v72 = vld [vmem:[%s2 + $0x28] sm:$0xff]
  %v73 = vld [vmem:[%s2 + $0x30] sm:$0xff]
  %v74 = vld [vmem:[%s2 + $0x38] sm:$0xff]
  %v75 = vld [vmem:[%s2 + $0x40] sm:$0xff]
  %v76 = vld [vmem:[%s2 + $0x48] sm:$0xff]
  %v77 = vld [vmem:[%s2 + $0x50] sm:$0xff]
  %v78 = vld [vmem:[%s2 + $0x58] sm:$0xff]
  %v79 = vld [vmem:[%s2 + $0x60] sm:$0xff]
  %v80 = vld [vmem:[%s2 + $0x68] sm:$0xff]
  %v81 = vld [vmem:[%s2 + $0x70] sm:$0xff]
  %v82 = vld [vmem:[%s2 + $0x78] sm:$0xff]
  %v83 = vld [vmem:[#allocation3] sm:$0x1]
  %v85 = vperm.slane %v83, 0
  %89 = vst [vmem:[#allocation1] ss:$9 sm:$0xff] %v64
  %s90 = scalar_lea.vmem [#allocation1], 1
  %91 = vst [vmem:[%s90] ss:$9 sm:$0xff] %v66
  %v92 = vld [vmem:[#allocation1] sm:$0xff]
  %94 = vmatpush.msra.mxu0 %v82
  %95 = vmatpush.msra.mxu0 %v81
  %96 = vmatpush.msra.mxu0 %v80
  %97 = vmatpush.msra.mxu0 %v79
  %98 = vmatpush.msra.mxu0 %v78
  %99 = vmatpush.msra.mxu0 %v77
  %100 = vmatpush.msra.mxu0 %v76
  %101 = vmatpush.msra.mxu0 %v75
  %102 = vmatpush.msra.mxu0 %v74
  %103 = vmatpush.msra.mxu0 %v73
  %104 = vmatpush.msra.mxu0 %v72
  %105 = vmatpush.msra.mxu0 %v71
  %106 = vmatpush.msra.mxu0 %v70
  %107 = vmatpush.msra.mxu0 %v69
  %108 = vmatpush.msra.mxu0 %v68
  %109 = vmatpush.msra.mxu0 %v67
  %110 = vmatmul.f32.gmra.mxu0 %v92
  %v111 = vpop.f32.mrf.mxu0
  %v112 = vadd.f32 %v85, %v111
  %113 = vdwg.mxu0
  %v114 = vxor.u32 %v112, 2147483648
  %v115 = vmul.f32 %v114, 1.442695
  %v116 = vpow.pop %v115
  %v117 = vadd.f32 %v116, 1.0
  %v118 = vrcp.pop %v117
  %v119 = vmul.f32 %v117, %v118
  %v120 = vsub.f32 1.0, %v119
  %v121 = vmul.f32 %v118, %v120
  %v122 = vadd.f32 %v118, %v121
  %vm123 = vweird.f32 %v117
  %vm124 = vweird.f32 %v118
  %vm125 = vmor %vm123, %vm124
  %v126 = vsel %vm125, %v118, %v122
  %v127 = vand.u32 2147483647, %v117
  %vm128 = vcmp.eq.f32.partialorder %v127, 8.507059e+37
  %v129 = vand.u32 %v117, 2147483648
  %v130 = vor.u32 1.1754944e-38, %v129
  %v131 = vsel %vm128, %v130, %v126
  %v132 = vmul.f32 1.0, %v131
  %vm133 = vcmask 1024
  %134 = vst.msk [vmem:[%s4] sm:$0x3] %vm133, %v132
  // Predicated region
  $region18: #{isic_dino_forward.5} parent=0 // pred_check
    _
  $region19: #{isic_dino_forward.5} parent=0 // pred_check_branch
    %136 = sbr.rel (0) target = $region21
  $region20: #{isic_dino_forward.5} parent=0 // pred_region
    _
  $region21: #{isic_dino_forward.5} parent=0 // pred_fallthru
    _
  // Predicated region
  $region22: #{isic_dino_forward.5} parent=0 // pred_check
    _
  $region23: #{isic_dino_forward.5} parent=0 // pred_check_branch
    %138 = sbr.rel (0) target = $region25
  $region24: #{isic_dino_forward.5} parent=0 // pred_region
    _
  $region25: #{isic_dino_forward.5} parent=0 // pred_fallthru
    _

// kernel: isic_dino_forward.4
$region0: #{isic_dino_forward.4}
  #allocation0 [shape = 'u32[]', space=smem, size = 0x4, offset = 0x4, fixed_abs, tag = 'smem constant byte address 0x4 - core index']
  #allocation1 [shape = 'u32[72,128]{1,0:T(1,128)}', space=vmem, size = 0x9000, scoped, tag = 'internal scratch']
  %s0 = inlined_call_operand.vmem [shape: f32[2,24,128], index: 0, kind: input, shape index: {}]
  %s1 = inlined_call_operand.vmem [shape: f32[2,1,128], index: 1, kind: input, shape index: {}]
  %s2 = inlined_call_operand.vmem [shape: f32[2,1,128], index: 2, kind: input, shape index: {}]
  %s3 = inlined_call_operand.vmem [shape: bf16[2,128,384], index: 3, kind: input, shape index: {}]
  %s4 = inlined_call_operand.vmem [shape: f32[2,1,384], index: 4, kind: input, shape index: {}]
  %s5 = inlined_call_operand.vmem [shape: bf16[2,128,128], index: 5, kind: input, shape index: {}]
  %s6 = inlined_call_operand.vmem [shape: f32[2,1,128], index: 6, kind: input, shape index: {}]
  %s7 = inlined_call_operand.vmem [shape: f32[2,1,128], index: 7, kind: input, shape index: {}]
  %s8 = inlined_call_operand.vmem [shape: f32[2,1,128], index: 8, kind: input, shape index: {}]
  %s9 = inlined_call_operand.vmem [shape: bf16[2,128,256], index: 9, kind: input, shape index: {}]
  %s10 = inlined_call_operand.vmem [shape: f32[2,1,256], index: 10, kind: input, shape index: {}]
  %s11 = inlined_call_operand.vmem [shape: bf16[2,256,128], index: 11, kind: input, shape index: {}]
  %s12 = inlined_call_operand.vmem [shape: f32[2,1,128], index: 12, kind: input, shape index: {}]
  %s13 = inlined_call_operand.vmem [shape: f32[1,1,128], index: 13, kind: input, shape index: {}]
  %s14 = inlined_call_operand.vmem [shape: f32[1,1,128], index: 14, kind: input, shape index: {}]
  %s15 = inlined_call_operand.vmem [shape: f32[2,1,128], index: 15, kind: output, shape index: {}]
  %s16 = sld [smem:[#allocation0]]
  $region93: #{isic_dino_forward.4} parent=0
    _
  %s18 = ssub.s32 1, %s16
  %s19 = scalar_select 0, %s18, %s16
  loop: start=0, step=1, limit=4
  $region2: #{isic_dino_forward.4} parent=0 // loop_pre_header
    _
  $region3: #{isic_dino_forward.4} parent=0 // loop_header
    %s21 = sphi 0, %s25
    %p22 = scmp.ge.s32.totalorder %s21, 4
    %s31 = sphi 0, %s33
    %s34 = sphi 0, %s31
    %s35 = sphi 0, %s34
    %s51 = sphi 0, %s35
    %s55 = sphi 0, %s55
    %s57 = sphi 0, %s55
    %s58 = sphi 0, %s57
    %s72 = sphi 0, %s58
    %s76 = sphi 0, %s76
    %s78 = sphi 0, %s76
    %s79 = sphi 0, %s78
    %s93 = sphi 0, %s79
    %s97 = sphi 0, %s97
    %s99 = sphi 0, %s97
    %s100 = sphi 0, %s99
    %s114 = sphi 0, %s100
    %s118 = sphi 0, %s118
    %s120 = sphi 0, %s118
    %s121 = sphi 0, %s120
    %s135 = sphi 0, %s121
    %s139 = sphi 0, %s139
    %s141 = sphi 0, %s139
    %s142 = sphi 0, %s141
    %s156 = sphi 0, %s142
    %s160 = sphi 0, %s160
    %s162 = sphi 0, %s160
    %s163 = sphi 0, %s162
    %s177 = sphi 0, %s163
    %s181 = sphi 0, %s181
    %s183 = sphi 0, %s181
    %s184 = sphi 0, %s183
    %s198 = sphi 0, %s184
    %s202 = sphi 0, %s202
    %s204 = sphi 0, %s202
    %s205 = sphi 0, %s204
    %s219 = sphi 0, %s205
    %s223 = sphi 0, %s223
    %s225 = sphi 0, %s223
    %s226 = sphi 0, %s225
    %s240 = sphi 0, %s226
    %s244 = sphi 0, %s244
    %s246 = sphi 0, %s244
    %s247 = sphi 0, %s246
    %s261 = sphi 0, %s247
    %s265 = sphi 0, %s265
    %s267 = sphi 0, %s265
    %s268 = sphi 0, %s267
    %s282 = sphi 0, %s268
    %s286 = sphi 0, %s286
    %s288 = sphi 0, %s286
    %s289 = sphi 0, %s288
    %s303 = sphi 0, %s289
    %s307 = sphi 0, %s307
    %s309 = sphi 0, %s307
    %s310 = sphi 0, %s309
    %s324 = sphi 0, %s310
    %s328 = sphi 0, %s328
    %s330 = sphi 0, %s328
    %s331 = sphi 0, %s330
    %s345 = sphi 0, %s331
    %s351 = sphi 0, %s353
    %s354 = sphi 0, %s351
    %s355 = sphi 0, %s354
    %s371 = sphi 0, %s355
  $region4: #{isic_dino_forward.4} parent=0 // loop_header_branch
    %24 = sbr.rel (%p22) target = $region8
  $region5: #{isic_dino_forward.4} parent=0 // loop_body
    %s26 = ssub.s32 %s21, 1
    %s27 = ssub.s32 %s21, 2
    %s28 = sadd.s32 %s21, 1
    %s29 = ssub.s32 %s21, %s28
    %p30 = scmp.eq.s32.totalorder %s29, 0
    %s32 = sadd.s32 %s31, 1
    %s33 = scalar_select %p30, %s31, %s32
    %p36 = pneg %p30
    %p37 = scmp.eq.s32.totalorder %s21, 1
    %p38 = por %p36, %p37
    %p39 = scmp.ne.s32.totalorder %s31, %s34
    %p40 = scmp.eq.s32.totalorder %s21, 0
    %p41 = por %p39, %p40
    %p42 = scmp.ne.s32.totalorder %s31, %s34
    %p43 = scmp.eq.s32.totalorder %s26, 1
    %p44 = por %p42, %p43
    %p45 = scmp.ne.s32.totalorder %s34, %s35
    %p46 = scmp.eq.s32.totalorder %s26, 0
    %p47 = por %p45, %p46
    %p48 = scmp.ne.s32.totalorder %s34, %s35
    %p49 = scmp.eq.s32.totalorder %s27, 1
    %p50 = por %p48, %p49
    %p52 = scmp.ne.s32.totalorder %s35, %s51
    %p53 = scmp.eq.s32.totalorder %s27, 0
    %p54 = por %p52, %p53
    %s56 = sadd.s32 %s55, 1
    %p59 = scmp.eq.s32.totalorder %s21, 1
    %p60 = scmp.ne.s32.totalorder %s55, %s57
    %p61 = scmp.eq.s32.totalorder %s21, 0
    %p62 = por %p60, %p61
    %p63 = scmp.ne.s32.totalorder %s55, %s57
    %p64 = scmp.eq.s32.totalorder %s26, 1
    %p65 = por %p63, %p64
    %p66 = scmp.ne.s32.totalorder %s57, %s58
    %p67 = scmp.eq.s32.totalorder %s26, 0
    %p68 = por %p66, %p67
    %p69 = scmp.ne.s32.totalorder %s57, %s58
    %p70 = scmp.eq.s32.totalorder %s27, 1
    %p71 = por %p69, %p70
    %p73 = scmp.ne.s32.totalorder %s58, %s72
    %p74 = scmp.eq.s32.totalorder %s27, 0
    %p75 = por %p73, %p74
    %s77 = sadd.s32 %s76, 1
    %p80 = scmp.eq.s32.totalorder %s21, 1
    %p81 = scmp.ne.s32.totalorder %s76, %s78
    %p82 = scmp.eq.s32.totalorder %s21, 0
    %p83 = por %p81, %p82
    %p84 = scmp.ne.s32.totalorder %s76, %s78
    %p85 = scmp.eq.s32.totalorder %s26, 1
    %p86 = por %p84, %p85
    %p87 = scmp.ne.s32.totalorder %s78, %s79
    %p88 = scmp.eq.s32.totalorder %s26, 0
    %p89 = por %p87, %p88
    %p90 = scmp.ne.s32.totalorder %s78, %s79
    %p91 = scmp.eq.s32.totalorder %s27, 1
    %p92 = por %p90, %p91
    %p94 = scmp.ne.s32.totalorder %s79, %s93
    %p95 = scmp.eq.s32.totalorder %s27, 0
    %p96 = por %p94, %p95
    %s98 = sadd.s32 %s97, 1
    %p101 = scmp.eq.s32.totalorder %s21, 1
    %p102 = scmp.ne.s32.totalorder %s97, %s99
    %p103 = scmp.eq.s32.totalorder %s21, 0
    %p104 = por %p102, %p103
    %p105 = scmp.ne.s32.totalorder %s97, %s99
    %p106 = scmp.eq.s32.totalorder %s26, 1
    %p107 = por %p105, %p106
    %p108 = scmp.ne.s32.totalorder %s99, %s100
    %p109 = scmp.eq.s32.totalorder %s26, 0
    %p110 = por %p108, %p109
    %p111 = scmp.ne.s32.totalorder %s99, %s100
    %p112 = scmp.eq.s32.totalorder %s27, 1
    %p113 = por %p111, %p112
    %p115 = scmp.ne.s32.totalorder %s100, %s114
    %p116 = scmp.eq.s32.totalorder %s27, 0
    %p117 = por %p115, %p116
    %s119 = sadd.s32 %s118, 1
    %p122 = scmp.eq.s32.totalorder %s21, 1
    %p123 = scmp.ne.s32.totalorder %s118, %s120
    %p124 = scmp.eq.s32.totalorder %s21, 0
    %p125 = por %p123, %p124
    %p126 = scmp.ne.s32.totalorder %s118, %s120
    %p127 = scmp.eq.s32.totalorder %s26, 1
    %p128 = por %p126, %p127
    %p129 = scmp.ne.s32.totalorder %s120, %s121
    %p130 = scmp.eq.s32.totalorder %s26, 0
    %p131 = por %p129, %p130
    %p132 = scmp.ne.s32.totalorder %s120, %s121
    %p133 = scmp.eq.s32.totalorder %s27, 1
    %p134 = por %p132, %p133
    %p136 = scmp.ne.s32.totalorder %s121, %s135
    %p137 = scmp.eq.s32.totalorder %s27, 0
    %p138 = por %p136, %p137
    %s140 = sadd.s32 %s139, 1
    %p143 = scmp.eq.s32.totalorder %s21, 1
    %p144 = scmp.ne.s32.totalorder %s139, %s141
    %p145 = scmp.eq.s32.totalorder %s21, 0
    %p146 = por %p144, %p145
    %p147 = scmp.ne.s32.totalorder %s139, %s141
    %p148 = scmp.eq.s32.totalorder %s26, 1
    %p149 = por %p147, %p148
    %p150 = scmp.ne.s32.totalorder %s141, %s142
    %p151 = scmp.eq.s32.totalorder %s26, 0
    %p152 = por %p150, %p151
    %p153 = scmp.ne.s32.totalorder %s141, %s142
    %p154 = scmp.eq.s32.totalorder %s27, 1
    %p155 = por %p153, %p154
    %p157 = scmp.ne.s32.totalorder %s142, %s156
    %p158 = scmp.eq.s32.totalorder %s27, 0
    %p159 = por %p157, %p158
    %s161 = sadd.s32 %s160, 1
    %p164 = scmp.eq.s32.totalorder %s21, 1
    %p165 = scmp.ne.s32.totalorder %s160, %s162
    %p166 = scmp.eq.s32.totalorder %s21, 0
    %p167 = por %p165, %p166
    %p168 = scmp.ne.s32.totalorder %s160, %s162
    %p169 = scmp.eq.s32.totalorder %s26, 1
    %p170 = por %p168, %p169
    %p171 = scmp.ne.s32.totalorder %s162, %s163
    %p172 = scmp.eq.s32.totalorder %s26, 0
    %p173 = por %p171, %p172
    %p174 = scmp.ne.s32.totalorder %s162, %s163
    %p175 = scmp.eq.s32.totalorder %s27, 1
    %p176 = por %p174, %p175
    %p178 = scmp.ne.s32.totalorder %s163, %s177
    %p179 = scmp.eq.s32.totalorder %s27, 0
    %p180 = por %p178, %p179
    %s182 = sadd.s32 %s181, 1
    %p185 = scmp.eq.s32.totalorder %s21, 1
    %p186 = scmp.ne.s32.totalorder %s181, %s183
    %p187 = scmp.eq.s32.totalorder %s21, 0
    %p188 = por %p186, %p187
    %p189 = scmp.ne.s32.totalorder %s181, %s183
    %p190 = scmp.eq.s32.totalorder %s26, 1
    %p191 = por %p189, %p190
    %p192 = scmp.ne.s32.totalorder %s183, %s184
    %p193 = scmp.eq.s32.totalorder %s26, 0
    %p194 = por %p192, %p193
    %p195 = scmp.ne.s32.totalorder %s183, %s184
    %p196 = scmp.eq.s32.totalorder %s27, 1
    %p197 = por %p195, %p196
    %p199 = scmp.ne.s32.totalorder %s184, %s198
    %p200 = scmp.eq.s32.totalorder %s27, 0
    %p201 = por %p199, %p200
    %s203 = sadd.s32 %s202, 1
    %p206 = scmp.eq.s32.totalorder %s21, 1
    %p207 = scmp.ne.s32.totalorder %s202, %s204
    %p208 = scmp.eq.s32.totalorder %s21, 0
    %p209 = por %p207, %p208
    %p210 = scmp.ne.s32.totalorder %s202, %s204
    %p211 = scmp.eq.s32.totalorder %s26, 1
    %p212 = por %p210, %p211
    %p213 = scmp.ne.s32.totalorder %s204, %s205
    %p214 = scmp.eq.s32.totalorder %s26, 0
    %p215 = por %p213, %p214
    %p216 = scmp.ne.s32.totalorder %s204, %s205
    %p217 = scmp.eq.s32.totalorder %s27, 1
    %p218 = por %p216, %p217
    %p220 = scmp.ne.s32.totalorder %s205, %s219
    %p221 = scmp.eq.s32.totalorder %s27, 0
    %p222 = por %p220, %p221
    %s224 = sadd.s32 %s223, 1
    %p227 = scmp.eq.s32.totalorder %s21, 1
    %p228 = scmp.ne.s32.totalorder %s223, %s225
    %p229 = scmp.eq.s32.totalorder %s21, 0
    %p230 = por %p228, %p229
    %p231 = scmp.ne.s32.totalorder %s223, %s225
    %p232 = scmp.eq.s32.totalorder %s26, 1
    %p233 = por %p231, %p232
    %p234 = scmp.ne.s32.totalorder %s225, %s226
    %p235 = scmp.eq.s32.totalorder %s26, 0
    %p236 = por %p234, %p235
    %p237 = scmp.ne.s32.totalorder %s225, %s226
    %p238 = scmp.eq.s32.totalorder %s27, 1
    %p239 = por %p237, %p238
    %p241 = scmp.ne.s32.totalorder %s226, %s240
    %p242 = scmp.eq.s32.totalorder %s27, 0
    %p243 = por %p241, %p242
    %s245 = sadd.s32 %s244, 1
    %p248 = scmp.eq.s32.totalorder %s21, 1
    %p249 = scmp.ne.s32.totalorder %s244, %s246
    %p250 = scmp.eq.s32.totalorder %s21, 0
    %p251 = por %p249, %p250
    %p252 = scmp.ne.s32.totalorder %s244, %s246
    %p253 = scmp.eq.s32.totalorder %s26, 1
    %p254 = por %p252, %p253
    %p255 = scmp.ne.s32.totalorder %s246, %s247
    %p256 = scmp.eq.s32.totalorder %s26, 0
    %p257 = por %p255, %p256
    %p258 = scmp.ne.s32.totalorder %s246, %s247
    %p259 = scmp.eq.s32.totalorder %s27, 1
    %p260 = por %p258, %p259
    %p262 = scmp.ne.s32.totalorder %s247, %s261
    %p263 = scmp.eq.s32.totalorder %s27, 0
    %p264 = por %p262, %p263
    %s266 = sadd.s32 %s265, 1
    %p269 = scmp.eq.s32.totalorder %s21, 1
    %p270 = scmp.ne.s32.totalorder %s265, %s267
    %p271 = scmp.eq.s32.totalorder %s21, 0
    %p272 = por %p270, %p271
    %p273 = scmp.ne.s32.totalorder %s265, %s267
    %p274 = scmp.eq.s32.totalorder %s26, 1
    %p275 = por %p273, %p274
    %p276 = scmp.ne.s32.totalorder %s267, %s268
    %p277 = scmp.eq.s32.totalorder %s26, 0
    %p278 = por %p276, %p277
    %p279 = scmp.ne.s32.totalorder %s267, %s268
    %p280 = scmp.eq.s32.totalorder %s27, 1
    %p281 = por %p279, %p280
    %p283 = scmp.ne.s32.totalorder %s268, %s282
    %p284 = scmp.eq.s32.totalorder %s27, 0
    %p285 = por %p283, %p284
    %s287 = sadd.s32 %s286, 1
    %p290 = scmp.eq.s32.totalorder %s21, 1
    %p291 = scmp.ne.s32.totalorder %s286, %s288
    %p292 = scmp.eq.s32.totalorder %s21, 0
    %p293 = por %p291, %p292
    %p294 = scmp.ne.s32.totalorder %s286, %s288
    %p295 = scmp.eq.s32.totalorder %s26, 1
    %p296 = por %p294, %p295
    %p297 = scmp.ne.s32.totalorder %s288, %s289
    %p298 = scmp.eq.s32.totalorder %s26, 0
    %p299 = por %p297, %p298
    %p300 = scmp.ne.s32.totalorder %s288, %s289
    %p301 = scmp.eq.s32.totalorder %s27, 1
    %p302 = por %p300, %p301
    %p304 = scmp.ne.s32.totalorder %s289, %s303
    %p305 = scmp.eq.s32.totalorder %s27, 0
    %p306 = por %p304, %p305
    %s308 = sadd.s32 %s307, 1
    %p311 = scmp.eq.s32.totalorder %s21, 1
    %p312 = scmp.ne.s32.totalorder %s307, %s309
    %p313 = scmp.eq.s32.totalorder %s21, 0
    %p314 = por %p312, %p313
    %p315 = scmp.ne.s32.totalorder %s307, %s309
    %p316 = scmp.eq.s32.totalorder %s26, 1
    %p317 = por %p315, %p316
    %p318 = scmp.ne.s32.totalorder %s309, %s310
    %p319 = scmp.eq.s32.totalorder %s26, 0
    %p320 = por %p318, %p319
    %p321 = scmp.ne.s32.totalorder %s309, %s310
    %p322 = scmp.eq.s32.totalorder %s27, 1
    %p323 = por %p321, %p322
    %p325 = scmp.ne.s32.totalorder %s310, %s324
    %p326 = scmp.eq.s32.totalorder %s27, 0
    %p327 = por %p325, %p326
    %s329 = sadd.s32 %s328, 1
    %p332 = scmp.eq.s32.totalorder %s21, 1
    %p333 = scmp.ne.s32.totalorder %s328, %s330
    %p334 = scmp.eq.s32.totalorder %s21, 0
    %p335 = por %p333, %p334
    %p336 = scmp.ne.s32.totalorder %s328, %s330
    %p337 = scmp.eq.s32.totalorder %s26, 1
    %p338 = por %p336, %p337
    %p339 = scmp.ne.s32.totalorder %s330, %s331
    %p340 = scmp.eq.s32.totalorder %s26, 0
    %p341 = por %p339, %p340
    %p342 = scmp.ne.s32.totalorder %s330, %s331
    %p343 = scmp.eq.s32.totalorder %s27, 1
    %p344 = por %p342, %p343
    %p346 = scmp.ne.s32.totalorder %s331, %s345
    %p347 = scmp.eq.s32.totalorder %s27, 0
    %p348 = por %p346, %p347
    %s349 = ssub.s32 %s21, %s28
    %p350 = scmp.eq.s32.totalorder %s349, 0
    %s352 = sadd.s32 %s351, 1
    %s353 = scalar_select %p350, %s351, %s352
    %p356 = pneg %p350
    %p357 = scmp.eq.s32.totalorder %s21, 1
    %p358 = por %p356, %p357
    %p359 = scmp.ne.s32.totalorder %s351, %s354
    %p360 = scmp.eq.s32.totalorder %s21, 0
    %p361 = por %p359, %p360
    %p362 = scmp.ne.s32.totalorder %s351, %s354
    %p363 = scmp.eq.s32.totalorder %s26, 1
    %p364 = por %p362, %p363
    %p365 = scmp.ne.s32.totalorder %s354, %s355
    %p366 = scmp.eq.s32.totalorder %s26, 0
    %p367 = por %p365, %p366
    %p368 = scmp.ne.s32.totalorder %s354, %s355
    %p369 = scmp.eq.s32.totalorder %s27, 1
    %p370 = por %p368, %p369
    %p372 = scmp.ne.s32.totalorder %s355, %s371
    %p373 = scmp.eq.s32.totalorder %s27, 0
    %p374 = por %p372, %p373
    %p375 = scmp.le.s32.totalorder 1, %s21
    %p376 = scmp.lt.s32.totalorder %s21, 3
    %p377 = pnand %p375, %p376
    %p378 = pneg %p377
    // Predicated region
    $region9: #{isic_dino_forward.4} parent=5 // pred_check
      _
    $region10: #{isic_dino_forward.4} parent=5 // pred_check_branch
      %380 = sbr.rel (%p377) target = $region12
    $region11: #{isic_dino_forward.4} parent=5 // pred_region
      %s381 = ssub.s32 %s21, 1
      // Predicated region
      $region13: #{isic_dino_forward.4} parent=11 // pred_check
        %p382 = pneg %p68
      $region14: #{isic_dino_forward.4} parent=11 // pred_check_branch
        %384 = sbr.rel (%p382) target = $region16
      $region15: #{isic_dino_forward.4} parent=11 // pred_region
        _
      $region16: #{isic_dino_forward.4} parent=11 // pred_fallthru
        _
      // Predicated region
      $region17: #{isic_dino_forward.4} parent=11 // pred_check
        %p385 = pneg %p89
      $region18: #{isic_dino_forward.4} parent=11 // pred_check_branch
        %387 = sbr.rel (%p385) target = $region20
      $region19: #{isic_dino_forward.4} parent=11 // pred_region
        _
      $region20: #{isic_dino_forward.4} parent=11 // pred_fallthru
        _
      // Predicated region
      $region21: #{isic_dino_forward.4} parent=11 // pred_check
        %p388 = pneg %p110
      $region22: #{isic_dino_forward.4} parent=11 // pred_check_branch
        %390 = sbr.rel (%p388) target = $region24
      $region23: #{isic_dino_forward.4} parent=11 // pred_region
        _
      $region24: #{isic_dino_forward.4} parent=11 // pred_fallthru
        _
      // Predicated region
      $region25: #{isic_dino_forward.4} parent=11 // pred_check
        %p391 = pneg %p131
      $region26: #{isic_dino_forward.4} parent=11 // pred_check_branch
        %393 = sbr.rel (%p391) target = $region28
      $region27: #{isic_dino_forward.4} parent=11 // pred_region
        _
      $region28: #{isic_dino_forward.4} parent=11 // pred_fallthru
        _
      // Predicated region
      $region29: #{isic_dino_forward.4} parent=11 // pred_check
        %p394 = pneg %p152
      $region30: #{isic_dino_forward.4} parent=11 // pred_check_branch
        %396 = sbr.rel (%p394) target = $region32
      $region31: #{isic_dino_forward.4} parent=11 // pred_region
        _
      $region32: #{isic_dino_forward.4} parent=11 // pred_fallthru
        _
      // Predicated region
      $region33: #{isic_dino_forward.4} parent=11 // pred_check
        %p397 = pneg %p173
      $region34: #{isic_dino_forward.4} parent=11 // pred_check_branch
        %399 = sbr.rel (%p397) target = $region36
      $region35: #{isic_dino_forward.4} parent=11 // pred_region
        _
      $region36: #{isic_dino_forward.4} parent=11 // pred_fallthru
        _
      // Predicated region
      $region37: #{isic_dino_forward.4} parent=11 // pred_check
        %p400 = pneg %p194
      $region38: #{isic_dino_forward.4} parent=11 // pred_check_branch
        %402 = sbr.rel (%p400) target = $region40
      $region39: #{isic_dino_forward.4} parent=11 // pred_region
        _
      $region40: #{isic_dino_forward.4} parent=11 // pred_fallthru
        _
      // Predicated region
      $region41: #{isic_dino_forward.4} parent=11 // pred_check
        %p403 = pneg %p215
      $region42: #{isic_dino_forward.4} parent=11 // pred_check_branch
        %405 = sbr.rel (%p403) target = $region44
      $region43: #{isic_dino_forward.4} parent=11 // pred_region
        _
      $region44: #{isic_dino_forward.4} parent=11 // pred_fallthru
        _
      // Predicated region
      $region45: #{isic_dino_forward.4} parent=11 // pred_check
        %p406 = pneg %p236
      $region46: #{isic_dino_forward.4} parent=11 // pred_check_branch
        %408 = sbr.rel (%p406) target = $region48
      $region47: #{isic_dino_forward.4} parent=11 // pred_region
        _
      $region48: #{isic_dino_forward.4} parent=11 // pred_fallthru
        _
      // Predicated region
      $region49: #{isic_dino_forward.4} parent=11 // pred_check
        %p409 = pneg %p257
      $region50: #{isic_dino_forward.4} parent=11 // pred_check_branch
        %411 = sbr.rel (%p409) target = $region52
      $region51: #{isic_dino_forward.4} parent=11 // pred_region
        _
      $region52: #{isic_dino_forward.4} parent=11 // pred_fallthru
        _
      // Predicated region
      $region53: #{isic_dino_forward.4} parent=11 // pred_check
        %p412 = pneg %p278
      $region54: #{isic_dino_forward.4} parent=11 // pred_check_branch
        %414 = sbr.rel (%p412) target = $region56
      $region55: #{isic_dino_forward.4} parent=11 // pred_region
        _
      $region56: #{isic_dino_forward.4} parent=11 // pred_fallthru
        _
      // Predicated region
      $region57: #{isic_dino_forward.4} parent=11 // pred_check
        %p415 = pneg %p299
      $region58: #{isic_dino_forward.4} parent=11 // pred_check_branch
        %417 = sbr.rel (%p415) target = $region60
      $region59: #{isic_dino_forward.4} parent=11 // pred_region
        _
      $region60: #{isic_dino_forward.4} parent=11 // pred_fallthru
        _
      // Predicated region
      $region61: #{isic_dino_forward.4} parent=11 // pred_check
        %p418 = pneg %p320
      $region62: #{isic_dino_forward.4} parent=11 // pred_check_branch
        %420 = sbr.rel (%p418) target = $region64
      $region63: #{isic_dino_forward.4} parent=11 // pred_region
        _
      $region64: #{isic_dino_forward.4} parent=11 // pred_fallthru
        _
      // Predicated region
      $region65: #{isic_dino_forward.4} parent=11 // pred_check
        %p421 = pneg %p341
      $region66: #{isic_dino_forward.4} parent=11 // pred_check_branch
        %423 = sbr.rel (%p421) target = $region68
      $region67: #{isic_dino_forward.4} parent=11 // pred_region
        _
      $region68: #{isic_dino_forward.4} parent=11 // pred_fallthru
        _
    $region12: #{isic_dino_forward.4} parent=5 // pred_fallthru
      _
    %p424 = scmp.lt.s32.totalorder %s21, 2
    // Predicated region
    $region69: #{isic_dino_forward.4} parent=5 // pred_check
      %p425 = pneg %p424
    $region70: #{isic_dino_forward.4} parent=5 // pred_check_branch
      %427 = sbr.rel (%p425) target = $region72
    $region71: #{isic_dino_forward.4} parent=5 // pred_region
      // Predicated region
      $region73: #{isic_dino_forward.4} parent=71 // pred_check
        %p428 = pneg %p41
      $region74: #{isic_dino_forward.4} parent=71 // pred_check_branch
        %430 = sbr.rel (%p428) target = $region76
      $region75: #{isic_dino_forward.4} parent=71 // pred_region
        %p431 = scmp.lt.s32.totalorder %s21, 1
        %s432 = scalar_select %p431, %s21, 1
        %s433 = smul.addr %s432, 3
        %s434 = smul.addr %s433, 8
        %s435 = scalar_lea.vmem %s0, %s434
      $region76: #{isic_dino_forward.4} parent=71 // pred_fallthru
        _
    $region72: #{isic_dino_forward.4} parent=5 // pred_fallthru
      _
    %p436 = scmp.le.s32.totalorder 1, %s21
    %p437 = scmp.lt.s32.totalorder %s21, 3
    %p438 = pnand %p436, %p437
    %p439 = pneg %p438
    // Predicated region
    $region77: #{isic_dino_forward.4} parent=5 // pred_check
      _
    $region78: #{isic_dino_forward.4} parent=5 // pred_check_branch
      %441 = sbr.rel (%p438) target = $region80
    $region79: #{isic_dino_forward.4} parent=5 // pred_region
      %s442 = ssub.s32 %s21, 1
      %p443 = scmp.lt.s32.totalorder %s26, 1
      %s444 = scalar_select %p443, %s26, 1
      %s445 = smul.addr %s444, 3
      %s446 = smul.addr %s445, 8
      %s447 = scalar_lea.vmem %s0, %s446
      %p448 = pneg %p47
      %p449 = pneg %p44
      %p450 = pneg %p68
      %p451 = pneg %p65
      %p452 = pneg %p89
      %p453 = pneg %p86
      %p454 = pneg %p110
      %p455 = pneg %p107
      %p456 = pneg %p131
      %p457 = pneg %p128
      %p458 = pneg %p152
      %p459 = pneg %p149
      %p460 = pneg %p173
      %p461 = pneg %p170
      %p462 = pneg %p194
      %p463 = pneg %p191
      %p464 = pneg %p215
      %p465 = pneg %p212
      %p466 = pneg %p236
      %p467 = pneg %p233
      %p468 = pneg %p257
      %p469 = pneg %p254
      %p470 = pneg %p278
      %p471 = pneg %p275
      %p472 = pneg %p299
      %p473 = pneg %p296
      %p474 = pneg %p320
      %p475 = pneg %p317
      %p476 = pneg %p341
      %p477 = pneg %p338
      %p478 = pneg %p367
      %p479 = pneg %p364
      %p480 = scmp.lt.s32.totalorder %s26, 1
      %s481 = scalar_select %p480, %s26, 1
      %s482 = scalar_lea.vmem %s15, %s481
      %p483 = scmp.lt.s32.totalorder %s26, 1
      %s484 = scalar_select %p483, %s26, 1
      %s485 = smul.addr %s484, 3
      %s486 = smul.addr %s485, 8
      %s487 = scalar_lea.vmem %s0, %s486
      %p488 = scmp.lt.s32.totalorder %s26, 1
      %s489 = scalar_select %p488, %s26, 1
      %s490 = scalar_lea.vmem %s15, %s489
      %v492 = vld [vmem:[%s487] sm:$0xff]
      %v493 = vld [vmem:[%s487 + $0x8] sm:$0xff]
      %v494 = vld [vmem:[%s487 + $0x10] sm:$0xff]
      %v495 = vlaneseq
      %v496 = vand.u32 %v495, 127
      %vm497 = vcmp.lt.s32.totalorder %v496, 17
      %v498 = vld [vmem:[%s1] sm:$0x1]
      %v499 = vld [vmem:[%s2] sm:$0x1]
      %500 = vadd.xlane.f32.xlu0 %v492
      %v501 = vpop.xlane.xlu0 %500
      %502 = vadd.xlane.f32.xlu0 %v493
      %v503 = vpop.xlane.xlu0 %502
      %504 = vadd.xlane.f32.xlu0 %v494
      %v505 = vpop.xlane.xlu0 %504
      %v506 = vrcp.pop 128.0
      %v507 = vmul.f32 128.0, %v506
      %v508 = vsub.f32 1.0, %v507
      %v509 = vmul.f32 %v506, %v508
      %v510 = vadd.f32 %v506, %v509
      %vm511 = vweird.f32 %v506
      %v512 = vsel %vm511, %v506, %v510
      %v513 = vmul.f32 %v501, %v512
      %v514 = vmul.f32 %v503, %v512
      %v515 = vmul.f32 %v505, %v512
      %v516 = vsub.f32 %v492, %v513
      %v517 = vsub.f32 %v493, %v514
      %v518 = vsub.f32 %v494, %v515
      %v519 = vmul.f32 %v516, %v516
      %v520 = vmul.f32 %v517, %v517
      %v521 = vmul.f32 %v518, %v518
      %522 = vadd.xlane.f32.xlu0 %v519
      %v523 = vpop.xlane.xlu0 %522
      %524 = vadd.xlane.f32.xlu0 %v520
      %v525 = vpop.xlane.xlu0 %524
      %526 = vadd.xlane.f32.xlu0 %v521
      %v527 = vpop.xlane.xlu0 %526
      %v528 = vmul.f32 %v523, %v512
      %v529 = vmul.f32 %v525, %v512
      %v530 = vmul.f32 %v527, %v512
      %v531 = vadd.f32 %v528, 1e-06
      %v532 = vadd.f32 %v529, 1e-06
      %v533 = vadd.f32 %v530, 1e-06
      %v534 = vrsqrt.pop %v531
      %v535 = vmul.f32 %v534, %v531
      %v536 = vmul.f32 %v535, %v534
      %v537 = vmul.f32 0.5, %v536
      %v538 = vsub.f32 1.5, %v537
      %v539 = vmul.f32 %v534, %v538
      %vm540 = vweird.f32 %v531
      %vm541 = vweird.f32 %v534
      %vm542 = vmor %vm540, %vm541
      %v543 = vsel %vm542, %v534, %v539
      %v544 = vrsqrt.pop %v532
      %v545 = vmul.f32 %v544, %v532
      %v546 = vmul.f32 %v545, %v544
      %v547 = vmul.f32 0.5, %v546
      %v548 = vsub.f32 1.5, %v547
      %v549 = vmul.f32 %v544, %v548
      %vm550 = vweird.f32 %v532
      %vm551 = vweird.f32 %v544
      %vm552 = vmor %vm550, %vm551
      %v553 = vsel %vm552, %v544, %v549
      %v554 = vrsqrt.pop %v533
      %v555 = vmul.f32 %v554, %v533
      %v556 = vmul.f32 %v555, %v554
      %v557 = vmul.f32 0.5, %v556
      %v558 = vsub.f32 1.5, %v557
      %v559 = vmul.f32 %v554, %v558
      %vm560 = vweird.f32 %v533
      %vm561 = vweird.f32 %v554
      %vm562 = vmor %vm560, %vm561
      %v563 = vsel %vm562, %v554, %v559
      %v564 = vmul.f32 %v516, %v543
      %v565 = vmul.f32 %v517, %v553
      %v566 = vmul.f32 %v518, %v563
      %v568 = vperm.slane %v498, 0
      %v570 = vmul.f32 %v564, %v568
      %v571 = vmul.f32 %v565, %v568
      %v572 = vmul.f32 %v566, %v568
      %v574 = vperm.slane %v499, 0
      %v576 = vadd.f32 %v570, %v574
      %v577 = vadd.f32 %v571, %v574
      %v578 = vadd.f32 %v572, %v574
      %v579 = vpack.c.bf16 %v577, %v576
      %v580 = vpack.c.bf16 %v578, %v578
      %v581 = vld [vmem:[%s3] sm:$0xff]
      %v582 = vld [vmem:[%s3 + $0x8] sm:$0xf]
      %v583 = vld [vmem:[%s3 + $0xc] sm:$0xff]
      %v584 = vld [vmem:[%s3 + $0x14] sm:$0xf]
      %v585 = vld [vmem:[%s3 + $0x18] sm:$0xff]
      %v586 = vld [vmem:[%s3 + $0x20] sm:$0xf]
      %v587 = vld [vmem:[%s3 + $0x24] sm:$0xff]
      %v588 = vld [vmem:[%s3 + $0x2c] sm:$0xf]
      %v589 = vld [vmem:[%s3 + $0x30] sm:$0xff]
      %v590 = vld [vmem:[%s3 + $0x38] sm:$0xf]
      %v591 = vld [vmem:[%s3 + $0x3c] sm:$0xff]
      %v592 = vld [vmem:[%s3 + $0x44] sm:$0xf]
      %v593 = vld [vmem:[%s3 + $0x48] sm:$0xff]
      %v594 = vld [vmem:[%s3 + $0x50] sm:$0xf]
      %v595 = vld [vmem:[%s3 + $0x54] sm:$0xff]
      %v596 = vld [vmem:[%s3 + $0x5c] sm:$0xf]
      %v597 = vld [vmem:[%s3 + $0x60] sm:$0xff]
      %v598 = vld [vmem:[%s3 + $0x68] sm:$0xf]
      %v599 = vld [vmem:[%s3 + $0x6c] sm:$0xff]
      %v600 = vld [vmem:[%s3 + $0x74] sm:$0xf]
      %v601 = vld [vmem:[%s3 + $0x78] sm:$0xff]
      %v602 = vld [vmem:[%s3 + $0x80] sm:$0xf]
      %v603 = vld [vmem:[%s3 + $0x84] sm:$0xff]
      %v604 = vld [vmem:[%s3 + $0x8c] sm:$0xf]
      %v605 = vld [vmem:[%s3 + $0x90] sm:$0xff]
      %v606 = vld [vmem:[%s3 + $0x98] sm:$0xf]
      %v607 = vld [vmem:[%s3 + $0x9c] sm:$0xff]
      %v608 = vld [vmem:[%s3 + $0xa4] sm:$0xf]
      %v609 = vld [vmem:[%s3 + $0xa8] sm:$0xff]
      %v610 = vld [vmem:[%s3 + $0xb0] sm:$0xf]
      %v611 = vld [vmem:[%s3 + $0xb4] sm:$0xff]
      %v612 = vld [vmem:[%s3 + $0xbc] sm:$0xf]
      %v613 = vld [vmem:[%s4] sm:$0x7]
      %v615 = vperm.slane %v613, 0
      %v616 = vperm.slane %v613, 1
      %v617 = vperm.slane %v613, 2
      %v653 = vunpack.c.l.b16 %v581
      %v654 = vunpack.c.h.b16 %v581
      %v655 = vunpack.c.l.b16 %v582
      %v656 = vunpack.c.l.b16 %v583
      %v657 = vunpack.c.h.b16 %v583
      %v658 = vunpack.c.l.b16 %v584
      %v659 = vunpack.c.l.b16 %v585
      %v660 = vunpack.c.h.b16 %v585
      %v661 = vunpack.c.l.b16 %v586
      %v662 = vunpack.c.l.b16 %v587
      %v663 = vunpack.c.h.b16 %v587
      %v664 = vunpack.c.l.b16 %v588
      %v665 = vunpack.c.l.b16 %v589
      %v666 = vunpack.c.h.b16 %v589
      %v667 = vunpack.c.l.b16 %v590
      %v668 = vunpack.c.l.b16 %v591
      %v669 = vunpack.c.h.b16 %v591
      %v670 = vunpack.c.l.b16 %v592
      %v671 = vunpack.c.l.b16 %v593
      %v672 = vunpack.c.h.b16 %v593
      %v673 = vunpack.c.l.b16 %v594
      %v674 = vunpack.c.l.b16 %v595
      %v675 = vunpack.c.h.b16 %v595
      %v676 = vunpack.c.l.b16 %v596
      %v677 = vunpack.c.l.b16 %v597
      %v678 = vunpack.c.h.b16 %v597
      %v679 = vunpack.c.l.b16 %v598
      %v680 = vunpack.c.l.b16 %v599
      %v681 = vunpack.c.h.b16 %v599
      %v682 = vunpack.c.l.b16 %v600
      %v683 = vunpack.c.l.b16 %v601
      %v684 = vunpack.c.h.b16 %v601
      %v685 = vunpack.c.l.b16 %v602
      %v686 = vunpack.c.l.b16 %v603
      %v687 = vunpack.c.h.b16 %v603
      %v688 = vunpack.c.l.b16 %v604
      %v689 = vunpack.c.l.b16 %v605
      %v690 = vunpack.c.h.b16 %v605
      %v691 = vunpack.c.l.b16 %v606
      %v692 = vunpack.c.l.b16 %v607
      %v693 = vunpack.c.h.b16 %v607
      %v694 = vunpack.c.l.b16 %v608
      %v695 = vunpack.c.l.b16 %v609
      %v696 = vunpack.c.h.b16 %v609
      %v697 = vunpack.c.l.b16 %v610
      %v698 = vunpack.c.l.b16 %v611
      %v699 = vunpack.c.h.b16 %v611
      %v700 = vunpack.c.l.b16 %v612
      %v701 = vpack.c.b16 %v656, %v653
      %v702 = vpack.c.b16 %v657, %v654
      %v703 = vpack.c.b16 %v658, %v655
      %v704 = vpack.c.b16 %v662, %v659
      %v705 = vpack.c.b16 %v663, %v660
      %v706 = vpack.c.b16 %v664, %v661
      %v707 = vpack.c.b16 %v668, %v665
      %v708 = vpack.c.b16 %v669, %v666
      %v709 = vpack.c.b16 %v670, %v667
      %v710 = vpack.c.b16 %v674, %v671
      %v711 = vpack.c.b16 %v675, %v672
      %v712 = vpack.c.b16 %v676, %v673
      %v713 = vpack.c.b16 %v680, %v677
      %v714 = vpack.c.b16 %v681, %v678
      %v715 = vpack.c.b16 %v682, %v679
      %v716 = vpack.c.b16 %v686, %v683
      %v717 = vpack.c.b16 %v687, %v684
      %v718 = vpack.c.b16 %v688, %v685
      %v719 = vpack.c.b16 %v692, %v689
      %v720 = vpack.c.b16 %v693, %v690
      %v721 = vpack.c.b16 %v694, %v691
      %v722 = vpack.c.b16 %v698, %v695
      %v723 = vpack.c.b16 %v699, %v696
      %v724 = vpack.c.b16 %v700, %v697
      %749 = vmatpush.bf16.msra.mxu0 %v722
      %750 = vmatpush.bf16.msra.mxu0 %v719
      %751 = vmatpush.bf16.msra.mxu0 %v716
      %752 = vmatpush.bf16.msra.mxu0 %v713
      %753 = vmatpush.bf16.msra.mxu0 %v710
      %754 = vmatpush.bf16.msra.mxu0 %v707
      %755 = vmatpush.bf16.msra.mxu0 %v704
      %756 = vmatpush.bf16.msra.mxu0 %v701
      %757 = vmatmul.bf16.gmra.mxu0 %v579
      %v758 = vpop.f32.mrf.mxu0
      %v759 = vadd.f32 %v615, %v758
      %v760 = vpop.f32.mrf.mxu0
      %v761 = vadd.f32 %v615, %v760
      %762 = vmatmul.bf16.gmra.mxu0 %v580
      %v763 = vpop.f32.mrf.mxu0
      %v764 = vadd.f32 %v615, %v763
      %v765 = vpop.f32.mrf.mxu0
      %766 = vdwg.mxu0
      %767 = vmatpush.bf16.msra.mxu0 %v723
      %768 = vmatpush.bf16.msra.mxu0 %v720
      %769 = vmatpush.bf16.msra.mxu0 %v717
      %770 = vmatpush.bf16.msra.mxu0 %v714
      %771 = vmatpush.bf16.msra.mxu0 %v711
      %772 = vmatpush.bf16.msra.mxu0 %v708
      %773 = vmatpush.bf16.msra.mxu0 %v705
      %774 = vmatpush.bf16.msra.mxu0 %v702
      %775 = vmatmul.bf16.gmra.mxu0 %v579
      %v776 = vpop.f32.mrf.mxu0
      %v777 = vadd.f32 %v616, %v776
      %v778 = vpop.f32.mrf.mxu0
      %v779 = vadd.f32 %v616, %v778
      %780 = vmatmul.bf16.gmra.mxu0 %v580
      %v781 = vpop.f32.mrf.mxu0
      %v782 = vadd.f32 %v616, %v781
      %v783 = vpop.f32.mrf.mxu0
      %784 = vdwg.mxu0
      %785 = vmatpush.bf16.msra.mxu0 %v724
      %786 = vmatpush.bf16.msra.mxu0 %v721
      %787 = vmatpush.bf16.msra.mxu0 %v718
      %788 = vmatpush.bf16.msra.mxu0 %v715
      %789 = vmatpush.bf16.msra.mxu0 %v712
      %790 = vmatpush.bf16.msra.mxu0 %v709
      %791 = vmatpush.bf16.msra.mxu0 %v706
      %792 = vmatpush.bf16.msra.mxu0 %v703
      %793 = vmatmul.bf16.gmra.mxu0 %v579
      %v794 = vpop.f32.mrf.mxu0
      %v795 = vadd.f32 %v617, %v794
      %v796 = vpop.f32.mrf.mxu0
      %v797 = vadd.f32 %v617, %v796
      %798 = vmatmul.bf16.gmra.mxu0 %v580
      %v799 = vpop.f32.mrf.mxu0
      %v800 = vadd.f32 %v617, %v799
      %v801 = vpop.f32.mrf.mxu0
      %802 = vdwg.mxu0
      %v803 = vld [vmem:[%s5] sm:$0xf]
      %v804 = vld [vmem:[%s5 + $0x4] sm:$0xf]
      %v805 = vld [vmem:[%s5 + $0x8] sm:$0xf]
      %v806 = vld [vmem:[%s5 + $0xc] sm:$0xf]
      %v807 = vld [vmem:[%s5 + $0x10] sm:$0xf]
      %v808 = vld [vmem:[%s5 + $0x14] sm:$0xf]
      %v809 = vld [vmem:[%s5 + $0x18] sm:$0xf]
      %v810 = vld [vmem:[%s5 + $0x1c] sm:$0xf]
      %v811 = vld [vmem:[%s5 + $0x20] sm:$0xf]
      %v812 = vld [vmem:[%s5 + $0x24] sm:$0xf]
      %v813 = vld [vmem:[%s5 + $0x28] sm:$0xf]
      %v814 = vld [vmem:[%s5 + $0x2c] sm:$0xf]
      %v815 = vld [vmem:[%s5 + $0x30] sm:$0xf]
      %v816 = vld [vmem:[%s5 + $0x34] sm:$0xf]
      %v817 = vld [vmem:[%s5 + $0x38] sm:$0xf]
      %v818 = vld [vmem:[%s5 + $0x3c] sm:$0xf]
      %v819 = vpack.c.bf16 %v761, %v759
      %v820 = vpack.c.bf16 %v764, %v764
      %v821 = vpack.c.bf16 %v779, %v777
      %v822 = vpack.c.bf16 %v782, %v782
      %v823 = vpack.c.bf16 %v797, %v795
      %v824 = vpack.c.bf16 %v800, %v800
      %vm825 = vcmask 523264
      %v827 = vsel %vm825, %v819, 0
      %v830 = vsel %vm825, %v820, 0
      %v833 = vsel %vm825, %v821, 0
      %v836 = vsel %vm825, %v822, 0
      %838 = vmatpush.bf16.xpose.msra.mxu0 0
      %839 = vmatpush.bf16.xpose.msra.mxu0 0
      %840 = vmatpush.bf16.xpose.msra.mxu0 0
      %841 = vmatpush.bf16.xpose.msra.mxu0 0
      %842 = vmatpush.bf16.xpose.msra.mxu0 0
      %843 = vmatpush.bf16.xpose.msra.mxu0 0
      %844 = vmatpush.bf16.xpose.msra.mxu0 %v836
      %845 = vmatpush.bf16.xpose.msra.mxu0 %v833
      %846 = vmatmul.bf16.gmra.mxu0 %v827
      %v847 = vpop.f32.mrf.mxu0
      %v848 = vadd.f32 0.0, %v847
      %v849 = vpop.f32.mrf.mxu0
      %v850 = vadd.f32 0.0, %v849
      %851 = vmatmul.bf16.gmra.mxu0 %v830
      %v852 = vpop.f32.mrf.mxu0
      %v853 = vadd.f32 0.0, %v852
      %v854 = vpop.f32.mrf.mxu0
      %855 = vdwg.mxu0
      %v856 = vmul.f32 %v848, 0.125
      %v857 = vmul.f32 %v850, 0.125
      %v858 = vmul.f32 %v853, 0.125
      %v859 = vsel %vm497, %v856, -1e+30
      %v860 = vsel %vm497, %v857, -1e+30
      %v861 = vsel %vm497, %v858, -1e+30
      %vm862 = vcmask 195584
      %v863 = vsel %vm862, %v859, -inf
      %864 = vmax.xlane.f32.xlu0 %v863
      %v865 = vpop.xlane.xlu0 %864
      %v866 = vsel %vm862, %v860, -inf
      %867 = vmax.xlane.f32.xlu0 %v866
      %v868 = vpop.xlane.xlu0 %867
      %v869 = vsel %vm862, %v861, -inf
      %870 = vmax.xlane.f32.xlu0 %v869
      %v871 = vpop.xlane.xlu0 %870
      %v872 = vsub.f32 %v859, %v865
      %v873 = vsub.f32 %v860, %v868
      %v874 = vsub.f32 %v861, %v871
      %v875 = vmul.f32 %v872, 1.442695
      %v876 = vpow.pop %v875
      %v877 = vmul.f32 %v873, 1.442695
      %v878 = vpow.pop %v877
      %v879 = vmul.f32 %v874, 1.442695
      %v880 = vpow.pop %v879
      %v881 = vsel %vm862, %v876, 0.0
      %882 = vadd.xlane.f32.xlu0 %v881
      %v883 = vpop.xlane.xlu0 %882
      %v884 = vsel %vm862, %v878, 0.0
      %885 = vadd.xlane.f32.xlu0 %v884
      %v886 = vpop.xlane.xlu0 %885
      %v887 = vsel %vm862, %v880, 0.0
      %888 = vadd.xlane.f32.xlu0 %v887
      %v889 = vpop.xlane.xlu0 %888
      %v890 = vrcp.pop %v883
      %v891 = vrcp.pop %v886
      %v892 = vrcp.pop %v889
      %v893 = vmul.f32 %v876, %v890
      %v894 = vmul.f32 %v878, %v891
      %v895 = vmul.f32 %v880, %v892
      %v896 = vpack.c.bf16 %v894, %v893
      %v897 = vpack.c.bf16 %v895, %v895
      %v899 = vsel %vm862, %v896, 0
      %v902 = vsel %vm862, %v897, 0
      %vm904 = vcmask 1043456
      %v906 = vsel %vm904, %v824, 0
      %908 = vmatpush.bf16.msra.mxu0 0
      %909 = vmatpush.bf16.msra.mxu0 0
      %910 = vmatpush.bf16.msra.mxu0 0
      %911 = vmatpush.bf16.msra.mxu0 0
      %912 = vmatpush.bf16.msra.mxu0 0
      %913 = vmatpush.bf16.msra.mxu0 0
      %914 = vmatpush.bf16.msra.mxu0 %v906
      %915 = vmatpush.bf16.msra.mxu0 %v823
      %916 = vmatmul.bf16.gmra.mxu0 %v899
      %v917 = vpop.f32.mrf.mxu0
      %v918 = vadd.f32 0.0, %v917
      %v919 = vpop.f32.mrf.mxu0
      %v920 = vadd.f32 0.0, %v919
      %921 = vmatmul.bf16.gmra.mxu0 %v902
      %v922 = vpop.f32.mrf.mxu0
      %v923 = vadd.f32 0.0, %v922
      %v924 = vpop.f32.mrf.mxu0
      %925 = vdwg.mxu0
      %v926 = vpack.c.bf16 %v920, %v918
      %v927 = vpack.c.bf16 %v923, %v923
      %930 = vrot.lane.b32.xlu0 %v819, 64
      %v931 = vpop.permute.xlu0 %930
      %932 = vrot.lane.b32.xlu0 %v820, 64
      %v933 = vpop.permute.xlu0 %932
      %936 = vrot.lane.b32.xlu0 %v821, 64
      %v937 = vpop.permute.xlu0 %936
      %938 = vrot.lane.b32.xlu0 %v822, 64
      %v939 = vpop.permute.xlu0 %938
      %v941 = vsel %vm825, %v931, 0
      %v944 = vsel %vm825, %v933, 0
      %v947 = vsel %vm825, %v937, 0
      %v950 = vsel %vm825, %v939, 0
      %952 = vmatpush.bf16.xpose.msra.mxu0 0
      %953 = vmatpush.bf16.xpose.msra.mxu0 0
      %954 = vmatpush.bf16.xpose.msra.mxu0 0
      %955 = vmatpush.bf16.xpose.msra.mxu0 0
      %956 = vmatpush.bf16.xpose.msra.mxu0 0
      %957 = vmatpush.bf16.xpose.msra.mxu0 0
      %958 = vmatpush.bf16.xpose.msra.mxu0 %v950
      %959 = vmatpush.bf16.xpose.msra.mxu0 %v947
      %960 = vmatmul.bf16.gmra.mxu0 %v941
      %v961 = vpop.f32.mrf.mxu0
      %v962 = vadd.f32 0.0, %v961
      %v963 = vpop.f32.mrf.mxu0
      %v964 = vadd.f32 0.0, %v963
      %965 = vmatmul.bf16.gmra.mxu0 %v944
      %v966 = vpop.f32.mrf.mxu0
      %v967 = vadd.f32 0.0, %v966
      %v968 = vpop.f32.mrf.mxu0
      %969 = vdwg.mxu0
      %v970 = vmul.f32 %v962, 0.125
      %v971 = vmul.f32 %v964, 0.125
      %v972 = vmul.f32 %v967, 0.125
      %v973 = vsel %vm497, %v970, -1e+30
      %v974 = vsel %vm497, %v971, -1e+30
      %v975 = vsel %vm497, %v972, -1e+30
      %v976 = vsel %vm862, %v973, -inf
      %977 = vmax.xlane.f32.xlu0 %v976
      %v978 = vpop.xlane.xlu0 %977
      %v979 = vsel %vm862, %v974, -inf
      %980 = vmax.xlane.f32.xlu0 %v979
      %v981 = vpop.xlane.xlu0 %980
      %v982 = vsel %vm862, %v975, -inf
      %983 = vmax.xlane.f32.xlu0 %v982
      %v984 = vpop.xlane.xlu0 %983
      %v985 = vsub.f32 %v973, %v978
      %v986 = vsub.f32 %v974, %v981
      %v987 = vsub.f32 %v975, %v984
      %v988 = vmul.f32 %v985, 1.442695
      %v989 = vpow.pop %v988
      %v990 = vmul.f32 %v986, 1.442695
      %v991 = vpow.pop %v990
      %v992 = vmul.f32 %v987, 1.442695
      %v993 = vpow.pop %v992
      %v994 = vsel %vm862, %v989, 0.0
      %995 = vadd.xlane.f32.xlu0 %v994
      %v996 = vpop.xlane.xlu0 %995
      %v997 = vsel %vm862, %v991, 0.0
      %998 = vadd.xlane.f32.xlu0 %v997
      %v999 = vpop.xlane.xlu0 %998
      %v1000 = vsel %vm862, %v993, 0.0
      %1001 = vadd.xlane.f32.xlu0 %v1000
      %v1002 = vpop.xlane.xlu0 %1001
      %v1003 = vrcp.pop %v996
      %v1004 = vrcp.pop %v999
      %v1005 = vrcp.pop %v1002
      %v1006 = vmul.f32 %v989, %v1003
      %v1007 = vmul.f32 %v991, %v1004
      %v1008 = vmul.f32 %v993, %v1005
      %v1009 = vpack.c.bf16 %v1007, %v1006
      %v1010 = vpack.c.bf16 %v1008, %v1008
      %1013 = vrot.lane.b32.xlu0 %v823, 64
      %v1014 = vpop.permute.xlu0 %1013
      %1015 = vrot.lane.b32.xlu0 %v824, 64
      %v1016 = vpop.permute.xlu0 %1015
      %v1019 = vsel %vm862, %v1009, 0
      %v1022 = vsel %vm862, %v1010, 0
      %v1025 = vsel %vm904, %v1016, 0
      %1027 = vmatpush.bf16.msra.mxu0 0
      %1028 = vmatpush.bf16.msra.mxu0 0
      %1029 = vmatpush.bf16.msra.mxu0 0
      %1030 = vmatpush.bf16.msra.mxu0 0
      %1031 = vmatpush.bf16.msra.mxu0 0
      %1032 = vmatpush.bf16.msra.mxu0 0
      %1033 = vmatpush.bf16.msra.mxu0 %v1025
      %1034 = vmatpush.bf16.msra.mxu0 %v1014
      %1035 = vmatmul.bf16.gmra.mxu0 %v1019
      %v1036 = vpop.f32.mrf.mxu0
      %v1037 = vadd.f32 0.0, %v1036
      %v1038 = vpop.f32.mrf.mxu0
      %v1039 = vadd.f32 0.0, %v1038
      %1040 = vmatmul.bf16.gmra.mxu0 %v1022
      %v1041 = vpop.f32.mrf.mxu0
      %v1042 = vadd.f32 0.0, %v1041
      %v1043 = vpop.f32.mrf.mxu0
      %1044 = vdwg.mxu0
      %v1045 = vpack.c.bf16 %v1039, %v1037
      %v1046 = vpack.c.bf16 %v1042, %v1042
      %v1055 = vunpack.c.l.b16 %v811
      %v1056 = vunpack.c.l.b16 %v812
      %v1057 = vunpack.c.l.b16 %v813
      %v1058 = vunpack.c.l.b16 %v814
      %v1059 = vunpack.c.l.b16 %v815
      %v1060 = vunpack.c.l.b16 %v816
      %v1061 = vunpack.c.l.b16 %v817
      %v1062 = vunpack.c.l.b16 %v818
      %v1063 = vpack.c.b16 %v1056, %v1055
      %v1064 = vpack.c.b16 %v1058, %v1057
      %v1065 = vpack.c.b16 %v1060, %v1059
      %v1066 = vpack.c.b16 %v1062, %v1061
      %v1072 = vsel %vm825, %v1045, 0
      %v1075 = vsel %vm825, %v1046, 0
      %1077 = vmatpush.bf16.msra.mxu0 0
      %1078 = vmatpush.bf16.msra.mxu0 0
      %1079 = vmatpush.bf16.msra.mxu0 0
      %1080 = vmatpush.bf16.msra.mxu0 0
      %1081 = vmatpush.bf16.msra.mxu0 %v1066
      %1082 = vmatpush.bf16.msra.mxu0 %v1065
      %1083 = vmatpush.bf16.msra.mxu0 %v1064
      %1084 = vmatpush.bf16.msra.mxu0 %v1063
      %1085 = vmatmul.bf16.gmra.mxu0 %v1072
      %v1086 = vpop.f32.mrf.mxu0
      %v1087 = vadd.f32 0.0, %v1086
      %v1088 = vpop.f32.mrf.mxu0
      %v1089 = vadd.f32 0.0, %v1088
      %1090 = vmatmul.bf16.gmra.mxu0 %v1075
      %v1091 = vpop.f32.mrf.mxu0
      %v1092 = vadd.f32 0.0, %v1091
      %v1093 = vpop.f32.mrf.mxu0
      %1094 = vdwg.mxu0
      %v1103 = vunpack.c.l.b16 %v803
      %v1104 = vunpack.c.l.b16 %v804
      %v1105 = vunpack.c.l.b16 %v805
      %v1106 = vunpack.c.l.b16 %v806
      %v1107 = vunpack.c.l.b16 %v807
      %v1108 = vunpack.c.l.b16 %v808
      %v1109 = vunpack.c.l.b16 %v809
      %v1110 = vunpack.c.l.b16 %v810
      %v1111 = vpack.c.b16 %v1104, %v1103
      %v1112 = vpack.c.b16 %v1106, %v1105
      %v1113 = vpack.c.b16 %v1108, %v1107
      %v1114 = vpack.c.b16 %v1110, %v1109
      %v1120 = vsel %vm825, %v926, 0
      %v1123 = vsel %vm825, %v927, 0
      %1125 = vmatpush.bf16.msra.mxu0 0
      %1126 = vmatpush.bf16.msra.mxu0 0
      %1127 = vmatpush.bf16.msra.mxu0 0
      %1128 = vmatpush.bf16.msra.mxu0 0
      %1129 = vmatpush.bf16.msra.mxu0 %v1114
      %1130 = vmatpush.bf16.msra.mxu0 %v1113
      %1131 = vmatpush.bf16.msra.mxu0 %v1112
      %1132 = vmatpush.bf16.msra.mxu0 %v1111
      %1133 = vmatmul.bf16.gmra.mxu0 %v1120
      %v1134 = vpop.f32.mrf.mxu0
      %v1135 = vadd.f32 %v1087, %v1134
      %v1136 = vpop.f32.mrf.mxu0
      %v1137 = vadd.f32 %v1089, %v1136
      %1138 = vmatmul.bf16.gmra.mxu0 %v1123
      %v1139 = vpop.f32.mrf.mxu0
      %v1140 = vadd.f32 %v1092, %v1139
      %v1141 = vpop.f32.mrf.mxu0
      %1142 = vdwg.mxu0
      %v1143 = vadd.f32 %v492, %v1135
      %v1144 = vadd.f32 %v493, %v1137
      %v1145 = vadd.f32 %v494, %v1140
      %v1146 = vld [vmem:[%s6] sm:$0x1]
      %v1148 = vperm.slane %v1146, 0
      %v1150 = vadd.f32 %v1143, %v1148
      %v1151 = vadd.f32 %v1144, %v1148
      %v1152 = vadd.f32 %v1145, %v1148
      %v1153 = vld [vmem:[%s7] sm:$0x1]
      %v1154 = vld [vmem:[%s8] sm:$0x1]
      %1155 = vadd.xlane.f32.xlu0 %v1150
      %v1156 = vpop.xlane.xlu0 %1155
      %1157 = vadd.xlane.f32.xlu0 %v1151
      %v1158 = vpop.xlane.xlu0 %1157
      %1159 = vadd.xlane.f32.xlu0 %v1152
      %v1160 = vpop.xlane.xlu0 %1159
      %v1161 = vmul.f32 %v1156, %v512
      %v1162 = vmul.f32 %v1158, %v512
      %v1163 = vmul.f32 %v1160, %v512
      %v1164 = vsub.f32 %v1150, %v1161
      %v1165 = vsub.f32 %v1151, %v1162
      %v1166 = vsub.f32 %v1152, %v1163
      %v1167 = vmul.f32 %v1164, %v1164
      %v1168 = vmul.f32 %v1165, %v1165
      %v1169 = vmul.f32 %v1166, %v1166
      %1170 = vadd.xlane.f32.xlu0 %v1167
      %v1171 = vpop.xlane.xlu0 %1170
      %1172 = vadd.xlane.f32.xlu0 %v1168
      %v1173 = vpop.xlane.xlu0 %1172
      %1174 = vadd.xlane.f32.xlu0 %v1169
      %v1175 = vpop.xlane.xlu0 %1174
      %v1176 = vmul.f32 %v1171, %v512
      %v1177 = vmul.f32 %v1173, %v512
      %v1178 = vmul.f32 %v1175, %v512
      %v1179 = vadd.f32 %v1176, 1e-06
      %v1180 = vadd.f32 %v1177, 1e-06
      %v1181 = vadd.f32 %v1178, 1e-06
      %v1182 = vrsqrt.pop %v1179
      %v1183 = vmul.f32 %v1182, %v1179
      %v1184 = vmul.f32 %v1183, %v1182
      %v1185 = vmul.f32 0.5, %v1184
      %v1186 = vsub.f32 1.5, %v1185
      %v1187 = vmul.f32 %v1182, %v1186
      %vm1188 = vweird.f32 %v1179
      %vm1189 = vweird.f32 %v1182
      %vm1190 = vmor %vm1188, %vm1189
      %v1191 = vsel %vm1190, %v1182, %v1187
      %v1192 = vrsqrt.pop %v1180
      %v1193 = vmul.f32 %v1192, %v1180
      %v1194 = vmul.f32 %v1193, %v1192
      %v1195 = vmul.f32 0.5, %v1194
      %v1196 = vsub.f32 1.5, %v1195
      %v1197 = vmul.f32 %v1192, %v1196
      %vm1198 = vweird.f32 %v1180
      %vm1199 = vweird.f32 %v1192
      %vm1200 = vmor %vm1198, %vm1199
      %v1201 = vsel %vm1200, %v1192, %v1197
      %v1202 = vrsqrt.pop %v1181
      %v1203 = vmul.f32 %v1202, %v1181
      %v1204 = vmul.f32 %v1203, %v1202
      %v1205 = vmul.f32 0.5, %v1204
      %v1206 = vsub.f32 1.5, %v1205
      %v1207 = vmul.f32 %v1202, %v1206
      %vm1208 = vweird.f32 %v1181
      %vm1209 = vweird.f32 %v1202
      %vm1210 = vmor %vm1208, %vm1209
      %v1211 = vsel %vm1210, %v1202, %v1207
      %v1212 = vmul.f32 %v1164, %v1191
      %v1213 = vmul.f32 %v1165, %v1201
      %v1214 = vmul.f32 %v1166, %v1211
      %v1216 = vperm.slane %v1153, 0
      %v1218 = vmul.f32 %v1212, %v1216
      %v1219 = vmul.f32 %v1213, %v1216
      %v1220 = vmul.f32 %v1214, %v1216
      %v1222 = vperm.slane %v1154, 0
      %v1224 = vadd.f32 %v1218, %v1222
      %v1225 = vadd.f32 %v1219, %v1222
      %v1226 = vadd.f32 %v1220, %v1222
      %v1227 = vpack.c.bf16 %v1225, %v1224
      %v1228 = vpack.c.bf16 %v1226, %v1226
      %v1229 = vld [vmem:[%s9] sm:$0xff]
      %v1230 = vld [vmem:[%s9 + $0x8] sm:$0xff]
      %v1231 = vld [vmem:[%s9 + $0x10] sm:$0xff]
      %v1232 = vld [vmem:[%s9 + $0x18] sm:$0xff]
      %v1233 = vld [vmem:[%s9 + $0x20] sm:$0xff]
      %v1234 = vld [vmem:[%s9 + $0x28] sm:$0xff]
      %v1235 = vld [vmem:[%s9 + $0x30] sm:$0xff]
      %v1236 = vld [vmem:[%s9 + $0x38] sm:$0xff]
      %v1237 = vld [vmem:[%s9 + $0x40] sm:$0xff]
      %v1238 = vld [vmem:[%s9 + $0x48] sm:$0xff]
      %v1239 = vld [vmem:[%s9 + $0x50] sm:$0xff]
      %v1240 = vld [vmem:[%s9 + $0x58] sm:$0xff]
      %v1241 = vld [vmem:[%s9 + $0x60] sm:$0xff]
      %v1242 = vld [vmem:[%s9 + $0x68] sm:$0xff]
      %v1243 = vld [vmem:[%s9 + $0x70] sm:$0xff]
      %v1244 = vld [vmem:[%s9 + $0x78] sm:$0xff]
      %v1245 = vld [vmem:[%s10] sm:$0x3]
      %v1247 = vperm.slane %v1245, 0
      %v1248 = vperm.slane %v1245, 1
      %v1267 = vunpack.c.l.b16 %v1229
      %v1268 = vunpack.c.h.b16 %v1229
      %v1269 = vunpack.c.l.b16 %v1230
      %v1270 = vunpack.c.h.b16 %v1230
      %v1271 = vunpack.c.l.b16 %v1231
      %v1272 = vunpack.c.h.b16 %v1231
      %v1273 = vunpack.c.l.b16 %v1232
      %v1274 = vunpack.c.h.b16 %v1232
      %v1275 = vunpack.c.l.b16 %v1233
      %v1276 = vunpack.c.h.b16 %v1233
      %v1277 = vunpack.c.l.b16 %v1234
      %v1278 = vunpack.c.h.b16 %v1234
      %v1279 = vunpack.c.l.b16 %v1235
      %v1280 = vunpack.c.h.b16 %v1235
      %v1281 = vunpack.c.l.b16 %v1236
      %v1282 = vunpack.c.h.b16 %v1236
      %v1283 = vunpack.c.l.b16 %v1237
      %v1284 = vunpack.c.h.b16 %v1237
      %v1285 = vunpack.c.l.b16 %v1238
      %v1286 = vunpack.c.h.b16 %v1238
      %v1287 = vunpack.c.l.b16 %v1239
      %v1288 = vunpack.c.h.b16 %v1239
      %v1289 = vunpack.c.l.b16 %v1240
      %v1290 = vunpack.c.h.b16 %v1240
      %v1291 = vunpack.c.l.b16 %v1241
      %v1292 = vunpack.c.h.b16 %v1241
      %v1293 = vunpack.c.l.b16 %v1242
      %v1294 = vunpack.c.h.b16 %v1242
      %v1295 = vunpack.c.l.b16 %v1243
      %v1296 = vunpack.c.h.b16 %v1243
      %v1297 = vunpack.c.l.b16 %v1244
      %v1298 = vunpack.c.h.b16 %v1244
      %v1299 = vpack.c.b16 %v1269, %v1267
      %v1300 = vpack.c.b16 %v1270, %v1268
      %v1301 = vpack.c.b16 %v1273, %v1271
      %v1302 = vpack.c.b16 %v1274, %v1272
      %v1303 = vpack.c.b16 %v1277, %v1275
      %v1304 = vpack.c.b16 %v1278, %v1276
      %v1305 = vpack.c.b16 %v1281, %v1279
      %v1306 = vpack.c.b16 %v1282, %v1280
      %v1307 = vpack.c.b16 %v1285, %v1283
      %v1308 = vpack.c.b16 %v1286, %v1284
      %v1309 = vpack.c.b16 %v1289, %v1287
      %v1310 = vpack.c.b16 %v1290, %v1288
      %v1311 = vpack.c.b16 %v1293, %v1291
      %v1312 = vpack.c.b16 %v1294, %v1292
      %v1313 = vpack.c.b16 %v1297, %v1295
      %v1314 = vpack.c.b16 %v1298, %v1296
      %1331 = vmatpush.bf16.msra.mxu0 %v1313
      %1332 = vmatpush.bf16.msra.mxu0 %v1311
      %1333 = vmatpush.bf16.msra.mxu0 %v1309
      %1334 = vmatpush.bf16.msra.mxu0 %v1307
      %1335 = vmatpush.bf16.msra.mxu0 %v1305
      %1336 = vmatpush.bf16.msra.mxu0 %v1303
      %1337 = vmatpush.bf16.msra.mxu0 %v1301
      %1338 = vmatpush.bf16.msra.mxu0 %v1299
      %1339 = vmatmul.bf16.gmra.mxu0 %v1227
      %v1340 = vpop.f32.mrf.mxu0
      %v1341 = vadd.f32 %v1247, %v1340
      %v1342 = vpop.f32.mrf.mxu0
      %v1343 = vadd.f32 %v1247, %v1342
      %1344 = vmatmul.bf16.gmra.mxu0 %v1228
      %v1345 = vpop.f32.mrf.mxu0
      %v1346 = vadd.f32 %v1247, %v1345
      %v1347 = vpop.f32.mrf.mxu0
      %1348 = vdwg.mxu0
      %1349 = vmatpush.bf16.msra.mxu0 %v1314
      %1350 = vmatpush.bf16.msra.mxu0 %v1312
      %1351 = vmatpush.bf16.msra.mxu0 %v1310
      %1352 = vmatpush.bf16.msra.mxu0 %v1308
      %1353 = vmatpush.bf16.msra.mxu0 %v1306
      %1354 = vmatpush.bf16.msra.mxu0 %v1304
      %1355 = vmatpush.bf16.msra.mxu0 %v1302
      %1356 = vmatpush.bf16.msra.mxu0 %v1300
      %1357 = vmatmul.bf16.gmra.mxu0 %v1227
      %v1358 = vpop.f32.mrf.mxu0
      %v1359 = vadd.f32 %v1248, %v1358
      %v1360 = vpop.f32.mrf.mxu0
      %v1361 = vadd.f32 %v1248, %v1360
      %1362 = vmatmul.bf16.gmra.mxu0 %v1228
      %v1363 = vpop.f32.mrf.mxu0
      %v1364 = vadd.f32 %v1248, %v1363
      %v1365 = vpop.f32.mrf.mxu0
      %1366 = vdwg.mxu0
      %v1367 = vmul.f32 %v1341, %v1341
      %v1368 = vmul.f32 %v1359, %v1359
      %v1369 = vmul.f32 %v1343, %v1343
      %v1370 = vmul.f32 %v1361, %v1361
      %v1371 = vmul.f32 %v1346, %v1346
      %v1372 = vmul.f32 %v1364, %v1364
      %v1373 = vmul.f32 %v1341, %v1367
      %v1374 = vmul.f32 %v1359, %v1368
      %v1375 = vmul.f32 %v1343, %v1369
      %v1376 = vmul.f32 %v1361, %v1370
      %v1377 = vmul.f32 %v1346, %v1371
      %v1378 = vmul.f32 %v1364, %v1372
      %v1379 = vmul.f32 %v1373, 0.044715
      %v1380 = vmul.f32 %v1374, 0.044715
      %v1381 = vmul.f32 %v1375, 0.044715
      %v1382 = vmul.f32 %v1376, 0.044715
      %v1383 = vmul.f32 %v1377, 0.044715
      %v1384 = vmul.f32 %v1378, 0.044715
      %v1385 = vadd.f32 %v1341, %v1379
      %v1386 = vadd.f32 %v1359, %v1380
      %v1387 = vadd.f32 %v1343, %v1381
      %v1388 = vadd.f32 %v1361, %v1382
      %v1389 = vadd.f32 %v1346, %v1383
      %v1390 = vadd.f32 %v1364, %v1384
      %v1391 = vmul.f32 %v1385, 0.7978846
      %v1392 = vmul.f32 %v1386, 0.7978846
      %v1393 = vmul.f32 %v1387, 0.7978846
      %v1394 = vmul.f32 %v1388, 0.7978846
      %v1395 = vmul.f32 %v1389, 0.7978846
      %v1396 = vmul.f32 %v1390, 0.7978846
      %v1397 = vtanh.pop %v1391
      %v1398 = vtanh.pop %v1392
      %v1399 = vtanh.pop %v1393
      %v1400 = vtanh.pop %v1394
      %v1401 = vtanh.pop %v1395
      %v1402 = vtanh.pop %v1396
      %v1403 = vadd.f32 %v1397, 1.0
      %v1404 = vadd.f32 %v1398, 1.0
      %v1405 = vadd.f32 %v1399, 1.0
      %v1406 = vadd.f32 %v1400, 1.0
      %v1407 = vadd.f32 %v1401, 1.0
      %v1408 = vadd.f32 %v1402, 1.0
      %v1409 = vmul.f32 %v1403, 0.5
      %v1410 = vmul.f32 %v1404, 0.5
      %v1411 = vmul.f32 %v1405, 0.5
      %v1412 = vmul.f32 %v1406, 0.5
      %v1413 = vmul.f32 %v1407, 0.5
      %v1414 = vmul.f32 %v1408, 0.5
      %v1415 = vmul.f32 %v1341, %v1409
      %v1416 = vmul.f32 %v1359, %v1410
      %v1417 = vmul.f32 %v1343, %v1411
      %v1418 = vmul.f32 %v1361, %v1412
      %v1419 = vmul.f32 %v1346, %v1413
      %v1420 = vmul.f32 %v1364, %v1414
      %v1421 = vpack.c.bf16 %v1417, %v1415
      %v1422 = vpack.c.bf16 %v1418, %v1416
      %v1423 = vpack.c.bf16 %v1419, %v1419
      %v1424 = vpack.c.bf16 %v1420, %v1420
      %v1425 = vld [vmem:[%s11] sm:$0xf]
      %v1426 = vld [vmem:[%s11 + $0x4] sm:$0xf]
      %v1427 = vld [vmem:[%s11 + $0x8] sm:$0xf]
      %v1428 = vld [vmem:[%s11 + $0xc] sm:$0xf]
      %v1429 = vld [vmem:[%s11 + $0x10] sm:$0xf]
      %v1430 = vld [vmem:[%s11 + $0x14] sm:$0xf]
      %v1431 = vld [vmem:[%s11 + $0x18] sm:$0xf]
      %v1432 = vld [vmem:[%s11 + $0x1c] sm:$0xf]
      %v1433 = vld [vmem:[%s11 + $0x20] sm:$0xf]
      %v1434 = vld [vmem:[%s11 + $0x24] sm:$0xf]
      %v1435 = vld [vmem:[%s11 + $0x28] sm:$0xf]
      %v1436 = vld [vmem:[%s11 + $0x2c] sm:$0xf]
      %v1437 = vld [vmem:[%s11 + $0x30] sm:$0xf]
      %v1438 = vld [vmem:[%s11 + $0x34] sm:$0xf]
      %v1439 = vld [vmem:[%s11 + $0x38] sm:$0xf]
      %v1440 = vld [vmem:[%s11 + $0x3c] sm:$0xf]
      %v1441 = vld [vmem:[%s11 + $0x40] sm:$0xf]
      %v1442 = vld [vmem:[%s11 + $0x44] sm:$0xf]
      %v1443 = vld [vmem:[%s11 + $0x48] sm:$0xf]
      %v1444 = vld [vmem:[%s11 + $0x4c] sm:$0xf]
      %v1445 = vld [vmem:[%s11 + $0x50] sm:$0xf]
      %v1446 = vld [vmem:[%s11 + $0x54] sm:$0xf]
      %v1447 = vld [vmem:[%s11 + $0x58] sm:$0xf]
      %v1448 = vld [vmem:[%s11 + $0x5c] sm:$0xf]
      %v1449 = vld [vmem:[%s11 + $0x60] sm:$0xf]
      %v1450 = vld [vmem:[%s11 + $0x64] sm:$0xf]
      %v1451 = vld [vmem:[%s11 + $0x68] sm:$0xf]
      %v1452 = vld [vmem:[%s11 + $0x6c] sm:$0xf]
      %v1453 = vld [vmem:[%s11 + $0x70] sm:$0xf]
      %v1454 = vld [vmem:[%s11 + $0x74] sm:$0xf]
      %v1455 = vld [vmem:[%s11 + $0x78] sm:$0xf]
      %v1456 = vld [vmem:[%s11 + $0x7c] sm:$0xf]
      %v1457 = vld [vmem:[%s12] sm:$0x1]
      %v1459 = vperm.slane %v1457, 0
      %v1493 = vunpack.c.l.b16 %v1425
      %v1494 = vunpack.c.l.b16 %v1426
      %v1495 = vunpack.c.l.b16 %v1427
      %v1496 = vunpack.c.l.b16 %v1428
      %v1497 = vunpack.c.l.b16 %v1429
      %v1498 = vunpack.c.l.b16 %v1430
      %v1499 = vunpack.c.l.b16 %v1431
      %v1500 = vunpack.c.l.b16 %v1432
      %v1501 = vunpack.c.l.b16 %v1433
      %v1502 = vunpack.c.l.b16 %v1434
      %v1503 = vunpack.c.l.b16 %v1435
      %v1504 = vunpack.c.l.b16 %v1436
      %v1505 = vunpack.c.l.b16 %v1437
      %v1506 = vunpack.c.l.b16 %v1438
      %v1507 = vunpack.c.l.b16 %v1439
      %v1508 = vunpack.c.l.b16 %v1440
      %v1509 = vunpack.c.l.b16 %v1441
      %v1510 = vunpack.c.l.b16 %v1442
      %v1511 = vunpack.c.l.b16 %v1443
      %v1512 = vunpack.c.l.b16 %v1444
      %v1513 = vunpack.c.l.b16 %v1445
      %v1514 = vunpack.c.l.b16 %v1446
      %v1515 = vunpack.c.l.b16 %v1447
      %v1516 = vunpack.c.l.b16 %v1448
      %v1517 = vunpack.c.l.b16 %v1449
      %v1518 = vunpack.c.l.b16 %v1450
      %v1519 = vunpack.c.l.b16 %v1451
      %v1520 = vunpack.c.l.b16 %v1452
      %v1521 = vunpack.c.l.b16 %v1453
      %v1522 = vunpack.c.l.b16 %v1454
      %v1523 = vunpack.c.l.b16 %v1455
      %v1524 = vunpack.c.l.b16 %v1456
      %v1525 = vpack.c.b16 %v1494, %v1493
      %v1526 = vpack.c.b16 %v1496, %v1495
      %v1527 = vpack.c.b16 %v1498, %v1497
      %v1528 = vpack.c.b16 %v1500, %v1499
      %v1529 = vpack.c.b16 %v1502, %v1501
      %v1530 = vpack.c.b16 %v1504, %v1503
      %v1531 = vpack.c.b16 %v1506, %v1505
      %v1532 = vpack.c.b16 %v1508, %v1507
      %v1533 = vpack.c.b16 %v1510, %v1509
      %v1534 = vpack.c.b16 %v1512, %v1511
      %v1535 = vpack.c.b16 %v1514, %v1513
      %v1536 = vpack.c.b16 %v1516, %v1515
      %v1537 = vpack.c.b16 %v1518, %v1517
      %v1538 = vpack.c.b16 %v1520, %v1519
      %v1539 = vpack.c.b16 %v1522, %v1521
      %v1540 = vpack.c.b16 %v1524, %v1523
      %1557 = vmatpush.bf16.msra.mxu0 %v1532
      %1558 = vmatpush.bf16.msra.mxu0 %v1531
      %1559 = vmatpush.bf16.msra.mxu0 %v1530
      %1560 = vmatpush.bf16.msra.mxu0 %v1529
      %1561 = vmatpush.bf16.msra.mxu0 %v1528
      %1562 = vmatpush.bf16.msra.mxu0 %v1527
      %1563 = vmatpush.bf16.msra.mxu0 %v1526
      %1564 = vmatpush.bf16.msra.mxu0 %v1525
      %1565 = vmatmul.bf16.gmra.mxu0 %v1421
      %v1566 = vpop.f32.mrf.mxu0
      %v1567 = vadd.f32 %v1459, %v1566
      %v1568 = vpop.f32.mrf.mxu0
      %v1569 = vadd.f32 %v1459, %v1568
      %1570 = vmatmul.bf16.gmra.mxu0 %v1423
      %v1571 = vpop.f32.mrf.mxu0
      %v1572 = vadd.f32 %v1459, %v1571
      %v1573 = vpop.f32.mrf.mxu0
      %1574 = vdwg.mxu0
      %1575 = vmatpush.bf16.msra.mxu0 %v1540
      %1576 = vmatpush.bf16.msra.mxu0 %v1539
      %1577 = vmatpush.bf16.msra.mxu0 %v1538
      %1578 = vmatpush.bf16.msra.mxu0 %v1537
      %1579 = vmatpush.bf16.msra.mxu0 %v1536
      %1580 = vmatpush.bf16.msra.mxu0 %v1535
      %1581 = vmatpush.bf16.msra.mxu0 %v1534
      %1582 = vmatpush.bf16.msra.mxu0 %v1533
      %1583 = vmatmul.bf16.gmra.mxu0 %v1422
      %v1584 = vpop.f32.mrf.mxu0
      %v1585 = vadd.f32 %v1567, %v1584
      %v1586 = vpop.f32.mrf.mxu0
      %v1587 = vadd.f32 %v1569, %v1586
      %1588 = vmatmul.bf16.gmra.mxu0 %v1424
      %v1589 = vpop.f32.mrf.mxu0
      %v1590 = vadd.f32 %v1572, %v1589
      %v1591 = vpop.f32.mrf.mxu0
      %1592 = vdwg.mxu0
      %v1593 = vadd.f32 %v1150, %v1585
      %v1594 = vadd.f32 %v1151, %v1587
      %v1595 = vadd.f32 %v1152, %v1590
      %s1596 = scalar_lea.vmem %s1, 1
      %v1597 = vld [vmem:[%s1596] sm:$0x1]
      %s1598 = scalar_lea.vmem %s2, 1
      %v1599 = vld [vmem:[%s1598] sm:$0x1]
      %1600 = vadd.xlane.f32.xlu0 %v1593
      %v1601 = vpop.xlane.xlu0 %1600
      %1602 = vadd.xlane.f32.xlu0 %v1594
      %v1603 = vpop.xlane.xlu0 %1602
      %1604 = vadd.xlane.f32.xlu0 %v1595
      %v1605 = vpop.xlane.xlu0 %1604
      %v1606 = vmul.f32 %v1601, %v512
      %v1607 = vmul.f32 %v1603, %v512
      %v1608 = vmul.f32 %v1605, %v512
      %v1609 = vsub.f32 %v1593, %v1606
      %v1610 = vsub.f32 %v1594, %v1607
      %v1611 = vsub.f32 %v1595, %v1608
      %v1612 = vmul.f32 %v1609, %v1609
      %v1613 = vmul.f32 %v1610, %v1610
      %v1614 = vmul.f32 %v1611, %v1611
      %1615 = vadd.xlane.f32.xlu0 %v1612
      %v1616 = vpop.xlane.xlu0 %1615
      %1617 = vadd.xlane.f32.xlu0 %v1613
      %v1618 = vpop.xlane.xlu0 %1617
      %1619 = vadd.xlane.f32.xlu0 %v1614
      %v1620 = vpop.xlane.xlu0 %1619
      %v1621 = vmul.f32 %v1616, %v512
      %v1622 = vmul.f32 %v1618, %v512
      %v1623 = vmul.f32 %v1620, %v512
      %v1624 = vadd.f32 %v1621, 1e-06
      %v1625 = vadd.f32 %v1622, 1e-06
      %v1626 = vadd.f32 %v1623, 1e-06
      %v1627 = vrsqrt.pop %v1624
      %v1628 = vmul.f32 %v1627, %v1624
      %v1629 = vmul.f32 %v1628, %v1627
      %v1630 = vmul.f32 0.5, %v1629
      %v1631 = vsub.f32 1.5, %v1630
      %v1632 = vmul.f32 %v1627, %v1631
      %vm1633 = vweird.f32 %v1624
      %vm1634 = vweird.f32 %v1627
      %vm1635 = vmor %vm1633, %vm1634
      %v1636 = vsel %vm1635, %v1627, %v1632
      %v1637 = vrsqrt.pop %v1625
      %v1638 = vmul.f32 %v1637, %v1625
      %v1639 = vmul.f32 %v1638, %v1637
      %v1640 = vmul.f32 0.5, %v1639
      %v1641 = vsub.f32 1.5, %v1640
      %v1642 = vmul.f32 %v1637, %v1641
      %vm1643 = vweird.f32 %v1625
      %vm1644 = vweird.f32 %v1637
      %vm1645 = vmor %vm1643, %vm1644
      %v1646 = vsel %vm1645, %v1637, %v1642
      %v1647 = vrsqrt.pop %v1626
      %v1648 = vmul.f32 %v1647, %v1626
      %v1649 = vmul.f32 %v1648, %v1647
      %v1650 = vmul.f32 0.5, %v1649
      %v1651 = vsub.f32 1.5, %v1650
      %v1652 = vmul.f32 %v1647, %v1651
      %vm1653 = vweird.f32 %v1626
      %vm1654 = vweird.f32 %v1647
      %vm1655 = vmor %vm1653, %vm1654
      %v1656 = vsel %vm1655, %v1647, %v1652
      %v1657 = vmul.f32 %v1609, %v1636
      %v1658 = vmul.f32 %v1610, %v1646
      %v1659 = vmul.f32 %v1611, %v1656
      %v1661 = vperm.slane %v1597, 0
      %v1663 = vmul.f32 %v1657, %v1661
      %v1664 = vmul.f32 %v1658, %v1661
      %v1665 = vmul.f32 %v1659, %v1661
      %v1667 = vperm.slane %v1599, 0
      %v1669 = vadd.f32 %v1663, %v1667
      %v1670 = vadd.f32 %v1664, %v1667
      %v1671 = vadd.f32 %v1665, %v1667
      %v1672 = vpack.c.bf16 %v1670, %v1669
      %v1673 = vpack.c.bf16 %v1671, %v1671
      %s1674 = scalar_lea.vmem %s3, 192
      %v1675 = vld [vmem:[%s1674] sm:$0xff]
      %v1676 = vld [vmem:[%s1674 + $0x8] sm:$0xf]
      %v1677 = vld [vmem:[%s1674 + $0xc] sm:$0xff]
      %v1678 = vld [vmem:[%s1674 + $0x14] sm:$0xf]
      %v1679 = vld [vmem:[%s1674 + $0x18] sm:$0xff]
      %v1680 = vld [vmem:[%s1674 + $0x20] sm:$0xf]
      %v1681 = vld [vmem:[%s1674 + $0x24] sm:$0xff]
      %v1682 = vld [vmem:[%s1674 + $0x2c] sm:$0xf]
      %v1683 = vld [vmem:[%s1674 + $0x30] sm:$0xff]
      %v1684 = vld [vmem:[%s1674 + $0x38] sm:$0xf]
      %v1685 = vld [vmem:[%s1674 + $0x3c] sm:$0xff]
      %v1686 = vld [vmem:[%s1674 + $0x44] sm:$0xf]
      %v1687 = vld [vmem:[%s1674 + $0x48] sm:$0xff]
      %v1688 = vld [vmem:[%s1674 + $0x50] sm:$0xf]
      %v1689 = vld [vmem:[%s1674 + $0x54] sm:$0xff]
      %v1690 = vld [vmem:[%s1674 + $0x5c] sm:$0xf]
      %v1691 = vld [vmem:[%s1674 + $0x60] sm:$0xff]
      %v1692 = vld [vmem:[%s1674 + $0x68] sm:$0xf]
      %v1693 = vld [vmem:[%s1674 + $0x6c] sm:$0xff]
      %v1694 = vld [vmem:[%s1674 + $0x74] sm:$0xf]
      %v1695 = vld [vmem:[%s1674 + $0x78] sm:$0xff]
      %v1696 = vld [vmem:[%s1674 + $0x80] sm:$0xf]
      %v1697 = vld [vmem:[%s1674 + $0x84] sm:$0xff]
      %v1698 = vld [vmem:[%s1674 + $0x8c] sm:$0xf]
      %v1699 = vld [vmem:[%s1674 + $0x90] sm:$0xff]
      %v1700 = vld [vmem:[%s1674 + $0x98] sm:$0xf]
      %v1701 = vld [vmem:[%s1674 + $0x9c] sm:$0xff]
      %v1702 = vld [vmem:[%s1674 + $0xa4] sm:$0xf]
      %v1703 = vld [vmem:[%s1674 + $0xa8] sm:$0xff]
      %v1704 = vld [vmem:[%s1674 + $0xb0] sm:$0xf]
      %v1705 = vld [vmem:[%s1674 + $0xb4] sm:$0xff]
      %v1706 = vld [vmem:[%s1674 + $0xbc] sm:$0xf]
      %s1707 = scalar_lea.vmem %s4, 3
      %v1708 = vld [vmem:[%s1707] sm:$0x7]
      %v1710 = vperm.slane %v1708, 0
      %v1711 = vperm.slane %v1708, 1
      %v1712 = vperm.slane %v1708, 2
      %v1748 = vunpack.c.l.b16 %v1675
      %v1749 = vunpack.c.h.b16 %v1675
      %v1750 = vunpack.c.l.b16 %v1676
      %v1751 = vunpack.c.l.b16 %v1677
      %v1752 = vunpack.c.h.b16 %v1677
      %v1753 = vunpack.c.l.b16 %v1678
      %v1754 = vunpack.c.l.b16 %v1679
      %v1755 = vunpack.c.h.b16 %v1679
      %v1756 = vunpack.c.l.b16 %v1680
      %v1757 = vunpack.c.l.b16 %v1681
      %v1758 = vunpack.c.h.b16 %v1681
      %v1759 = vunpack.c.l.b16 %v1682
      %v1760 = vunpack.c.l.b16 %v1683
      %v1761 = vunpack.c.h.b16 %v1683
      %v1762 = vunpack.c.l.b16 %v1684
      %v1763 = vunpack.c.l.b16 %v1685
      %v1764 = vunpack.c.h.b16 %v1685
      %v1765 = vunpack.c.l.b16 %v1686
      %v1766 = vunpack.c.l.b16 %v1687
      %v1767 = vunpack.c.h.b16 %v1687
      %v1768 = vunpack.c.l.b16 %v1688
      %v1769 = vunpack.c.l.b16 %v1689
      %v1770 = vunpack.c.h.b16 %v1689
      %v1771 = vunpack.c.l.b16 %v1690
      %v1772 = vunpack.c.l.b16 %v1691
      %v1773 = vunpack.c.h.b16 %v1691
      %v1774 = vunpack.c.l.b16 %v1692
      %v1775 = vunpack.c.l.b16 %v1693
      %v1776 = vunpack.c.h.b16 %v1693
      %v1777 = vunpack.c.l.b16 %v1694
      %v1778 = vunpack.c.l.b16 %v1695
      %v1779 = vunpack.c.h.b16 %v1695
      %v1780 = vunpack.c.l.b16 %v1696
      %v1781 = vunpack.c.l.b16 %v1697
      %v1782 = vunpack.c.h.b16 %v1697
      %v1783 = vunpack.c.l.b16 %v1698
      %v1784 = vunpack.c.l.b16 %v1699
      %v1785 = vunpack.c.h.b16 %v1699
      %v1786 = vunpack.c.l.b16 %v1700
      %v1787 = vunpack.c.l.b16 %v1701
      %v1788 = vunpack.c.h.b16 %v1701
      %v1789 = vunpack.c.l.b16 %v1702
      %v1790 = vunpack.c.l.b16 %v1703
      %v1791 = vunpack.c.h.b16 %v1703
      %v1792 = vunpack.c.l.b16 %v1704
      %v1793 = vunpack.c.l.b16 %v1705
      %v1794 = vunpack.c.h.b16 %v1705
      %v1795 = vunpack.c.l.b16 %v1706
      %v1796 = vpack.c.b16 %v1751, %v1748
      %v1797 = vpack.c.b16 %v1752, %v1749
      %v1798 = vpack.c.b16 %v1753, %v1750
      %v1799 = vpack.c.b16 %v1757, %v1754
      %v1800 = vpack.c.b16 %v1758, %v1755
      %v1801 = vpack.c.b16 %v1759, %v1756
      %v1802 = vpack.c.b16 %v1763, %v1760
      %v1803 = vpack.c.b16 %v1764, %v1761
      %v1804 = vpack.c.b16 %v1765, %v1762
      %v1805 = vpack.c.b16 %v1769, %v1766
      %v1806 = vpack.c.b16 %v1770, %v1767
      %v1807 = vpack.c.b16 %v1771, %v1768
      %v1808 = vpack.c.b16 %v1775, %v1772
      %v1809 = vpack.c.b16 %v1776, %v1773
      %v1810 = vpack.c.b16 %v1777, %v1774
      %v1811 = vpack.c.b16 %v1781, %v1778
      %v1812 = vpack.c.b16 %v1782, %v1779
      %v1813 = vpack.c.b16 %v1783, %v1780
      %v1814 = vpack.c.b16 %v1787, %v1784
      %v1815 = vpack.c.b16 %v1788, %v1785
      %v1816 = vpack.c.b16 %v1789, %v1786
      %v1817 = vpack.c.b16 %v1793, %v1790
      %v1818 = vpack.c.b16 %v1794, %v1791
      %v1819 = vpack.c.b16 %v1795, %v1792
      %1844 = vmatpush.bf16.msra.mxu0 %v1817
      %1845 = vmatpush.bf16.msra.mxu0 %v1814
      %1846 = vmatpush.bf16.msra.mxu0 %v1811
      %1847 = vmatpush.bf16.msra.mxu0 %v1808
      %1848 = vmatpush.bf16.msra.mxu0 %v1805
      %1849 = vmatpush.bf16.msra.mxu0 %v1802
      %1850 = vmatpush.bf16.msra.mxu0 %v1799
      %1851 = vmatpush.bf16.msra.mxu0 %v1796
      %1852 = vmatmul.bf16.gmra.mxu0 %v1672
      %v1853 = vpop.f32.mrf.mxu0
      %v1854 = vadd.f32 %v1710, %v1853
      %v1855 = vpop.f32.mrf.mxu0
      %v1856 = vadd.f32 %v1710, %v1855
      %1857 = vmatmul.bf16.gmra.mxu0 %v1673
      %v1858 = vpop.f32.mrf.mxu0
      %v1859 = vadd.f32 %v1710, %v1858
      %v1860 = vpop.f32.mrf.mxu0
      %1861 = vdwg.mxu0
      %1862 = vmatpush.bf16.msra.mxu0 %v1818
      %1863 = vmatpush.bf16.msra.mxu0 %v1815
      %1864 = vmatpush.bf16.msra.mxu0 %v1812
      %1865 = vmatpush.bf16.msra.mxu0 %v1809
      %1866 = vmatpush.bf16.msra.mxu0 %v1806
      %1867 = vmatpush.bf16.msra.mxu0 %v1803
      %1868 = vmatpush.bf16.msra.mxu0 %v1800
      %1869 = vmatpush.bf16.msra.mxu0 %v1797
      %1870 = vmatmul.bf16.gmra.mxu0 %v1672
      %v1871 = vpop.f32.mrf.mxu0
      %v1872 = vadd.f32 %v1711, %v1871
      %v1873 = vpop.f32.mrf.mxu0
      %v1874 = vadd.f32 %v1711, %v1873
      %1875 = vmatmul.bf16.gmra.mxu0 %v1673
      %v1876 = vpop.f32.mrf.mxu0
      %v1877 = vadd.f32 %v1711, %v1876
      %v1878 = vpop.f32.mrf.mxu0
      %1879 = vdwg.mxu0
      %1880 = vmatpush.bf16.msra.mxu0 %v1819
      %1881 = vmatpush.bf16.msra.mxu0 %v1816
      %1882 = vmatpush.bf16.msra.mxu0 %v1813
      %1883 = vmatpush.bf16.msra.mxu0 %v1810
      %1884 = vmatpush.bf16.msra.mxu0 %v1807
      %1885 = vmatpush.bf16.msra.mxu0 %v1804
      %1886 = vmatpush.bf16.msra.mxu0 %v1801
      %1887 = vmatpush.bf16.msra.mxu0 %v1798
      %1888 = vmatmul.bf16.gmra.mxu0 %v1672
      %v1889 = vpop.f32.mrf.mxu0
      %v1890 = vadd.f32 %v1712, %v1889
      %v1891 = vpop.f32.mrf.mxu0
      %v1892 = vadd.f32 %v1712, %v1891
      %1893 = vmatmul.bf16.gmra.mxu0 %v1673
      %v1894 = vpop.f32.mrf.mxu0
      %v1895 = vadd.f32 %v1712, %v1894
      %v1896 = vpop.f32.mrf.mxu0
      %1897 = vdwg.mxu0
      %s1898 = scalar_lea.vmem %s5, 64
      %v1899 = vld [vmem:[%s1898] sm:$0xf]
      %v1900 = vld [vmem:[%s1898 + $0x4] sm:$0xf]
      %v1901 = vld [vmem:[%s1898 + $0x8] sm:$0xf]
      %v1902 = vld [vmem:[%s1898 + $0xc] sm:$0xf]
      %v1903 = vld [vmem:[%s1898 + $0x10] sm:$0xf]
      %v1904 = vld [vmem:[%s1898 + $0x14] sm:$0xf]
      %v1905 = vld [vmem:[%s1898 + $0x18] sm:$0xf]
      %v1906 = vld [vmem:[%s1898 + $0x1c] sm:$0xf]
      %v1907 = vld [vmem:[%s1898 + $0x20] sm:$0xf]
      %v1908 = vld [vmem:[%s1898 + $0x24] sm:$0xf]
      %v1909 = vld [vmem:[%s1898 + $0x28] sm:$0xf]
      %v1910 = vld [vmem:[%s1898 + $0x2c] sm:$0xf]
      %v1911 = vld [vmem:[%s1898 + $0x30] sm:$0xf]
      %v1912 = vld [vmem:[%s1898 + $0x34] sm:$0xf]
      %v1913 = vld [vmem:[%s1898 + $0x38] sm:$0xf]
      %v1914 = vld [vmem:[%s1898 + $0x3c] sm:$0xf]
      %v1915 = vpack.c.bf16 %v1856, %v1854
      %v1916 = vpack.c.bf16 %v1859, %v1859
      %v1917 = vpack.c.bf16 %v1874, %v1872
      %v1918 = vpack.c.bf16 %v1877, %v1877
      %v1919 = vpack.c.bf16 %v1892, %v1890
      %v1920 = vpack.c.bf16 %v1895, %v1895
      %v1922 = vsel %vm825, %v1915, 0
      %v1925 = vsel %vm825, %v1916, 0
      %v1928 = vsel %vm825, %v1917, 0
      %v1931 = vsel %vm825, %v1918, 0
      %1933 = vmatpush.bf16.xpose.msra.mxu0 0
      %1934 = vmatpush.bf16.xpose.msra.mxu0 0
      %1935 = vmatpush.bf16.xpose.msra.mxu0 0
      %1936 = vmatpush.bf16.xpose.msra.mxu0 0
      %1937 = vmatpush.bf16.xpose.msra.mxu0 0
      %1938 = vmatpush.bf16.xpose.msra.mxu0 0
      %1939 = vmatpush.bf16.xpose.msra.mxu0 %v1931
      %1940 = vmatpush.bf16.xpose.msra.mxu0 %v1928
      %1941 = vmatmul.bf16.gmra.mxu0 %v1922
      %v1942 = vpop.f32.mrf.mxu0
      %v1943 = vadd.f32 0.0, %v1942
      %v1944 = vpop.f32.mrf.mxu0
      %v1945 = vadd.f32 0.0, %v1944
      %1946 = vmatmul.bf16.gmra.mxu0 %v1925
      %v1947 = vpop.f32.mrf.mxu0
      %v1948 = vadd.f32 0.0, %v1947
      %v1949 = vpop.f32.mrf.mxu0
      %1950 = vdwg.mxu0
      %v1951 = vmul.f32 %v1943, 0.125
      %v1952 = vmul.f32 %v1945, 0.125
      %v1953 = vmul.f32 %v1948, 0.125
      %v1954 = vsel %vm497, %v1951, -1e+30
      %v1955 = vsel %vm497, %v1952, -1e+30
      %v1956 = vsel %vm497, %v1953, -1e+30
      %v1957 = vsel %vm862, %v1954, -inf
      %1958 = vmax.xlane.f32.xlu0 %v1957
      %v1959 = vpop.xlane.xlu0 %1958
      %v1960 = vsel %vm862, %v1955, -inf
      %1961 = vmax.xlane.f32.xlu0 %v1960
      %v1962 = vpop.xlane.xlu0 %1961
      %v1963 = vsel %vm862, %v1956, -inf
      %1964 = vmax.xlane.f32.xlu0 %v1963
      %v1965 = vpop.xlane.xlu0 %1964
      %v1966 = vsub.f32 %v1954, %v1959
      %v1967 = vsub.f32 %v1955, %v1962
      %v1968 = vsub.f32 %v1956, %v1965
      %v1969 = vmul.f32 %v1966, 1.442695
      %v1970 = vpow.pop %v1969
      %v1971 = vmul.f32 %v1967, 1.442695
      %v1972 = vpow.pop %v1971
      %v1973 = vmul.f32 %v1968, 1.442695
      %v1974 = vpow.pop %v1973
      %v1975 = vsel %vm862, %v1970, 0.0
      %1976 = vadd.xlane.f32.xlu0 %v1975
      %v1977 = vpop.xlane.xlu0 %1976
      %v1978 = vsel %vm862, %v1972, 0.0
      %1979 = vadd.xlane.f32.xlu0 %v1978
      %v1980 = vpop.xlane.xlu0 %1979
      %v1981 = vsel %vm862, %v1974, 0.0
      %1982 = vadd.xlane.f32.xlu0 %v1981
      %v1983 = vpop.xlane.xlu0 %1982
      %v1984 = vrcp.pop %v1977
      %v1985 = vrcp.pop %v1980
      %v1986 = vrcp.pop %v1983
      %v1987 = vmul.f32 %v1970, %v1984
      %v1988 = vmul.f32 %v1972, %v1985
      %v1989 = vmul.f32 %v1974, %v1986
      %v1990 = vpack.c.bf16 %v1988, %v1987
      %v1991 = vpack.c.bf16 %v1989, %v1989
      %v1993 = vsel %vm862, %v1990, 0
      %v1996 = vsel %vm862, %v1991, 0
      %v1999 = vsel %vm904, %v1920, 0
      %2001 = vmatpush.bf16.msra.mxu0 0
      %2002 = vmatpush.bf16.msra.mxu0 0
      %2003 = vmatpush.bf16.msra.mxu0 0
      %2004 = vmatpush.bf16.msra.mxu0 0
      %2005 = vmatpush.bf16.msra.mxu0 0
      %2006 = vmatpush.bf16.msra.mxu0 0
      %2007 = vmatpush.bf16.msra.mxu0 %v1999
      %2008 = vmatpush.bf16.msra.mxu0 %v1919
      %2009 = vmatmul.bf16.gmra.mxu0 %v1993
      %v2010 = vpop.f32.mrf.mxu0
      %v2011 = vadd.f32 0.0, %v2010
      %v2012 = vpop.f32.mrf.mxu0
      %v2013 = vadd.f32 0.0, %v2012
      %2014 = vmatmul.bf16.gmra.mxu0 %v1996
      %v2015 = vpop.f32.mrf.mxu0
      %v2016 = vadd.f32 0.0, %v2015
      %v2017 = vpop.f32.mrf.mxu0
      %2018 = vdwg.mxu0
      %v2019 = vpack.c.bf16 %v2013, %v2011
      %v2020 = vpack.c.bf16 %v2016, %v2016
      %2023 = vrot.lane.b32.xlu0 %v1915, 64
      %v2024 = vpop.permute.xlu0 %2023
      %2025 = vrot.lane.b32.xlu0 %v1916, 64
      %v2026 = vpop.permute.xlu0 %2025
      %2029 = vrot.lane.b32.xlu0 %v1917, 64
      %v2030 = vpop.permute.xlu0 %2029
      %2031 = vrot.lane.b32.xlu0 %v1918, 64
      %v2032 = vpop.permute.xlu0 %2031
      %v2034 = vsel %vm825, %v2024, 0
      %v2037 = vsel %vm825, %v2026, 0
      %v2040 = vsel %vm825, %v2030, 0
      %v2043 = vsel %vm825, %v2032, 0
      %2045 = vmatpush.bf16.xpose.msra.mxu0 0
      %2046 = vmatpush.bf16.xpose.msra.mxu0 0
      %2047 = vmatpush.bf16.xpose.msra.mxu0 0
      %2048 = vmatpush.bf16.xpose.msra.mxu0 0
      %2049 = vmatpush.bf16.xpose.msra.mxu0 0
      %2050 = vmatpush.bf16.xpose.msra.mxu0 0
      %2051 = vmatpush.bf16.xpose.msra.mxu0 %v2043
      %2052 = vmatpush.bf16.xpose.msra.mxu0 %v2040
      %2053 = vmatmul.bf16.gmra.mxu0 %v2034
      %v2054 = vpop.f32.mrf.mxu0
      %v2055 = vadd.f32 0.0, %v2054
      %v2056 = vpop.f32.mrf.mxu0
      %v2057 = vadd.f32 0.0, %v2056
      %2058 = vmatmul.bf16.gmra.mxu0 %v2037
      %v2059 = vpop.f32.mrf.mxu0
      %v2060 = vadd.f32 0.0, %v2059
      %v2061 = vpop.f32.mrf.mxu0
      %2062 = vdwg.mxu0
      %v2063 = vmul.f32 %v2055, 0.125
      %v2064 = vmul.f32 %v2057, 0.125
      %v2065 = vmul.f32 %v2060, 0.125
      %v2066 = vsel %vm497, %v2063, -1e+30
      %v2067 = vsel %vm497, %v2064, -1e+30
      %v2068 = vsel %vm497, %v2065, -1e+30
      %v2069 = vsel %vm862, %v2066, -inf
      %2070 = vmax.xlane.f32.xlu0 %v2069
      %v2071 = vpop.xlane.xlu0 %2070
      %v2072 = vsel %vm862, %v2067, -inf
      %2073 = vmax.xlane.f32.xlu0 %v2072
      %v2074 = vpop.xlane.xlu0 %2073
      %v2075 = vsel %vm862, %v2068, -inf
      %2076 = vmax.xlane.f32.xlu0 %v2075
      %v2077 = vpop.xlane.xlu0 %2076
      %v2078 = vsub.f32 %v2066, %v2071
      %v2079 = vsub.f32 %v2067, %v2074
      %v2080 = vsub.f32 %v2068, %v2077
      %v2081 = vmul.f32 %v2078, 1.442695
      %v2082 = vpow.pop %v2081
      %v2083 = vmul.f32 %v2079, 1.442695
      %v2084 = vpow.pop %v2083
      %v2085 = vmul.f32 %v2080, 1.442695
      %v2086 = vpow.pop %v2085
      %v2087 = vsel %vm862, %v2082, 0.0
      %2088 = vadd.xlane.f32.xlu0 %v2087
      %v2089 = vpop.xlane.xlu0 %2088
      %v2090 = vsel %vm862, %v2084, 0.0
      %2091 = vadd.xlane.f32.xlu0 %v2090
      %v2092 = vpop.xlane.xlu0 %2091
      %v2093 = vsel %vm862, %v2086, 0.0
      %2094 = vadd.xlane.f32.xlu0 %v2093
      %v2095 = vpop.xlane.xlu0 %2094
      %v2096 = vrcp.pop %v2089
      %v2097 = vrcp.pop %v2092
      %v2098 = vrcp.pop %v2095
      %v2099 = vmul.f32 %v2082, %v2096
      %v2100 = vmul.f32 %v2084, %v2097
      %v2101 = vmul.f32 %v2086, %v2098
      %v2102 = vpack.c.bf16 %v2100, %v2099
      %v2103 = vpack.c.bf16 %v2101, %v2101
      %2106 = vrot.lane.b32.xlu0 %v1919, 64
      %v2107 = vpop.permute.xlu0 %2106
      %2108 = vrot.lane.b32.xlu0 %v1920, 64
      %v2109 = vpop.permute.xlu0 %2108
      %v2112 = vsel %vm862, %v2102, 0
      %v2115 = vsel %vm862, %v2103, 0
      %v2118 = vsel %vm904, %v2109, 0
      %2120 = vmatpush.bf16.msra.mxu0 0
      %2121 = vmatpush.bf16.msra.mxu0 0
      %2122 = vmatpush.bf16.msra.mxu0 0
      %2123 = vmatpush.bf16.msra.mxu0 0
      %2124 = vmatpush.bf16.msra.mxu0 0
      %2125 = vmatpush.bf16.msra.mxu0 0
      %2126 = vmatpush.bf16.msra.mxu0 %v2118
      %2127 = vmatpush.bf16.msra.mxu0 %v2107
      %2128 = vmatmul.bf16.gmra.mxu0 %v2112
      %v2129 = vpop.f32.mrf.mxu0
      %v2130 = vadd.f32 0.0, %v2129
      %v2131 = vpop.f32.mrf.mxu0
      %v2132 = vadd.f32 0.0, %v2131
      %2133 = vmatmul.bf16.gmra.mxu0 %v2115
      %v2134 = vpop.f32.mrf.mxu0
      %v2135 = vadd.f32 0.0, %v2134
      %v2136 = vpop.f32.mrf.mxu0
      %2137 = vdwg.mxu0
      %v2138 = vpack.c.bf16 %v2132, %v2130
      %v2139 = vpack.c.bf16 %v2135, %v2135
      %v2148 = vunpack.c.l.b16 %v1907
      %v2149 = vunpack.c.l.b16 %v1908
      %v2150 = vunpack.c.l.b16 %v1909
      %v2151 = vunpack.c.l.b16 %v1910
      %v2152 = vunpack.c.l.b16 %v1911
      %v2153 = vunpack.c.l.b16 %v1912
      %v2154 = vunpack.c.l.b16 %v1913
      %v2155 = vunpack.c.l.b16 %v1914
      %v2156 = vpack.c.b16 %v2149, %v2148
      %v2157 = vpack.c.b16 %v2151, %v2150
      %v2158 = vpack.c.b16 %v2153, %v2152
      %v2159 = vpack.c.b16 %v2155, %v2154
      %v2165 = vsel %vm825, %v2138, 0
      %v2168 = vsel %vm825, %v2139, 0
      %2170 = vmatpush.bf16.msra.mxu0 0
      %2171 = vmatpush.bf16.msra.mxu0 0
      %2172 = vmatpush.bf16.msra.mxu0 0
      %2173 = vmatpush.bf16.msra.mxu0 0
      %2174 = vmatpush.bf16.msra.mxu0 %v2159
      %2175 = vmatpush.bf16.msra.mxu0 %v2158
      %2176 = vmatpush.bf16.msra.mxu0 %v2157
      %2177 = vmatpush.bf16.msra.mxu0 %v2156
      %2178 = vmatmul.bf16.gmra.mxu0 %v2165
      %v2179 = vpop.f32.mrf.mxu0
      %v2180 = vadd.f32 0.0, %v2179
      %v2181 = vpop.f32.mrf.mxu0
      %v2182 = vadd.f32 0.0, %v2181
      %2183 = vmatmul.bf16.gmra.mxu0 %v2168
      %v2184 = vpop.f32.mrf.mxu0
      %v2185 = vadd.f32 0.0, %v2184
      %v2186 = vpop.f32.mrf.mxu0
      %2187 = vdwg.mxu0
      %v2196 = vunpack.c.l.b16 %v1899
      %v2197 = vunpack.c.l.b16 %v1900
      %v2198 = vunpack.c.l.b16 %v1901
      %v2199 = vunpack.c.l.b16 %v1902
      %v2200 = vunpack.c.l.b16 %v1903
      %v2201 = vunpack.c.l.b16 %v1904
      %v2202 = vunpack.c.l.b16 %v1905
      %v2203 = vunpack.c.l.b16 %v1906
      %v2204 = vpack.c.b16 %v2197, %v2196
      %v2205 = vpack.c.b16 %v2199, %v2198
      %v2206 = vpack.c.b16 %v2201, %v2200
      %v2207 = vpack.c.b16 %v2203, %v2202
      %v2213 = vsel %vm825, %v2019, 0
      %v2216 = vsel %vm825, %v2020, 0
      %2218 = vmatpush.bf16.msra.mxu0 0
      %2219 = vmatpush.bf16.msra.mxu0 0
      %2220 = vmatpush.bf16.msra.mxu0 0
      %2221 = vmatpush.bf16.msra.mxu0 0
      %2222 = vmatpush.bf16.msra.mxu0 %v2207
      %2223 = vmatpush.bf16.msra.mxu0 %v2206
      %2224 = vmatpush.bf16.msra.mxu0 %v2205
      %2225 = vmatpush.bf16.msra.mxu0 %v2204
      %2226 = vmatmul.bf16.gmra.mxu0 %v2213
      %v2227 = vpop.f32.mrf.mxu0
      %v2228 = vadd.f32 %v2180, %v2227
      %v2229 = vpop.f32.mrf.mxu0
      %v2230 = vadd.f32 %v2182, %v2229
      %2231 = vmatmul.bf16.gmra.mxu0 %v2216
      %v2232 = vpop.f32.mrf.mxu0
      %v2233 = vadd.f32 %v2185, %v2232
      %v2234 = vpop.f32.mrf.mxu0
      %2235 = vdwg.mxu0
      %v2236 = vadd.f32 %v1593, %v2228
      %v2237 = vadd.f32 %v1594, %v2230
      %v2238 = vadd.f32 %v1595, %v2233
      %s2239 = scalar_lea.vmem %s6, 1
      %v2240 = vld [vmem:[%s2239] sm:$0x1]
      %v2242 = vperm.slane %v2240, 0
      %v2244 = vadd.f32 %v2236, %v2242
      %v2245 = vadd.f32 %v2237, %v2242
      %v2246 = vadd.f32 %v2238, %v2242
      %s2247 = scalar_lea.vmem %s7, 1
      %v2248 = vld [vmem:[%s2247] sm:$0x1]
      %s2249 = scalar_lea.vmem %s8, 1
      %v2250 = vld [vmem:[%s2249] sm:$0x1]
      %2251 = vadd.xlane.f32.xlu0 %v2244
      %v2252 = vpop.xlane.xlu0 %2251
      %2253 = vadd.xlane.f32.xlu0 %v2245
      %v2254 = vpop.xlane.xlu0 %2253
      %2255 = vadd.xlane.f32.xlu0 %v2246
      %v2256 = vpop.xlane.xlu0 %2255
      %v2257 = vmul.f32 %v2252, %v512
      %v2258 = vmul.f32 %v2254, %v512
      %v2259 = vmul.f32 %v2256, %v512
      %v2260 = vsub.f32 %v2244, %v2257
      %v2261 = vsub.f32 %v2245, %v2258
      %v2262 = vsub.f32 %v2246, %v2259
      %v2263 = vmul.f32 %v2260, %v2260
      %v2264 = vmul.f32 %v2261, %v2261
      %v2265 = vmul.f32 %v2262, %v2262
      %2266 = vadd.xlane.f32.xlu0 %v2263
      %v2267 = vpop.xlane.xlu0 %2266
      %2268 = vadd.xlane.f32.xlu0 %v2264
      %v2269 = vpop.xlane.xlu0 %2268
      %2270 = vadd.xlane.f32.xlu0 %v2265
      %v2271 = vpop.xlane.xlu0 %2270
      %v2272 = vmul.f32 %v2267, %v512
      %v2273 = vmul.f32 %v2269, %v512
      %v2274 = vmul.f32 %v2271, %v512
      %v2275 = vadd.f32 %v2272, 1e-06
      %v2276 = vadd.f32 %v2273, 1e-06
      %v2277 = vadd.f32 %v2274, 1e-06
      %v2278 = vrsqrt.pop %v2275
      %v2279 = vmul.f32 %v2278, %v2275
      %v2280 = vmul.f32 %v2279, %v2278
      %v2281 = vmul.f32 0.5, %v2280
      %v2282 = vsub.f32 1.5, %v2281
      %v2283 = vmul.f32 %v2278, %v2282
      %vm2284 = vweird.f32 %v2275
      %vm2285 = vweird.f32 %v2278
      %vm2286 = vmor %vm2284, %vm2285
      %v2287 = vsel %vm2286, %v2278, %v2283
      %v2288 = vrsqrt.pop %v2276
      %v2289 = vmul.f32 %v2288, %v2276
      %v2290 = vmul.f32 %v2289, %v2288
      %v2291 = vmul.f32 0.5, %v2290
      %v2292 = vsub.f32 1.5, %v2291
      %v2293 = vmul.f32 %v2288, %v2292
      %vm2294 = vweird.f32 %v2276
      %vm2295 = vweird.f32 %v2288
      %vm2296 = vmor %vm2294, %vm2295
      %v2297 = vsel %vm2296, %v2288, %v2293
      %v2298 = vrsqrt.pop %v2277
      %v2299 = vmul.f32 %v2298, %v2277
      %v2300 = vmul.f32 %v2299, %v2298
      %v2301 = vmul.f32 0.5, %v2300
      %v2302 = vsub.f32 1.5, %v2301
      %v2303 = vmul.f32 %v2298, %v2302
      %vm2304 = vweird.f32 %v2277
      %vm2305 = vweird.f32 %v2298
      %vm2306 = vmor %vm2304, %vm2305
      %v2307 = vsel %vm2306, %v2298, %v2303
      %v2308 = vmul.f32 %v2260, %v2287
      %v2309 = vmul.f32 %v2261, %v2297
      %v2310 = vmul.f32 %v2262, %v2307
      %v2312 = vperm.slane %v2248, 0
      %v2314 = vmul.f32 %v2308, %v2312
      %v2315 = vmul.f32 %v2309, %v2312
      %v2316 = vmul.f32 %v2310, %v2312
      %v2318 = vperm.slane %v2250, 0
      %v2320 = vadd.f32 %v2314, %v2318
      %v2321 = vadd.f32 %v2315, %v2318
      %v2322 = vadd.f32 %v2316, %v2318
      %v2323 = vpack.c.bf16 %v2321, %v2320
      %v2324 = vpack.c.bf16 %v2322, %v2322
      %s2325 = scalar_lea.vmem %s9, 128
      %v2326 = vld [vmem:[%s2325] sm:$0xff]
      %v2327 = vld [vmem:[%s2325 + $0x8] sm:$0xff]
      %v2328 = vld [vmem:[%s2325 + $0x10] sm:$0xff]
      %v2329 = vld [vmem:[%s2325 + $0x18] sm:$0xff]
      %v2330 = vld [vmem:[%s2325 + $0x20] sm:$0xff]
      %v2331 = vld [vmem:[%s2325 + $0x28] sm:$0xff]
      %v2332 = vld [vmem:[%s2325 + $0x30] sm:$0xff]
      %v2333 = vld [vmem:[%s2325 + $0x38] sm:$0xff]
      %v2334 = vld [vmem:[%s2325 + $0x40] sm:$0xff]
      %v2335 = vld [vmem:[%s2325 + $0x48] sm:$0xff]
      %v2336 = vld [vmem:[%s2325 + $0x50] sm:$0xff]
      %v2337 = vld [vmem:[%s2325 + $0x58] sm:$0xff]
      %v2338 = vld [vmem:[%s2325 + $0x60] sm:$0xff]
      %v2339 = vld [vmem:[%s2325 + $0x68] sm:$0xff]
      %v2340 = vld [vmem:[%s2325 + $0x70] sm:$0xff]
      %v2341 = vld [vmem:[%s2325 + $0x78] sm:$0xff]
      %s2342 = scalar_lea.vmem %s10, 2
      %v2343 = vld [vmem:[%s2342] sm:$0x3]
      %v2345 = vperm.slane %v2343, 0
      %v2346 = vperm.slane %v2343, 1
      %v2365 = vunpack.c.l.b16 %v2326
      %v2366 = vunpack.c.h.b16 %v2326
      %v2367 = vunpack.c.l.b16 %v2327
      %v2368 = vunpack.c.h.b16 %v2327
      %v2369 = vunpack.c.l.b16 %v2328
      %v2370 = vunpack.c.h.b16 %v2328
      %v2371 = vunpack.c.l.b16 %v2329
      %v2372 = vunpack.c.h.b16 %v2329
      %v2373 = vunpack.c.l.b16 %v2330
      %v2374 = vunpack.c.h.b16 %v2330
      %v2375 = vunpack.c.l.b16 %v2331
      %v2376 = vunpack.c.h.b16 %v2331
      %v2377 = vunpack.c.l.b16 %v2332
      %v2378 = vunpack.c.h.b16 %v2332
      %v2379 = vunpack.c.l.b16 %v2333
      %v2380 = vunpack.c.h.b16 %v2333
      %v2381 = vunpack.c.l.b16 %v2334
      %v2382 = vunpack.c.h.b16 %v2334
      %v2383 = vunpack.c.l.b16 %v2335
      %v2384 = vunpack.c.h.b16 %v2335
      %v2385 = vunpack.c.l.b16 %v2336
      %v2386 = vunpack.c.h.b16 %v2336
      %v2387 = vunpack.c.l.b16 %v2337
      %v2388 = vunpack.c.h.b16 %v2337
      %v2389 = vunpack.c.l.b16 %v2338
      %v2390 = vunpack.c.h.b16 %v2338
      %v2391 = vunpack.c.l.b16 %v2339
      %v2392 = vunpack.c.h.b16 %v2339
      %v2393 = vunpack.c.l.b16 %v2340
      %v2394 = vunpack.c.h.b16 %v2340
      %v2395 = vunpack.c.l.b16 %v2341
      %v2396 = vunpack.c.h.b16 %v2341
      %v2397 = vpack.c.b16 %v2367, %v2365
      %v2398 = vpack.c.b16 %v2368, %v2366
      %v2399 = vpack.c.b16 %v2371, %v2369
      %v2400 = vpack.c.b16 %v2372, %v2370
      %v2401 = vpack.c.b16 %v2375, %v2373
      %v2402 = vpack.c.b16 %v2376, %v2374
      %v2403 = vpack.c.b16 %v2379, %v2377
      %v2404 = vpack.c.b16 %v2380, %v2378
      %v2405 = vpack.c.b16 %v2383, %v2381
      %v2406 = vpack.c.b16 %v2384, %v2382
      %v2407 = vpack.c.b16 %v2387, %v2385
      %v2408 = vpack.c.b16 %v2388, %v2386
      %v2409 = vpack.c.b16 %v2391, %v2389
      %v2410 = vpack.c.b16 %v2392, %v2390
      %v2411 = vpack.c.b16 %v2395, %v2393
      %v2412 = vpack.c.b16 %v2396, %v2394
      %2429 = vmatpush.bf16.msra.mxu0 %v2411
      %2430 = vmatpush.bf16.msra.mxu0 %v2409
      %2431 = vmatpush.bf16.msra.mxu0 %v2407
      %2432 = vmatpush.bf16.msra.mxu0 %v2405
      %2433 = vmatpush.bf16.msra.mxu0 %v2403
      %2434 = vmatpush.bf16.msra.mxu0 %v2401
      %2435 = vmatpush.bf16.msra.mxu0 %v2399
      %2436 = vmatpush.bf16.msra.mxu0 %v2397
      %2437 = vmatmul.bf16.gmra.mxu0 %v2323
      %v2438 = vpop.f32.mrf.mxu0
      %v2439 = vadd.f32 %v2345, %v2438
      %v2440 = vpop.f32.mrf.mxu0
      %v2441 = vadd.f32 %v2345, %v2440
      %2442 = vmatmul.bf16.gmra.mxu0 %v2324
      %v2443 = vpop.f32.mrf.mxu0
      %v2444 = vadd.f32 %v2345, %v2443
      %v2445 = vpop.f32.mrf.mxu0
      %2446 = vdwg.mxu0
      %2447 = vmatpush.bf16.msra.mxu0 %v2412
      %2448 = vmatpush.bf16.msra.mxu0 %v2410
      %2449 = vmatpush.bf16.msra.mxu0 %v2408
      %2450 = vmatpush.bf16.msra.mxu0 %v2406
      %2451 = vmatpush.bf16.msra.mxu0 %v2404
      %2452 = vmatpush.bf16.msra.mxu0 %v2402
      %2453 = vmatpush.bf16.msra.mxu0 %v2400
      %2454 = vmatpush.bf16.msra.mxu0 %v2398
      %2455 = vmatmul.bf16.gmra.mxu0 %v2323
      %v2456 = vpop.f32.mrf.mxu0
      %v2457 = vadd.f32 %v2346, %v2456
      %v2458 = vpop.f32.mrf.mxu0
      %v2459 = vadd.f32 %v2346, %v2458
      %2460 = vmatmul.bf16.gmra.mxu0 %v2324
      %v2461 = vpop.f32.mrf.mxu0
      %v2462 = vadd.f32 %v2346, %v2461
      %v2463 = vpop.f32.mrf.mxu0
      %2464 = vdwg.mxu0
      %v2465 = vmul.f32 %v2439, %v2439
      %v2466 = vmul.f32 %v2457, %v2457
      %v2467 = vmul.f32 %v2441, %v2441
      %v2468 = vmul.f32 %v2459, %v2459
      %v2469 = vmul.f32 %v2444, %v2444
      %v2470 = vmul.f32 %v2462, %v2462
      %v2471 = vmul.f32 %v2439, %v2465
      %v2472 = vmul.f32 %v2457, %v2466
      %v2473 = vmul.f32 %v2441, %v2467
      %v2474 = vmul.f32 %v2459, %v2468
      %v2475 = vmul.f32 %v2444, %v2469
      %v2476 = vmul.f32 %v2462, %v2470
      %v2477 = vmul.f32 %v2471, 0.044715
      %v2478 = vmul.f32 %v2472, 0.044715
      %v2479 = vmul.f32 %v2473, 0.044715
      %v2480 = vmul.f32 %v2474, 0.044715
      %v2481 = vmul.f32 %v2475, 0.044715
      %v2482 = vmul.f32 %v2476, 0.044715
      %v2483 = vadd.f32 %v2439, %v2477
      %v2484 = vadd.f32 %v2457, %v2478
      %v2485 = vadd.f32 %v2441, %v2479
      %v2486 = vadd.f32 %v2459, %v2480
      %v2487 = vadd.f32 %v2444, %v2481
      %v2488 = vadd.f32 %v2462, %v2482
      %v2489 = vmul.f32 %v2483, 0.7978846
      %v2490 = vmul.f32 %v2484, 0.7978846
      %v2491 = vmul.f32 %v2485, 0.7978846
      %v2492 = vmul.f32 %v2486, 0.7978846
      %v2493 = vmul.f32 %v2487, 0.7978846
      %v2494 = vmul.f32 %v2488, 0.7978846
      %v2495 = vtanh.pop %v2489
      %v2496 = vtanh.pop %v2490
      %v2497 = vtanh.pop %v2491
      %v2498 = vtanh.pop %v2492
      %v2499 = vtanh.pop %v2493
      %v2500 = vtanh.pop %v2494
      %v2501 = vadd.f32 %v2495, 1.0
      %v2502 = vadd.f32 %v2496, 1.0
      %v2503 = vadd.f32 %v2497, 1.0
      %v2504 = vadd.f32 %v2498, 1.0
      %v2505 = vadd.f32 %v2499, 1.0
      %v2506 = vadd.f32 %v2500, 1.0
      %v2507 = vmul.f32 %v2501, 0.5
      %v2508 = vmul.f32 %v2502, 0.5
      %v2509 = vmul.f32 %v2503, 0.5
      %v2510 = vmul.f32 %v2504, 0.5
      %v2511 = vmul.f32 %v2505, 0.5
      %v2512 = vmul.f32 %v2506, 0.5
      %v2513 = vmul.f32 %v2439, %v2507
      %v2514 = vmul.f32 %v2457, %v2508
      %v2515 = vmul.f32 %v2441, %v2509
      %v2516 = vmul.f32 %v2459, %v2510
      %v2517 = vmul.f32 %v2444, %v2511
      %v2518 = vmul.f32 %v2462, %v2512
      %v2519 = vpack.c.bf16 %v2515, %v2513
      %v2520 = vpack.c.bf16 %v2516, %v2514
      %v2521 = vpack.c.bf16 %v2517, %v2517
      %v2522 = vpack.c.bf16 %v2518, %v2518
      %s2523 = scalar_lea.vmem %s11, 128
      %v2524 = vld [vmem:[%s2523] sm:$0xf]
      %v2525 = vld [vmem:[%s2523 + $0x4] sm:$0xf]
      %v2526 = vld [vmem:[%s2523 + $0x8] sm:$0xf]
      %v2527 = vld [vmem:[%s2523 + $0xc] sm:$0xf]
      %v2528 = vld [vmem:[%s2523 + $0x10] sm:$0xf]
      %v2529 = vld [vmem:[%s2523 + $0x14] sm:$0xf]
      %v2530 = vld [vmem:[%s2523 + $0x18] sm:$0xf]
      %v2531 = vld [vmem:[%s2523 + $0x1c] sm:$0xf]
      %v2532 = vld [vmem:[%s2523 + $0x20] sm:$0xf]
      %v2533 = vld [vmem:[%s2523 + $0x24] sm:$0xf]
      %v2534 = vld [vmem:[%s2523 + $0x28] sm:$0xf]
      %v2535 = vld [vmem:[%s2523 + $0x2c] sm:$0xf]
      %v2536 = vld [vmem:[%s2523 + $0x30] sm:$0xf]
      %v2537 = vld [vmem:[%s2523 + $0x34] sm:$0xf]
      %v2538 = vld [vmem:[%s2523 + $0x38] sm:$0xf]
      %v2539 = vld [vmem:[%s2523 + $0x3c] sm:$0xf]
      %v2540 = vld [vmem:[%s2523 + $0x40] sm:$0xf]
      %v2541 = vld [vmem:[%s2523 + $0x44] sm:$0xf]
      %v2542 = vld [vmem:[%s2523 + $0x48] sm:$0xf]
      %v2543 = vld [vmem:[%s2523 + $0x4c] sm:$0xf]
      %v2544 = vld [vmem:[%s2523 + $0x50] sm:$0xf]
      %v2545 = vld [vmem:[%s2523 + $0x54] sm:$0xf]
      %v2546 = vld [vmem:[%s2523 + $0x58] sm:$0xf]
      %v2547 = vld [vmem:[%s2523 + $0x5c] sm:$0xf]
      %v2548 = vld [vmem:[%s2523 + $0x60] sm:$0xf]
      %v2549 = vld [vmem:[%s2523 + $0x64] sm:$0xf]
      %v2550 = vld [vmem:[%s2523 + $0x68] sm:$0xf]
      %v2551 = vld [vmem:[%s2523 + $0x6c] sm:$0xf]
      %v2552 = vld [vmem:[%s2523 + $0x70] sm:$0xf]
      %v2553 = vld [vmem:[%s2523 + $0x74] sm:$0xf]
      %v2554 = vld [vmem:[%s2523 + $0x78] sm:$0xf]
      %v2555 = vld [vmem:[%s2523 + $0x7c] sm:$0xf]
      %s2556 = scalar_lea.vmem %s12, 1
      %v2557 = vld [vmem:[%s2556] sm:$0x1]
      %v2559 = vperm.slane %v2557, 0
      %v2593 = vunpack.c.l.b16 %v2524
      %v2594 = vunpack.c.l.b16 %v2525
      %v2595 = vunpack.c.l.b16 %v2526
      %v2596 = vunpack.c.l.b16 %v2527
      %v2597 = vunpack.c.l.b16 %v2528
      %v2598 = vunpack.c.l.b16 %v2529
      %v2599 = vunpack.c.l.b16 %v2530
      %v2600 = vunpack.c.l.b16 %v2531
      %v2601 = vunpack.c.l.b16 %v2532
      %v2602 = vunpack.c.l.b16 %v2533
      %v2603 = vunpack.c.l.b16 %v2534
      %v2604 = vunpack.c.l.b16 %v2535
      %v2605 = vunpack.c.l.b16 %v2536
      %v2606 = vunpack.c.l.b16 %v2537
      %v2607 = vunpack.c.l.b16 %v2538
      %v2608 = vunpack.c.l.b16 %v2539
      %v2609 = vunpack.c.l.b16 %v2540
      %v2610 = vunpack.c.l.b16 %v2541
      %v2611 = vunpack.c.l.b16 %v2542
      %v2612 = vunpack.c.l.b16 %v2543
      %v2613 = vunpack.c.l.b16 %v2544
      %v2614 = vunpack.c.l.b16 %v2545
      %v2615 = vunpack.c.l.b16 %v2546
      %v2616 = vunpack.c.l.b16 %v2547
      %v2617 = vunpack.c.l.b16 %v2548
      %v2618 = vunpack.c.l.b16 %v2549
      %v2619 = vunpack.c.l.b16 %v2550
      %v2620 = vunpack.c.l.b16 %v2551
      %v2621 = vunpack.c.l.b16 %v2552
      %v2622 = vunpack.c.l.b16 %v2553
      %v2623 = vunpack.c.l.b16 %v2554
      %v2624 = vunpack.c.l.b16 %v2555
      %v2625 = vpack.c.b16 %v2594, %v2593
      %v2626 = vpack.c.b16 %v2596, %v2595
      %v2627 = vpack.c.b16 %v2598, %v2597
      %v2628 = vpack.c.b16 %v2600, %v2599
      %v2629 = vpack.c.b16 %v2602, %v2601
      %v2630 = vpack.c.b16 %v2604, %v2603
      %v2631 = vpack.c.b16 %v2606, %v2605
      %v2632 = vpack.c.b16 %v2608, %v2607
      %v2633 = vpack.c.b16 %v2610, %v2609
      %v2634 = vpack.c.b16 %v2612, %v2611
      %v2635 = vpack.c.b16 %v2614, %v2613
      %v2636 = vpack.c.b16 %v2616, %v2615
      %v2637 = vpack.c.b16 %v2618, %v2617
      %v2638 = vpack.c.b16 %v2620, %v2619
      %v2639 = vpack.c.b16 %v2622, %v2621
      %v2640 = vpack.c.b16 %v2624, %v2623
      %2657 = vmatpush.bf16.msra.mxu0 %v2632
      %2658 = vmatpush.bf16.msra.mxu0 %v2631
      %2659 = vmatpush.bf16.msra.mxu0 %v2630
      %2660 = vmatpush.bf16.msra.mxu0 %v2629
      %2661 = vmatpush.bf16.msra.mxu0 %v2628
      %2662 = vmatpush.bf16.msra.mxu0 %v2627
      %2663 = vmatpush.bf16.msra.mxu0 %v2626
      %2664 = vmatpush.bf16.msra.mxu0 %v2625
      %2665 = vmatmul.bf16.gmra.mxu0 %v2519
      %v2666 = vpop.f32.mrf.mxu0
      %v2667 = vadd.f32 %v2559, %v2666
      %v2668 = vpop.f32.mrf.mxu0
      %v2669 = vadd.f32 %v2559, %v2668
      %2670 = vmatmul.bf16.gmra.mxu0 %v2521
      %v2671 = vpop.f32.mrf.mxu0
      %v2672 = vadd.f32 %v2559, %v2671
      %v2673 = vpop.f32.mrf.mxu0
      %2674 = vdwg.mxu0
      %2675 = vmatpush.bf16.msra.mxu0 %v2640
      %2676 = vmatpush.bf16.msra.mxu0 %v2639
      %2677 = vmatpush.bf16.msra.mxu0 %v2638
      %2678 = vmatpush.bf16.msra.mxu0 %v2637
      %2679 = vmatpush.bf16.msra.mxu0 %v2636
      %2680 = vmatpush.bf16.msra.mxu0 %v2635
      %2681 = vmatpush.bf16.msra.mxu0 %v2634
      %2682 = vmatpush.bf16.msra.mxu0 %v2633
      %2683 = vmatmul.bf16.gmra.mxu0 %v2520
      %v2684 = vpop.f32.mrf.mxu0
      %v2685 = vadd.f32 %v2667, %v2684
      %v2686 = vpop.f32.mrf.mxu0
      %v2687 = vadd.f32 %v2669, %v2686
      %2688 = vmatmul.bf16.gmra.mxu0 %v2522
      %v2689 = vpop.f32.mrf.mxu0
      %v2690 = vadd.f32 %v2672, %v2689
      %v2691 = vpop.f32.mrf.mxu0
      %2692 = vdwg.mxu0
      %v2693 = vadd.f32 %v2244, %v2685
      %v2694 = vadd.f32 %v2245, %v2687
      %v2695 = vadd.f32 %v2246, %v2690
      %v2696 = vld [vmem:[%s13] sm:$0x1]
      %v2697 = vld [vmem:[%s14] sm:$0x1]
      %2698 = vadd.xlane.f32.xlu0 %v2693
      %v2699 = vpop.xlane.xlu0 %2698
      %2700 = vadd.xlane.f32.xlu0 %v2694
      %v2701 = vpop.xlane.xlu0 %2700
      %2702 = vadd.xlane.f32.xlu0 %v2695
      %v2703 = vpop.xlane.xlu0 %2702
      %v2704 = vmul.f32 %v2699, %v512
      %v2705 = vmul.f32 %v2701, %v512
      %v2706 = vmul.f32 %v2703, %v512
      %v2707 = vsub.f32 %v2693, %v2704
      %v2708 = vsub.f32 %v2694, %v2705
      %v2709 = vsub.f32 %v2695, %v2706
      %v2710 = vmul.f32 %v2707, %v2707
      %v2711 = vmul.f32 %v2708, %v2708
      %v2712 = vmul.f32 %v2709, %v2709
      %2713 = vadd.xlane.f32.xlu0 %v2710
      %v2714 = vpop.xlane.xlu0 %2713
      %2715 = vadd.xlane.f32.xlu0 %v2711
      %v2716 = vpop.xlane.xlu0 %2715
      %2717 = vadd.xlane.f32.xlu0 %v2712
      %v2718 = vpop.xlane.xlu0 %2717
      %v2719 = vmul.f32 %v2714, %v512
      %v2720 = vmul.f32 %v2716, %v512
      %v2721 = vmul.f32 %v2718, %v512
      %v2722 = vadd.f32 %v2719, 1e-06
      %v2723 = vadd.f32 %v2720, 1e-06
      %v2724 = vadd.f32 %v2721, 1e-06
      %v2725 = vrsqrt.pop %v2722
      %v2726 = vmul.f32 %v2725, %v2722
      %v2727 = vmul.f32 %v2726, %v2725
      %v2728 = vmul.f32 0.5, %v2727
      %v2729 = vsub.f32 1.5, %v2728
      %v2730 = vmul.f32 %v2725, %v2729
      %vm2731 = vweird.f32 %v2722
      %vm2732 = vweird.f32 %v2725
      %vm2733 = vmor %vm2731, %vm2732
      %v2734 = vsel %vm2733, %v2725, %v2730
      %v2735 = vrsqrt.pop %v2723
      %v2736 = vmul.f32 %v2735, %v2723
      %v2737 = vmul.f32 %v2736, %v2735
      %v2738 = vmul.f32 0.5, %v2737
      %v2739 = vsub.f32 1.5, %v2738
      %v2740 = vmul.f32 %v2735, %v2739
      %vm2741 = vweird.f32 %v2723
      %vm2742 = vweird.f32 %v2735
      %vm2743 = vmor %vm2741, %vm2742
      %v2744 = vsel %vm2743, %v2735, %v2740
      %v2745 = vrsqrt.pop %v2724
      %v2746 = vmul.f32 %v2745, %v2724
      %v2747 = vmul.f32 %v2746, %v2745
      %v2748 = vmul.f32 0.5, %v2747
      %v2749 = vsub.f32 1.5, %v2748
      %v2750 = vmul.f32 %v2745, %v2749
      %vm2751 = vweird.f32 %v2724
      %vm2752 = vweird.f32 %v2745
      %vm2753 = vmor %vm2751, %vm2752
      %v2754 = vsel %vm2753, %v2745, %v2750
      %v2755 = vmul.f32 %v2707, %v2734
      %v2756 = vmul.f32 %v2708, %v2744
      %v2757 = vmul.f32 %v2709, %v2754
      %v2759 = vperm.slane %v2696, 0
      %v2761 = vmul.f32 %v2755, %v2759
      %v2762 = vmul.f32 %v2756, %v2759
      %v2763 = vmul.f32 %v2757, %v2759
      %v2765 = vperm.slane %v2697, 0
      %v2767 = vadd.f32 %v2761, %v2765
      %v2768 = vadd.f32 %v2762, %v2765
      %v2769 = vadd.f32 %v2763, %v2765
      %v2770 = vadd.f32 %v2767, %v2768
      %vm2771 = vcmask 1040384
      %v2772 = vsel %vm2771, %v2769, 0.0
      %v2773 = vadd.f32 %v2770, %v2772
      %v2774 = vrot.slane %v2773, 4
      %v2775 = vadd.f32 %v2773, %v2774
      %v2776 = vrot.slane %v2775, 2
      %v2777 = vadd.f32 %v2775, %v2776
      %v2778 = vrot.slane %v2777, 1
      %v2779 = vadd.f32 %v2777, %v2778
      %v2780 = vmul.f32 %v2779, 0.05882353
      %2781 = vst [vmem:[%s490] sm:$0x1] %v2780
      %p2782 = scmp.lt.s32.totalorder %s26, 1
      %s2783 = scalar_select %p2782, %s26, 1
      %s2784 = scalar_lea.vmem %s15, %s2783
      // Predicated region
      $region81: #{isic_dino_forward.4} parent=79 // pred_check
        %p2785 = pneg %p364
      $region82: #{isic_dino_forward.4} parent=79 // pred_check_branch
        %2787 = sbr.rel (%p2785) target = $region84
      $region83: #{isic_dino_forward.4} parent=79 // pred_region
        _
      $region84: #{isic_dino_forward.4} parent=79 // pred_fallthru
        _
    $region80: #{isic_dino_forward.4} parent=5 // pred_fallthru
      _
    %p2788 = scmp.le.s32.totalorder 2, %s21
    // Predicated region
    $region85: #{isic_dino_forward.4} parent=5 // pred_check
      %p2789 = pneg %p2788
    $region86: #{isic_dino_forward.4} parent=5 // pred_check_branch
      %2791 = sbr.rel (%p2789) target = $region88
    $region87: #{isic_dino_forward.4} parent=5 // pred_region
      %s2792 = ssub.s32 %s21, 2
      // Predicated region
      $region89: #{isic_dino_forward.4} parent=87 // pred_check
        %p2793 = pneg %p370
      $region90: #{isic_dino_forward.4} parent=87 // pred_check_branch
        %2795 = sbr.rel (%p2793) target = $region92
      $region91: #{isic_dino_forward.4} parent=87 // pred_region
        %p2796 = scmp.lt.s32.totalorder %s27, 1
        %s2797 = scalar_select %p2796, %s27, 1
        %s2798 = scalar_lea.vmem %s15, %s2797
      $region92: #{isic_dino_forward.4} parent=87 // pred_fallthru
        _
    $region88: #{isic_dino_forward.4} parent=5 // pred_fallthru
      _
  $region6: #{isic_dino_forward.4} parent=0 // loop_footer
    %s25 = sadd.s32 1, %s21
  $region7: #{isic_dino_forward.4} parent=0 // loop_footer_branch
    %20 = sbr.rel target = $region3
  $region8: #{isic_dino_forward.4} parent=0 // loop_exit
    _

</llo_original>
